<compile_context>
chip_gen: v7x
topology: tpu7x:2x2x1
jax: 0.10.0
libtpu: 0.0.40
codegen_flags: <defaults>
</compile_context>

<pallas_src>
import jax
import jax.numpy as jnp
from jax import lax
from jax.experimental import pallas as pl
from jax.experimental.pallas import tpu as pltpu

LANE = 128  # TPU lane width; channel-like dims are padded to this.


def _round_up(v, m):
    return ((v + m - 1) // m) * m


def _conv_out(s, ks, dil):
    # PyTorch Conv2d output size (stride 1, no padding, dilation=dil).
    return (s - dil * (ks - 1) - 1) // 1 + 1


# ----------------------------------------------------------------------------
# Fused forward kernel (one batch image per grid step)
# ----------------------------------------------------------------------------
def _build_fused_kernel(*, ks, dil, OH1, OW1, OH2, OW2, OH3, OW3, CP, IP, OP):

    def kernel(x_ref, w1_ref, b1_ref, w2_ref, b2_ref,
               wfc1_ref, bfc1_ref, wfc2_ref, bfc2_ref,
               out_ref,
               act1_ref, act2_ref, act3_ref):

        def conv_relu(src_ref, w_ref, b_ref, dst_ref, oh, ow):
            """Row-wise dilated conv (stride 1, valid) + bias + ReLU.

            src_ref: (Hin, Win, CP) f32 ; w_ref: (ks*ks, CP, CP) bf16 ;
            b_ref: (1, CP) f32 ; dst_ref: (oh, ow, CP) f32.
            The ks*ks taps are accumulated in f32 with bf16 MXU operands
            (im2col fused in-VMEM: just shifted slices, no patch matrix).
            """
            bias = b_ref[...]                                     # (1, CP) f32

            def row_body(h, carry):
                acc = jnp.zeros((ow, CP), jnp.float32)
                for kh in range(ks):
                    for kw in range(ks):
                        a = src_ref[pl.ds(h + kh * dil, 1),
                                    pl.ds(kw * dil, ow), :]
                        a = a.reshape(ow, CP).astype(jnp.bfloat16)
                        acc = acc + jnp.dot(a, w_ref[kh * ks + kw],
                                            preferred_element_type=jnp.float32)
                row = jnp.maximum(acc + bias, 0.0)                # f32 epilogue
                dst_ref[pl.ds(h, 1), :, :] = row.reshape(1, ow, CP)
                return carry

            lax.fori_loop(0, oh, row_body, 0)

        # convD1_1 -> ReLU
        conv_relu(x_ref, w1_ref, b1_ref, act1_ref, OH1, OW1)
        # convD1_2 -> ReLU   (first application)
        conv_relu(act1_ref, w2_ref, b2_ref, act2_ref, OH2, OW2)
        # convD1_2 -> ReLU   (second application, SHARED weights)
        conv_relu(act2_ref, w2_ref, b2_ref, act3_ref, OH3, OW3)

        # flatten(x, 1) + fc1: the (spatial x channel) contraction is done as
        # a running sum of (1, CP) @ (CP, IP) MXU dots over the VMEM-resident
        # activation.  fc1's weight was pre-permuted to (h, w, c) order at
        # prep time, so no transpose / reshape of the activation is needed.
        def fc1_body(h, acc):
            upd = acc
            for w in range(OW3):
                a = act3_ref[pl.ds(h, 1), pl.ds(w, 1), :]
                a = a.reshape(1, CP).astype(jnp.bfloat16)
                upd = upd + jnp.dot(a, wfc1_ref[h * OW3 + w],
                                    preferred_element_type=jnp.float32)
            return upd

        y1_acc = lax.fori_loop(0, OH3, fc1_body,
                               jnp.zeros((1, IP), jnp.float32))

        y1 = jnp.maximum(y1_acc + bfc1_ref[...], 0.0)             # (1, IP) f32
        # Dropout: identity in eval mode.
        # TODO(synk): training-mode dropout (RNG mask / scale) not implemented.
        y2 = jnp.dot(y1.astype(jnp.bfloat16), wfc2_ref[...],
                     preferred_element_type=jnp.float32) + bfc2_ref[...]
        out_ref[...] = y2.astype(out_ref.dtype)                   # (1, OP) f32

    return kernel


# ----------------------------------------------------------------------------
# Parameters: deterministic torch-layout init + one-time kernel repack
# ----------------------------------------------------------------------------
def init_params(key, *, out_features, ts, oc1, ks, dil1, i_dim):
    """Deterministic parameters in PyTorch layout."""
    oh, ow = ts
    for _ in range(3):
        oh, ow = _conv_out(oh, ks, dil1), _conv_out(ow, ks, dil1)
    fc1_in = oc1 * oh * ow

    ks_ = list(jax.random.split(key, 8))
    s = 0.05
    return {
        "conv1_w": s * jax.random.normal(ks_[0], (oc1, 3, ks, ks), jnp.float32),
        "conv1_b": s * jax.random.normal(ks_[1], (oc1,), jnp.float32),
        # convD1_2 is applied twice with SHARED weights (as in the torch module)
        "conv2_w": s * jax.random.normal(ks_[2], (oc1, oc1, ks, ks), jnp.float32),
        "conv2_b": s * jax.random.normal(ks_[3], (oc1,), jnp.float32),
        "fc1_w": s * jax.random.normal(ks_[4], (i_dim, fc1_in), jnp.float32),
        "fc1_b": s * jax.random.normal(ks_[5], (i_dim,), jnp.float32),
        "fc2_w": s * jax.random.normal(ks_[6], (out_features, i_dim), jnp.float32),
        "fc2_b": s * jax.random.normal(ks_[7], (out_features,), jnp.float32),
    }


def prepare_kernel_params(params, *, ts, oc1, ks, dil, i_dim, out_features):
    """One-time weight repack: tap-major conv weights, fc1 permuted to
    (h, w, c) order, fc weights pre-transposed to (K, N), all channel-like
    dims zero-padded to 128 lanes, matmul operands pre-cast to bf16."""
    H, W = ts
    OH1, OW1 = _conv_out(H, ks, dil), _conv_out(W, ks, dil)
    OH2, OW2 = _conv_out(OH1, ks, dil), _conv_out(OW1, ks, dil)
    OH3, OW3 = _conv_out(OH2, ks, dil), _conv_out(OW2, ks, dil)
    CP = _round_up(max(oc1, 3), LANE)
    IP = _round_up(i_dim, LANE)
    OP = _round_up(out_features, LANE)

    def conv_w(w):                    # (cout, cin, ks, ks) -> (ks*ks, CP, CP)
        cout, cin = w.shape[0], w.shape[1]
        wt = jnp.transpose(w, (2, 3, 1, 0)).reshape(ks * ks, cin, cout)
        wt = jnp.pad(wt, ((0, 0), (0, CP - cin), (0, CP - cout)))
        return wt.astype(jnp.bfloat16)

    def bias_pad(b, n):               # (k,) -> (1, n) f32, zero padded
        return jnp.pad(b, (0, n - b.shape[0])).reshape(1, n).astype(jnp.float32)

    # fc1: torch flattens NCHW as (c, h, w); kernel activation is (h, w, c_pad).
    wf1 = params["fc1_w"].reshape(i_dim, oc1, OH3, OW3)
    wf1 = jnp.transpose(wf1, (2, 3, 1, 0)).reshape(OH3 * OW3, oc1, i_dim)
    wf1 = jnp.pad(wf1, ((0, 0), (0, CP - oc1), (0, IP - i_dim)))

    wf2 = jnp.pad(params["fc2_w"].T, ((0, IP - i_dim), (0, OP - out_features)))

    kparams = {
        "w1": conv_w(params["conv1_w"]), "b1": bias_pad(params["conv1_b"], CP),
        "w2": conv_w(params["conv2_w"]), "b2": bias_pad(params["conv2_b"], CP),
        "wfc1": wf1.astype(jnp.bfloat16), "bfc1": bias_pad(params["fc1_b"], IP),
        "wfc2": wf2.astype(jnp.bfloat16), "bfc2": bias_pad(params["fc2_b"], OP),
    }
    dims = dict(H=H, W=W, ks=ks, dil=dil, OH1=OH1, OW1=OW1, OH2=OH2, OW2=OW2,
                OH3=OH3, OW3=OW3, CP=CP, IP=IP, OP=OP,
                out_features=out_features)
    return kparams, dims


# ----------------------------------------------------------------------------
# Forward wrapper (single fused pallas_call)
# ----------------------------------------------------------------------------
def make_forward(dims):
    H, W, ks, dil = dims["H"], dims["W"], dims["ks"], dims["dil"]
    OH1, OW1 = dims["OH1"], dims["OW1"]
    OH2, OW2 = dims["OH2"], dims["OW2"]
    OH3, OW3 = dims["OH3"], dims["OW3"]
    CP, IP, OP = dims["CP"], dims["IP"], dims["OP"]
    P3 = OH3 * OW3
    out_features = dims["out_features"]

    kernel = _build_fused_kernel(ks=ks, dil=dil, OH1=OH1, OW1=OW1, OH2=OH2,
                                 OW2=OW2, OH3=OH3, OW3=OW3,
                                 CP=CP, IP=IP, OP=OP)

    @jax.jit
    def forward(kparams, x_nchw):
        N, cin = x_nchw.shape[0], x_nchw.shape[1]
        # NCHW -> NHWC, channels zero-padded to the lane width (f32 in VMEM,
        # cast to bf16 right before each MXU dot inside the kernel).
        x = jnp.transpose(x_nchw, (0, 2, 3, 1))
        x = jnp.pad(x, ((0, 0), (0, 0), (0, 0), (0, CP - cin)))
        x = x.astype(jnp.float32)

        flops = 2 * N * (ks * ks * CP * CP *
                         (OH1 * OW1 + OH2 * OW2 + OH3 * OW3)
                         + P3 * CP * IP + IP * OP)
        bytes_accessed = (x.size * 4 + N * OP * 4
                          + sum(int(v.size) * v.dtype.itemsize
                                for v in kparams.values()))

        out = pl.pallas_call(
            kernel,
            out_shape=jax.ShapeDtypeStruct((N, 1, OP), jnp.float32),
            grid=(N,),
            in_specs=[
                pl.BlockSpec((None, H, W, CP), lambda b: (b, 0, 0, 0)),
                pl.BlockSpec((ks * ks, CP, CP), lambda b: (0, 0, 0)),
                pl.BlockSpec((1, CP), lambda b: (0, 0)),
                pl.BlockSpec((ks * ks, CP, CP), lambda b: (0, 0, 0)),
                pl.BlockSpec((1, CP), lambda b: (0, 0)),
                pl.BlockSpec((P3, CP, IP), lambda b: (0, 0, 0)),
                pl.BlockSpec((1, IP), lambda b: (0, 0)),
                pl.BlockSpec((IP, OP), lambda b: (0, 0)),
                pl.BlockSpec((1, OP), lambda b: (0, 0)),
            ],
            out_specs=pl.BlockSpec((None, 1, OP), lambda b: (b, 0, 0)),
            scratch_shapes=[
                pltpu.VMEM((OH1, OW1, CP), jnp.float32),   # act after conv1
                pltpu.VMEM((OH2, OW2, CP), jnp.float32),   # act after conv2a
                pltpu.VMEM((OH3, OW3, CP), jnp.float32),   # act after conv2b
            ],
            compiler_params=pltpu.CompilerParams(
                dimension_semantics=("parallel",),
                vmem_limit_bytes=32 * 1024 * 1024),
            cost_estimate=pl.CostEstimate(
                flops=int(flops), transcendentals=0,
                bytes_accessed=int(bytes_accessed)),
        )(x, kparams["w1"], kparams["b1"], kparams["w2"], kparams["b2"],
          kparams["wfc1"], kparams["bfc1"], kparams["wfc2"], kparams["bfc2"])

        # Drop the lane padding on the final features.
        return out.reshape(N, OP)[:, :out_features]

    return forward


# ----------------------------------------------------------------------------
if __name__ == "__main__":
    batch = 2
    in_channels = 3          # fixed by the module (Conv2d(in_channels=3, ...))
    ts = (16, 16)            # spatial size
    oc1 = 8
    ks = 3
    dil1 = 1
    i_dim = 32
    out_features = 4

    key = jax.random.PRNGKey(0)
    pkey, xkey = jax.random.split(key)
    params = init_params(pkey, out_features=out_features, ts=ts,
                         oc1=oc1, ks=ks, dil1=dil1, i_dim=i_dim)
    kparams, dims = prepare_kernel_params(params, ts=ts, oc1=oc1, ks=ks,
                                          dil=dil1, i_dim=i_dim,
                                          out_features=out_features)
    forward = make_forward(dims)

    x = jax.random.normal(xkey, (batch, in_channels, ts[0], ts[1]), jnp.float32)

    out = jax.block_until_ready(forward(kparams, x))
    assert out.shape == (batch, out_features), out.shape
    assert bool(jnp.all(jnp.isfinite(out)))
    print("KERNEL_OK")
</pallas_src>

<mosaic_0001>
module attributes {stable_mosaic.version = 11 : i64} {
  func.func @kernel(%arg0: i32, %arg1: memref<1x16x16x128xf32, #tpu.memory_space<vmem>>, %arg2: memref<9x128x128xbf16, #tpu.memory_space<vmem>>, %arg3: memref<1x128xf32, #tpu.memory_space<vmem>>, %arg4: memref<9x128x128xbf16, #tpu.memory_space<vmem>>, %arg5: memref<1x128xf32, #tpu.memory_space<vmem>>, %arg6: memref<100x128x128xbf16, #tpu.memory_space<vmem>>, %arg7: memref<1x128xf32, #tpu.memory_space<vmem>>, %arg8: memref<128x128xbf16, #tpu.memory_space<vmem>>, %arg9: memref<1x128xf32, #tpu.memory_space<vmem>>, %arg10: memref<1x1x128xf32, #tpu.memory_space<vmem>>, %arg11: memref<14x14x128xf32, #tpu.memory_space<vmem>>, %arg12: memref<12x12x128xf32, #tpu.memory_space<vmem>>, %arg13: memref<10x10x128xf32, #tpu.memory_space<vmem>>) attributes {dimension_semantics = [#tpu.dimension_semantics<parallel>], iteration_bounds = array<i64: 2>, scalar_prefetch = 0 : i64, scratch_operands = 3 : i64, tpu.core_type = #tpu.core_type<tc>, window_params = [{transform_indices = @transform_0, window_bounds = array<i64: 1, 16, 16, 128>}, {pipeline_mode = #tpu.pipeline_mode<synchronous>, transform_indices = @transform_1, window_bounds = array<i64: 9, 128, 128>}, {pipeline_mode = #tpu.pipeline_mode<synchronous>, transform_indices = @transform_2, window_bounds = array<i64: 1, 128>}, {pipeline_mode = #tpu.pipeline_mode<synchronous>, transform_indices = @transform_3, window_bounds = array<i64: 9, 128, 128>}, {pipeline_mode = #tpu.pipeline_mode<synchronous>, transform_indices = @transform_4, window_bounds = array<i64: 1, 128>}, {pipeline_mode = #tpu.pipeline_mode<synchronous>, transform_indices = @transform_5, window_bounds = array<i64: 100, 128, 128>}, {pipeline_mode = #tpu.pipeline_mode<synchronous>, transform_indices = @transform_6, window_bounds = array<i64: 1, 128>}, {pipeline_mode = #tpu.pipeline_mode<synchronous>, transform_indices = @transform_7, window_bounds = array<i64: 128, 128>}, {pipeline_mode = #tpu.pipeline_mode<synchronous>, transform_indices = @transform_8, window_bounds = array<i64: 1, 128>}, {transform_indices = @transform_9, window_bounds = array<i64: 1, 1, 128>}]} {
    %c0 = arith.constant 0 : index
    %c0_0 = arith.constant 0 : index
    %0 = vector.load %arg3[%c0, %c0_0] : memref<1x128xf32, #tpu.memory_space<vmem>>, vector<1x128xf32>
    %c0_i32 = arith.constant 0 : i32
    %c14_i32 = arith.constant 14 : i32
    %1 = arith.addi %c0_i32, %c14_i32 : i32
    %c1_i32 = arith.constant 1 : i32
    scf.for %arg14 = %c0_i32 to %1 step %c1_i32  : i32 {
      %cst_27 = arith.constant 0.000000e+00 : f32
      %21 = vector.broadcast %cst_27 : f32 to vector<14x128xf32>
      %c0_i32_28 = arith.constant 0 : i32
      %22 = arith.addi %arg14, %c0_i32_28 : i32
      %c0_29 = arith.constant 0 : index
      %23 = arith.index_cast %22 : i32 to index
      %c0_30 = arith.constant 0 : index
      %c0_31 = arith.constant 0 : index
      %24 = vector.load %arg1[%c0_29, %23, %c0_30, %c0_31] : memref<1x16x16x128xf32, #tpu.memory_space<vmem>>, vector<1x1x14x128xf32>
      %25 = vector.shape_cast %24 : vector<1x1x14x128xf32> to vector<1x14x128xf32>
      %26 = vector.shape_cast %25 : vector<1x14x128xf32> to vector<14x128xf32>
      %27 = arith.truncf %26 : vector<14x128xf32> to vector<14x128xbf16>
      %c0_32 = arith.constant 0 : index
      %c0_33 = arith.constant 0 : index
      %c0_34 = arith.constant 0 : index
      %28 = vector.load %arg2[%c0_32, %c0_33, %c0_34] : memref<9x128x128xbf16, #tpu.memory_space<vmem>>, vector<1x128x128xbf16>
      %29 = vector.shape_cast %28 : vector<1x128x128xbf16> to vector<128x128xbf16>
      %cst_35 = arith.constant dense<0.000000e+00> : vector<14x128xf32>
      %30 = tpu.matmul %27, %29, %cst_35 {dimension_numbers = #tpu.dot_dimension_numbers<[1], [0], [0], [1], [0, 0, 1, 1], [], []>} : vector<14x128xbf16>, vector<128x128xbf16>, vector<14x128xf32> -> vector<14x128xf32>
      %31 = arith.addf %21, %30 : vector<14x128xf32>
      %c0_i32_36 = arith.constant 0 : i32
      %32 = arith.addi %arg14, %c0_i32_36 : i32
      %c0_37 = arith.constant 0 : index
      %33 = arith.index_cast %32 : i32 to index
      %c1 = arith.constant 1 : index
      %c0_38 = arith.constant 0 : index
      %34 = vector.load %arg1[%c0_37, %33, %c1, %c0_38] : memref<1x16x16x128xf32, #tpu.memory_space<vmem>>, vector<1x1x14x128xf32>
      %35 = vector.shape_cast %34 : vector<1x1x14x128xf32> to vector<1x14x128xf32>
      %36 = vector.shape_cast %35 : vector<1x14x128xf32> to vector<14x128xf32>
      %37 = arith.truncf %36 : vector<14x128xf32> to vector<14x128xbf16>
      %c1_39 = arith.constant 1 : index
      %c0_40 = arith.constant 0 : index
      %c0_41 = arith.constant 0 : index
      %38 = vector.load %arg2[%c1_39, %c0_40, %c0_41] : memref<9x128x128xbf16, #tpu.memory_space<vmem>>, vector<1x128x128xbf16>
      %39 = vector.shape_cast %38 : vector<1x128x128xbf16> to vector<128x128xbf16>
      %cst_42 = arith.constant dense<0.000000e+00> : vector<14x128xf32>
      %40 = tpu.matmul %37, %39, %cst_42 {dimension_numbers = #tpu.dot_dimension_numbers<[1], [0], [0], [1], [0, 0, 1, 1], [], []>} : vector<14x128xbf16>, vector<128x128xbf16>, vector<14x128xf32> -> vector<14x128xf32>
      %41 = arith.addf %31, %40 : vector<14x128xf32>
      %c0_i32_43 = arith.constant 0 : i32
      %42 = arith.addi %arg14, %c0_i32_43 : i32
      %c0_44 = arith.constant 0 : index
      %43 = arith.index_cast %42 : i32 to index
      %c2 = arith.constant 2 : index
      %c0_45 = arith.constant 0 : index
      %44 = vector.load %arg1[%c0_44, %43, %c2, %c0_45] : memref<1x16x16x128xf32, #tpu.memory_space<vmem>>, vector<1x1x14x128xf32>
      %45 = vector.shape_cast %44 : vector<1x1x14x128xf32> to vector<1x14x128xf32>
      %46 = vector.shape_cast %45 : vector<1x14x128xf32> to vector<14x128xf32>
      %47 = arith.truncf %46 : vector<14x128xf32> to vector<14x128xbf16>
      %c2_46 = arith.constant 2 : index
      %c0_47 = arith.constant 0 : index
      %c0_48 = arith.constant 0 : index
      %48 = vector.load %arg2[%c2_46, %c0_47, %c0_48] : memref<9x128x128xbf16, #tpu.memory_space<vmem>>, vector<1x128x128xbf16>
      %49 = vector.shape_cast %48 : vector<1x128x128xbf16> to vector<128x128xbf16>
      %cst_49 = arith.constant dense<0.000000e+00> : vector<14x128xf32>
      %50 = tpu.matmul %47, %49, %cst_49 {dimension_numbers = #tpu.dot_dimension_numbers<[1], [0], [0], [1], [0, 0, 1, 1], [], []>} : vector<14x128xbf16>, vector<128x128xbf16>, vector<14x128xf32> -> vector<14x128xf32>
      %51 = arith.addf %41, %50 : vector<14x128xf32>
      %c1_i32_50 = arith.constant 1 : i32
      %52 = arith.addi %arg14, %c1_i32_50 : i32
      %c0_51 = arith.constant 0 : index
      %53 = arith.index_cast %52 : i32 to index
      %c0_52 = arith.constant 0 : index
      %c0_53 = arith.constant 0 : index
      %54 = vector.load %arg1[%c0_51, %53, %c0_52, %c0_53] : memref<1x16x16x128xf32, #tpu.memory_space<vmem>>, vector<1x1x14x128xf32>
      %55 = vector.shape_cast %54 : vector<1x1x14x128xf32> to vector<1x14x128xf32>
      %56 = vector.shape_cast %55 : vector<1x14x128xf32> to vector<14x128xf32>
      %57 = arith.truncf %56 : vector<14x128xf32> to vector<14x128xbf16>
      %c3 = arith.constant 3 : index
      %c0_54 = arith.constant 0 : index
      %c0_55 = arith.constant 0 : index
      %58 = vector.load %arg2[%c3, %c0_54, %c0_55] : memref<9x128x128xbf16, #tpu.memory_space<vmem>>, vector<1x128x128xbf16>
      %59 = vector.shape_cast %58 : vector<1x128x128xbf16> to vector<128x128xbf16>
      %cst_56 = arith.constant dense<0.000000e+00> : vector<14x128xf32>
      %60 = tpu.matmul %57, %59, %cst_56 {dimension_numbers = #tpu.dot_dimension_numbers<[1], [0], [0], [1], [0, 0, 1, 1], [], []>} : vector<14x128xbf16>, vector<128x128xbf16>, vector<14x128xf32> -> vector<14x128xf32>
      %61 = arith.addf %51, %60 : vector<14x128xf32>
      %c1_i32_57 = arith.constant 1 : i32
      %62 = arith.addi %arg14, %c1_i32_57 : i32
      %c0_58 = arith.constant 0 : index
      %63 = arith.index_cast %62 : i32 to index
      %c1_59 = arith.constant 1 : index
      %c0_60 = arith.constant 0 : index
      %64 = vector.load %arg1[%c0_58, %63, %c1_59, %c0_60] : memref<1x16x16x128xf32, #tpu.memory_space<vmem>>, vector<1x1x14x128xf32>
      %65 = vector.shape_cast %64 : vector<1x1x14x128xf32> to vector<1x14x128xf32>
      %66 = vector.shape_cast %65 : vector<1x14x128xf32> to vector<14x128xf32>
      %67 = arith.truncf %66 : vector<14x128xf32> to vector<14x128xbf16>
      %c4 = arith.constant 4 : index
      %c0_61 = arith.constant 0 : index
      %c0_62 = arith.constant 0 : index
      %68 = vector.load %arg2[%c4, %c0_61, %c0_62] : memref<9x128x128xbf16, #tpu.memory_space<vmem>>, vector<1x128x128xbf16>
      %69 = vector.shape_cast %68 : vector<1x128x128xbf16> to vector<128x128xbf16>
      %cst_63 = arith.constant dense<0.000000e+00> : vector<14x128xf32>
      %70 = tpu.matmul %67, %69, %cst_63 {dimension_numbers = #tpu.dot_dimension_numbers<[1], [0], [0], [1], [0, 0, 1, 1], [], []>} : vector<14x128xbf16>, vector<128x128xbf16>, vector<14x128xf32> -> vector<14x128xf32>
      %71 = arith.addf %61, %70 : vector<14x128xf32>
      %c1_i32_64 = arith.constant 1 : i32
      %72 = arith.addi %arg14, %c1_i32_64 : i32
      %c0_65 = arith.constant 0 : index
      %73 = arith.index_cast %72 : i32 to index
      %c2_66 = arith.constant 2 : index
      %c0_67 = arith.constant 0 : index
      %74 = vector.load %arg1[%c0_65, %73, %c2_66, %c0_67] : memref<1x16x16x128xf32, #tpu.memory_space<vmem>>, vector<1x1x14x128xf32>
      %75 = vector.shape_cast %74 : vector<1x1x14x128xf32> to vector<1x14x128xf32>
      %76 = vector.shape_cast %75 : vector<1x14x128xf32> to vector<14x128xf32>
      %77 = arith.truncf %76 : vector<14x128xf32> to vector<14x128xbf16>
      %c5 = arith.constant 5 : index
      %c0_68 = arith.constant 0 : index
      %c0_69 = arith.constant 0 : index
      %78 = vector.load %arg2[%c5, %c0_68, %c0_69] : memref<9x128x128xbf16, #tpu.memory_space<vmem>>, vector<1x128x128xbf16>
      %79 = vector.shape_cast %78 : vector<1x128x128xbf16> to vector<128x128xbf16>
      %cst_70 = arith.constant dense<0.000000e+00> : vector<14x128xf32>
      %80 = tpu.matmul %77, %79, %cst_70 {dimension_numbers = #tpu.dot_dimension_numbers<[1], [0], [0], [1], [0, 0, 1, 1], [], []>} : vector<14x128xbf16>, vector<128x128xbf16>, vector<14x128xf32> -> vector<14x128xf32>
      %81 = arith.addf %71, %80 : vector<14x128xf32>
      %c2_i32 = arith.constant 2 : i32
      %82 = arith.addi %arg14, %c2_i32 : i32
      %c0_71 = arith.constant 0 : index
      %83 = arith.index_cast %82 : i32 to index
      %c0_72 = arith.constant 0 : index
      %c0_73 = arith.constant 0 : index
      %84 = vector.load %arg1[%c0_71, %83, %c0_72, %c0_73] : memref<1x16x16x128xf32, #tpu.memory_space<vmem>>, vector<1x1x14x128xf32>
      %85 = vector.shape_cast %84 : vector<1x1x14x128xf32> to vector<1x14x128xf32>
      %86 = vector.shape_cast %85 : vector<1x14x128xf32> to vector<14x128xf32>
      %87 = arith.truncf %86 : vector<14x128xf32> to vector<14x128xbf16>
      %c6 = arith.constant 6 : index
      %c0_74 = arith.constant 0 : index
      %c0_75 = arith.constant 0 : index
      %88 = vector.load %arg2[%c6, %c0_74, %c0_75] : memref<9x128x128xbf16, #tpu.memory_space<vmem>>, vector<1x128x128xbf16>
      %89 = vector.shape_cast %88 : vector<1x128x128xbf16> to vector<128x128xbf16>
      %cst_76 = arith.constant dense<0.000000e+00> : vector<14x128xf32>
      %90 = tpu.matmul %87, %89, %cst_76 {dimension_numbers = #tpu.dot_dimension_numbers<[1], [0], [0], [1], [0, 0, 1, 1], [], []>} : vector<14x128xbf16>, vector<128x128xbf16>, vector<14x128xf32> -> vector<14x128xf32>
      %91 = arith.addf %81, %90 : vector<14x128xf32>
      %c2_i32_77 = arith.constant 2 : i32
      %92 = arith.addi %arg14, %c2_i32_77 : i32
      %c0_78 = arith.constant 0 : index
      %93 = arith.index_cast %92 : i32 to index
      %c1_79 = arith.constant 1 : index
      %c0_80 = arith.constant 0 : index
      %94 = vector.load %arg1[%c0_78, %93, %c1_79, %c0_80] : memref<1x16x16x128xf32, #tpu.memory_space<vmem>>, vector<1x1x14x128xf32>
      %95 = vector.shape_cast %94 : vector<1x1x14x128xf32> to vector<1x14x128xf32>
      %96 = vector.shape_cast %95 : vector<1x14x128xf32> to vector<14x128xf32>
      %97 = arith.truncf %96 : vector<14x128xf32> to vector<14x128xbf16>
      %c7 = arith.constant 7 : index
      %c0_81 = arith.constant 0 : index
      %c0_82 = arith.constant 0 : index
      %98 = vector.load %arg2[%c7, %c0_81, %c0_82] : memref<9x128x128xbf16, #tpu.memory_space<vmem>>, vector<1x128x128xbf16>
      %99 = vector.shape_cast %98 : vector<1x128x128xbf16> to vector<128x128xbf16>
      %cst_83 = arith.constant dense<0.000000e+00> : vector<14x128xf32>
      %100 = tpu.matmul %97, %99, %cst_83 {dimension_numbers = #tpu.dot_dimension_numbers<[1], [0], [0], [1], [0, 0, 1, 1], [], []>} : vector<14x128xbf16>, vector<128x128xbf16>, vector<14x128xf32> -> vector<14x128xf32>
      %101 = arith.addf %91, %100 : vector<14x128xf32>
      %c2_i32_84 = arith.constant 2 : i32
      %102 = arith.addi %arg14, %c2_i32_84 : i32
      %c0_85 = arith.constant 0 : index
      %103 = arith.index_cast %102 : i32 to index
      %c2_86 = arith.constant 2 : index
      %c0_87 = arith.constant 0 : index
      %104 = vector.load %arg1[%c0_85, %103, %c2_86, %c0_87] : memref<1x16x16x128xf32, #tpu.memory_space<vmem>>, vector<1x1x14x128xf32>
      %105 = vector.shape_cast %104 : vector<1x1x14x128xf32> to vector<1x14x128xf32>
      %106 = vector.shape_cast %105 : vector<1x14x128xf32> to vector<14x128xf32>
      %107 = arith.truncf %106 : vector<14x128xf32> to vector<14x128xbf16>
      %c8 = arith.constant 8 : index
      %c0_88 = arith.constant 0 : index
      %c0_89 = arith.constant 0 : index
      %108 = vector.load %arg2[%c8, %c0_88, %c0_89] : memref<9x128x128xbf16, #tpu.memory_space<vmem>>, vector<1x128x128xbf16>
      %109 = vector.shape_cast %108 : vector<1x128x128xbf16> to vector<128x128xbf16>
      %cst_90 = arith.constant dense<0.000000e+00> : vector<14x128xf32>
      %110 = tpu.matmul %107, %109, %cst_90 {dimension_numbers = #tpu.dot_dimension_numbers<[1], [0], [0], [1], [0, 0, 1, 1], [], []>} : vector<14x128xbf16>, vector<128x128xbf16>, vector<14x128xf32> -> vector<14x128xf32>
      %111 = arith.addf %101, %110 : vector<14x128xf32>
      %112 = vector.broadcast %0 : vector<1x128xf32> to vector<14x128xf32>
      %113 = arith.addf %111, %112 : vector<14x128xf32>
      %cst_91 = arith.constant 0.000000e+00 : f32
      %114 = vector.broadcast %cst_91 : f32 to vector<14x128xf32>
      %115 = arith.maximumf %113, %114 : vector<14x128xf32>
      %116 = vector.shape_cast %115 : vector<14x128xf32> to vector<1x14x128xf32>
      %117 = arith.index_cast %arg14 : i32 to index
      %c0_92 = arith.constant 0 : index
      %c0_93 = arith.constant 0 : index
      %118 = vector.load %arg11[%117, %c0_92, %c0_93] : memref<14x14x128xf32, #tpu.memory_space<vmem>>, vector<1x14x128xf32>
      tpu.vector_store %arg11[%117, %c0_92, %c0_93], %116 {strides = array<i32>} : memref<14x14x128xf32, #tpu.memory_space<vmem>>, vector<1x14x128xf32>,
    }
    %c14_i32_1 = arith.constant 14 : i32
    %c0_2 = arith.constant 0 : index
    %c0_3 = arith.constant 0 : index
    %2 = vector.load %arg5[%c0_2, %c0_3] : memref<1x128xf32, #tpu.memory_space<vmem>>, vector<1x128xf32>
    %c0_i32_4 = arith.constant 0 : i32
    %c12_i32 = arith.constant 12 : i32
    %3 = arith.addi %c0_i32_4, %c12_i32 : i32
    %c1_i32_5 = arith.constant 1 : i32
    scf.for %arg14 = %c0_i32_4 to %3 step %c1_i32_5  : i32 {
      %cst_27 = arith.constant 0.000000e+00 : f32
      %21 = vector.broadcast %cst_27 : f32 to vector<12x128xf32>
      %c0_i32_28 = arith.constant 0 : i32
      %22 = arith.addi %arg14, %c0_i32_28 : i32
      %23 = arith.index_cast %22 : i32 to index
      %c0_29 = arith.constant 0 : index
      %c0_30 = arith.constant 0 : index
      %24 = vector.load %arg11[%23, %c0_29, %c0_30] : memref<14x14x128xf32, #tpu.memory_space<vmem>>, vector<1x12x128xf32>
      %25 = vector.shape_cast %24 : vector<1x12x128xf32> to vector<12x128xf32>
      %26 = arith.truncf %25 : vector<12x128xf32> to vector<12x128xbf16>
      %c0_31 = arith.constant 0 : index
      %c0_32 = arith.constant 0 : index
      %c0_33 = arith.constant 0 : index
      %27 = vector.load %arg4[%c0_31, %c0_32, %c0_33] : memref<9x128x128xbf16, #tpu.memory_space<vmem>>, vector<1x128x128xbf16>
      %28 = vector.shape_cast %27 : vector<1x128x128xbf16> to vector<128x128xbf16>
      %cst_34 = arith.constant dense<0.000000e+00> : vector<12x128xf32>
      %29 = tpu.matmul %26, %28, %cst_34 {dimension_numbers = #tpu.dot_dimension_numbers<[1], [0], [0], [1], [0, 0, 1, 1], [], []>} : vector<12x128xbf16>, vector<128x128xbf16>, vector<12x128xf32> -> vector<12x128xf32>
      %30 = arith.addf %21, %29 : vector<12x128xf32>
      %c0_i32_35 = arith.constant 0 : i32
      %31 = arith.addi %arg14, %c0_i32_35 : i32
      %32 = arith.index_cast %31 : i32 to index
      %c1 = arith.constant 1 : index
      %c0_36 = arith.constant 0 : index
      %33 = vector.load %arg11[%32, %c1, %c0_36] : memref<14x14x128xf32, #tpu.memory_space<vmem>>, vector<1x12x128xf32>
      %34 = vector.shape_cast %33 : vector<1x12x128xf32> to vector<12x128xf32>
      %35 = arith.truncf %34 : vector<12x128xf32> to vector<12x128xbf16>
      %c1_37 = arith.constant 1 : index
      %c0_38 = arith.constant 0 : index
      %c0_39 = arith.constant 0 : index
      %36 = vector.load %arg4[%c1_37, %c0_38, %c0_39] : memref<9x128x128xbf16, #tpu.memory_space<vmem>>, vector<1x128x128xbf16>
      %37 = vector.shape_cast %36 : vector<1x128x128xbf16> to vector<128x128xbf16>
      %cst_40 = arith.constant dense<0.000000e+00> : vector<12x128xf32>
      %38 = tpu.matmul %35, %37, %cst_40 {dimension_numbers = #tpu.dot_dimension_numbers<[1], [0], [0], [1], [0, 0, 1, 1], [], []>} : vector<12x128xbf16>, vector<128x128xbf16>, vector<12x128xf32> -> vector<12x128xf32>
      %39 = arith.addf %30, %38 : vector<12x128xf32>
      %c0_i32_41 = arith.constant 0 : i32
      %40 = arith.addi %arg14, %c0_i32_41 : i32
      %41 = arith.index_cast %40 : i32 to index
      %c2 = arith.constant 2 : index
      %c0_42 = arith.constant 0 : index
      %42 = vector.load %arg11[%41, %c2, %c0_42] : memref<14x14x128xf32, #tpu.memory_space<vmem>>, vector<1x12x128xf32>
      %43 = vector.shape_cast %42 : vector<1x12x128xf32> to vector<12x128xf32>
      %44 = arith.truncf %43 : vector<12x128xf32> to vector<12x128xbf16>
      %c2_43 = arith.constant 2 : index
      %c0_44 = arith.constant 0 : index
      %c0_45 = arith.constant 0 : index
      %45 = vector.load %arg4[%c2_43, %c0_44, %c0_45] : memref<9x128x128xbf16, #tpu.memory_space<vmem>>, vector<1x128x128xbf16>
      %46 = vector.shape_cast %45 : vector<1x128x128xbf16> to vector<128x128xbf16>
      %cst_46 = arith.constant dense<0.000000e+00> : vector<12x128xf32>
      %47 = tpu.matmul %44, %46, %cst_46 {dimension_numbers = #tpu.dot_dimension_numbers<[1], [0], [0], [1], [0, 0, 1, 1], [], []>} : vector<12x128xbf16>, vector<128x128xbf16>, vector<12x128xf32> -> vector<12x128xf32>
      %48 = arith.addf %39, %47 : vector<12x128xf32>
      %c1_i32_47 = arith.constant 1 : i32
      %49 = arith.addi %arg14, %c1_i32_47 : i32
      %50 = arith.index_cast %49 : i32 to index
      %c0_48 = arith.constant 0 : index
      %c0_49 = arith.constant 0 : index
      %51 = vector.load %arg11[%50, %c0_48, %c0_49] : memref<14x14x128xf32, #tpu.memory_space<vmem>>, vector<1x12x128xf32>
      %52 = vector.shape_cast %51 : vector<1x12x128xf32> to vector<12x128xf32>
      %53 = arith.truncf %52 : vector<12x128xf32> to vector<12x128xbf16>
      %c3 = arith.constant 3 : index
      %c0_50 = arith.constant 0 : index
      %c0_51 = arith.constant 0 : index
      %54 = vector.load %arg4[%c3, %c0_50, %c0_51] : memref<9x128x128xbf16, #tpu.memory_space<vmem>>, vector<1x128x128xbf16>
      %55 = vector.shape_cast %54 : vector<1x128x128xbf16> to vector<128x128xbf16>
      %cst_52 = arith.constant dense<0.000000e+00> : vector<12x128xf32>
      %56 = tpu.matmul %53, %55, %cst_52 {dimension_numbers = #tpu.dot_dimension_numbers<[1], [0], [0], [1], [0, 0, 1, 1], [], []>} : vector<12x128xbf16>, vector<128x128xbf16>, vector<12x128xf32> -> vector<12x128xf32>
      %57 = arith.addf %48, %56 : vector<12x128xf32>
      %c1_i32_53 = arith.constant 1 : i32
      %58 = arith.addi %arg14, %c1_i32_53 : i32
      %59 = arith.index_cast %58 : i32 to index
      %c1_54 = arith.constant 1 : index
      %c0_55 = arith.constant 0 : index
      %60 = vector.load %arg11[%59, %c1_54, %c0_55] : memref<14x14x128xf32, #tpu.memory_space<vmem>>, vector<1x12x128xf32>
      %61 = vector.shape_cast %60 : vector<1x12x128xf32> to vector<12x128xf32>
      %62 = arith.truncf %61 : vector<12x128xf32> to vector<12x128xbf16>
      %c4 = arith.constant 4 : index
      %c0_56 = arith.constant 0 : index
      %c0_57 = arith.constant 0 : index
      %63 = vector.load %arg4[%c4, %c0_56, %c0_57] : memref<9x128x128xbf16, #tpu.memory_space<vmem>>, vector<1x128x128xbf16>
      %64 = vector.shape_cast %63 : vector<1x128x128xbf16> to vector<128x128xbf16>
      %cst_58 = arith.constant dense<0.000000e+00> : vector<12x128xf32>
      %65 = tpu.matmul %62, %64, %cst_58 {dimension_numbers = #tpu.dot_dimension_numbers<[1], [0], [0], [1], [0, 0, 1, 1], [], []>} : vector<12x128xbf16>, vector<128x128xbf16>, vector<12x128xf32> -> vector<12x128xf32>
      %66 = arith.addf %57, %65 : vector<12x128xf32>
      %c1_i32_59 = arith.constant 1 : i32
      %67 = arith.addi %arg14, %c1_i32_59 : i32
      %68 = arith.index_cast %67 : i32 to index
      %c2_60 = arith.constant 2 : index
      %c0_61 = arith.constant 0 : index
      %69 = vector.load %arg11[%68, %c2_60, %c0_61] : memref<14x14x128xf32, #tpu.memory_space<vmem>>, vector<1x12x128xf32>
      %70 = vector.shape_cast %69 : vector<1x12x128xf32> to vector<12x128xf32>
      %71 = arith.truncf %70 : vector<12x128xf32> to vector<12x128xbf16>
      %c5 = arith.constant 5 : index
      %c0_62 = arith.constant 0 : index
      %c0_63 = arith.constant 0 : index
      %72 = vector.load %arg4[%c5, %c0_62, %c0_63] : memref<9x128x128xbf16, #tpu.memory_space<vmem>>, vector<1x128x128xbf16>
      %73 = vector.shape_cast %72 : vector<1x128x128xbf16> to vector<128x128xbf16>
      %cst_64 = arith.constant dense<0.000000e+00> : vector<12x128xf32>
      %74 = tpu.matmul %71, %73, %cst_64 {dimension_numbers = #tpu.dot_dimension_numbers<[1], [0], [0], [1], [0, 0, 1, 1], [], []>} : vector<12x128xbf16>, vector<128x128xbf16>, vector<12x128xf32> -> vector<12x128xf32>
      %75 = arith.addf %66, %74 : vector<12x128xf32>
      %c2_i32 = arith.constant 2 : i32
      %76 = arith.addi %arg14, %c2_i32 : i32
      %77 = arith.index_cast %76 : i32 to index
      %c0_65 = arith.constant 0 : index
      %c0_66 = arith.constant 0 : index
      %78 = vector.load %arg11[%77, %c0_65, %c0_66] : memref<14x14x128xf32, #tpu.memory_space<vmem>>, vector<1x12x128xf32>
      %79 = vector.shape_cast %78 : vector<1x12x128xf32> to vector<12x128xf32>
      %80 = arith.truncf %79 : vector<12x128xf32> to vector<12x128xbf16>
      %c6 = arith.constant 6 : index
      %c0_67 = arith.constant 0 : index
      %c0_68 = arith.constant 0 : index
      %81 = vector.load %arg4[%c6, %c0_67, %c0_68] : memref<9x128x128xbf16, #tpu.memory_space<vmem>>, vector<1x128x128xbf16>
      %82 = vector.shape_cast %81 : vector<1x128x128xbf16> to vector<128x128xbf16>
      %cst_69 = arith.constant dense<0.000000e+00> : vector<12x128xf32>
      %83 = tpu.matmul %80, %82, %cst_69 {dimension_numbers = #tpu.dot_dimension_numbers<[1], [0], [0], [1], [0, 0, 1, 1], [], []>} : vector<12x128xbf16>, vector<128x128xbf16>, vector<12x128xf32> -> vector<12x128xf32>
      %84 = arith.addf %75, %83 : vector<12x128xf32>
      %c2_i32_70 = arith.constant 2 : i32
      %85 = arith.addi %arg14, %c2_i32_70 : i32
      %86 = arith.index_cast %85 : i32 to index
      %c1_71 = arith.constant 1 : index
      %c0_72 = arith.constant 0 : index
      %87 = vector.load %arg11[%86, %c1_71, %c0_72] : memref<14x14x128xf32, #tpu.memory_space<vmem>>, vector<1x12x128xf32>
      %88 = vector.shape_cast %87 : vector<1x12x128xf32> to vector<12x128xf32>
      %89 = arith.truncf %88 : vector<12x128xf32> to vector<12x128xbf16>
      %c7 = arith.constant 7 : index
      %c0_73 = arith.constant 0 : index
      %c0_74 = arith.constant 0 : index
      %90 = vector.load %arg4[%c7, %c0_73, %c0_74] : memref<9x128x128xbf16, #tpu.memory_space<vmem>>, vector<1x128x128xbf16>
      %91 = vector.shape_cast %90 : vector<1x128x128xbf16> to vector<128x128xbf16>
      %cst_75 = arith.constant dense<0.000000e+00> : vector<12x128xf32>
      %92 = tpu.matmul %89, %91, %cst_75 {dimension_numbers = #tpu.dot_dimension_numbers<[1], [0], [0], [1], [0, 0, 1, 1], [], []>} : vector<12x128xbf16>, vector<128x128xbf16>, vector<12x128xf32> -> vector<12x128xf32>
      %93 = arith.addf %84, %92 : vector<12x128xf32>
      %c2_i32_76 = arith.constant 2 : i32
      %94 = arith.addi %arg14, %c2_i32_76 : i32
      %95 = arith.index_cast %94 : i32 to index
      %c2_77 = arith.constant 2 : index
      %c0_78 = arith.constant 0 : index
      %96 = vector.load %arg11[%95, %c2_77, %c0_78] : memref<14x14x128xf32, #tpu.memory_space<vmem>>, vector<1x12x128xf32>
      %97 = vector.shape_cast %96 : vector<1x12x128xf32> to vector<12x128xf32>
      %98 = arith.truncf %97 : vector<12x128xf32> to vector<12x128xbf16>
      %c8 = arith.constant 8 : index
      %c0_79 = arith.constant 0 : index
      %c0_80 = arith.constant 0 : index
      %99 = vector.load %arg4[%c8, %c0_79, %c0_80] : memref<9x128x128xbf16, #tpu.memory_space<vmem>>, vector<1x128x128xbf16>
      %100 = vector.shape_cast %99 : vector<1x128x128xbf16> to vector<128x128xbf16>
      %cst_81 = arith.constant dense<0.000000e+00> : vector<12x128xf32>
      %101 = tpu.matmul %98, %100, %cst_81 {dimension_numbers = #tpu.dot_dimension_numbers<[1], [0], [0], [1], [0, 0, 1, 1], [], []>} : vector<12x128xbf16>, vector<128x128xbf16>, vector<12x128xf32> -> vector<12x128xf32>
      %102 = arith.addf %93, %101 : vector<12x128xf32>
      %103 = vector.broadcast %2 : vector<1x128xf32> to vector<12x128xf32>
      %104 = arith.addf %102, %103 : vector<12x128xf32>
      %cst_82 = arith.constant 0.000000e+00 : f32
      %105 = vector.broadcast %cst_82 : f32 to vector<12x128xf32>
      %106 = arith.maximumf %104, %105 : vector<12x128xf32>
      %107 = vector.shape_cast %106 : vector<12x128xf32> to vector<1x12x128xf32>
      %108 = arith.index_cast %arg14 : i32 to index
      %c0_83 = arith.constant 0 : index
      %c0_84 = arith.constant 0 : index
      %109 = vector.load %arg12[%108, %c0_83, %c0_84] : memref<12x12x128xf32, #tpu.memory_space<vmem>>, vector<1x12x128xf32>
      tpu.vector_store %arg12[%108, %c0_83, %c0_84], %107 {strides = array<i32>} : memref<12x12x128xf32, #tpu.memory_space<vmem>>, vector<1x12x128xf32>,
    }
    %c12_i32_6 = arith.constant 12 : i32
    %c0_7 = arith.constant 0 : index
    %c0_8 = arith.constant 0 : index
    %4 = vector.load %arg5[%c0_7, %c0_8] : memref<1x128xf32, #tpu.memory_space<vmem>>, vector<1x128xf32>
    %c0_i32_9 = arith.constant 0 : i32
    %c10_i32 = arith.constant 10 : i32
    %5 = arith.addi %c0_i32_9, %c10_i32 : i32
    %c1_i32_10 = arith.constant 1 : i32
    scf.for %arg14 = %c0_i32_9 to %5 step %c1_i32_10  : i32 {
      %cst_27 = arith.constant 0.000000e+00 : f32
      %21 = vector.broadcast %cst_27 : f32 to vector<10x128xf32>
      %c0_i32_28 = arith.constant 0 : i32
      %22 = arith.addi %arg14, %c0_i32_28 : i32
      %23 = arith.index_cast %22 : i32 to index
      %c0_29 = arith.constant 0 : index
      %c0_30 = arith.constant 0 : index
      %24 = vector.load %arg12[%23, %c0_29, %c0_30] : memref<12x12x128xf32, #tpu.memory_space<vmem>>, vector<1x10x128xf32>
      %25 = vector.shape_cast %24 : vector<1x10x128xf32> to vector<10x128xf32>
      %26 = arith.truncf %25 : vector<10x128xf32> to vector<10x128xbf16>
      %c0_31 = arith.constant 0 : index
      %c0_32 = arith.constant 0 : index
      %c0_33 = arith.constant 0 : index
      %27 = vector.load %arg4[%c0_31, %c0_32, %c0_33] : memref<9x128x128xbf16, #tpu.memory_space<vmem>>, vector<1x128x128xbf16>
      %28 = vector.shape_cast %27 : vector<1x128x128xbf16> to vector<128x128xbf16>
      %cst_34 = arith.constant dense<0.000000e+00> : vector<10x128xf32>
      %29 = tpu.matmul %26, %28, %cst_34 {dimension_numbers = #tpu.dot_dimension_numbers<[1], [0], [0], [1], [0, 0, 1, 1], [], []>} : vector<10x128xbf16>, vector<128x128xbf16>, vector<10x128xf32> -> vector<10x128xf32>
      %30 = arith.addf %21, %29 : vector<10x128xf32>
      %c0_i32_35 = arith.constant 0 : i32
      %31 = arith.addi %arg14, %c0_i32_35 : i32
      %32 = arith.index_cast %31 : i32 to index
      %c1 = arith.constant 1 : index
      %c0_36 = arith.constant 0 : index
      %33 = vector.load %arg12[%32, %c1, %c0_36] : memref<12x12x128xf32, #tpu.memory_space<vmem>>, vector<1x10x128xf32>
      %34 = vector.shape_cast %33 : vector<1x10x128xf32> to vector<10x128xf32>
      %35 = arith.truncf %34 : vector<10x128xf32> to vector<10x128xbf16>
      %c1_37 = arith.constant 1 : index
      %c0_38 = arith.constant 0 : index
      %c0_39 = arith.constant 0 : index
      %36 = vector.load %arg4[%c1_37, %c0_38, %c0_39] : memref<9x128x128xbf16, #tpu.memory_space<vmem>>, vector<1x128x128xbf16>
      %37 = vector.shape_cast %36 : vector<1x128x128xbf16> to vector<128x128xbf16>
      %cst_40 = arith.constant dense<0.000000e+00> : vector<10x128xf32>
      %38 = tpu.matmul %35, %37, %cst_40 {dimension_numbers = #tpu.dot_dimension_numbers<[1], [0], [0], [1], [0, 0, 1, 1], [], []>} : vector<10x128xbf16>, vector<128x128xbf16>, vector<10x128xf32> -> vector<10x128xf32>
      %39 = arith.addf %30, %38 : vector<10x128xf32>
      %c0_i32_41 = arith.constant 0 : i32
      %40 = arith.addi %arg14, %c0_i32_41 : i32
      %41 = arith.index_cast %40 : i32 to index
      %c2 = arith.constant 2 : index
      %c0_42 = arith.constant 0 : index
      %42 = vector.load %arg12[%41, %c2, %c0_42] : memref<12x12x128xf32, #tpu.memory_space<vmem>>, vector<1x10x128xf32>
      %43 = vector.shape_cast %42 : vector<1x10x128xf32> to vector<10x128xf32>
      %44 = arith.truncf %43 : vector<10x128xf32> to vector<10x128xbf16>
      %c2_43 = arith.constant 2 : index
      %c0_44 = arith.constant 0 : index
      %c0_45 = arith.constant 0 : index
      %45 = vector.load %arg4[%c2_43, %c0_44, %c0_45] : memref<9x128x128xbf16, #tpu.memory_space<vmem>>, vector<1x128x128xbf16>
      %46 = vector.shape_cast %45 : vector<1x128x128xbf16> to vector<128x128xbf16>
      %cst_46 = arith.constant dense<0.000000e+00> : vector<10x128xf32>
      %47 = tpu.matmul %44, %46, %cst_46 {dimension_numbers = #tpu.dot_dimension_numbers<[1], [0], [0], [1], [0, 0, 1, 1], [], []>} : vector<10x128xbf16>, vector<128x128xbf16>, vector<10x128xf32> -> vector<10x128xf32>
      %48 = arith.addf %39, %47 : vector<10x128xf32>
      %c1_i32_47 = arith.constant 1 : i32
      %49 = arith.addi %arg14, %c1_i32_47 : i32
      %50 = arith.index_cast %49 : i32 to index
      %c0_48 = arith.constant 0 : index
      %c0_49 = arith.constant 0 : index
      %51 = vector.load %arg12[%50, %c0_48, %c0_49] : memref<12x12x128xf32, #tpu.memory_space<vmem>>, vector<1x10x128xf32>
      %52 = vector.shape_cast %51 : vector<1x10x128xf32> to vector<10x128xf32>
      %53 = arith.truncf %52 : vector<10x128xf32> to vector<10x128xbf16>
      %c3 = arith.constant 3 : index
      %c0_50 = arith.constant 0 : index
      %c0_51 = arith.constant 0 : index
      %54 = vector.load %arg4[%c3, %c0_50, %c0_51] : memref<9x128x128xbf16, #tpu.memory_space<vmem>>, vector<1x128x128xbf16>
      %55 = vector.shape_cast %54 : vector<1x128x128xbf16> to vector<128x128xbf16>
      %cst_52 = arith.constant dense<0.000000e+00> : vector<10x128xf32>
      %56 = tpu.matmul %53, %55, %cst_52 {dimension_numbers = #tpu.dot_dimension_numbers<[1], [0], [0], [1], [0, 0, 1, 1], [], []>} : vector<10x128xbf16>, vector<128x128xbf16>, vector<10x128xf32> -> vector<10x128xf32>
      %57 = arith.addf %48, %56 : vector<10x128xf32>
      %c1_i32_53 = arith.constant 1 : i32
      %58 = arith.addi %arg14, %c1_i32_53 : i32
      %59 = arith.index_cast %58 : i32 to index
      %c1_54 = arith.constant 1 : index
      %c0_55 = arith.constant 0 : index
      %60 = vector.load %arg12[%59, %c1_54, %c0_55] : memref<12x12x128xf32, #tpu.memory_space<vmem>>, vector<1x10x128xf32>
      %61 = vector.shape_cast %60 : vector<1x10x128xf32> to vector<10x128xf32>
      %62 = arith.truncf %61 : vector<10x128xf32> to vector<10x128xbf16>
      %c4 = arith.constant 4 : index
      %c0_56 = arith.constant 0 : index
      %c0_57 = arith.constant 0 : index
      %63 = vector.load %arg4[%c4, %c0_56, %c0_57] : memref<9x128x128xbf16, #tpu.memory_space<vmem>>, vector<1x128x128xbf16>
      %64 = vector.shape_cast %63 : vector<1x128x128xbf16> to vector<128x128xbf16>
      %cst_58 = arith.constant dense<0.000000e+00> : vector<10x128xf32>
      %65 = tpu.matmul %62, %64, %cst_58 {dimension_numbers = #tpu.dot_dimension_numbers<[1], [0], [0], [1], [0, 0, 1, 1], [], []>} : vector<10x128xbf16>, vector<128x128xbf16>, vector<10x128xf32> -> vector<10x128xf32>
      %66 = arith.addf %57, %65 : vector<10x128xf32>
      %c1_i32_59 = arith.constant 1 : i32
      %67 = arith.addi %arg14, %c1_i32_59 : i32
      %68 = arith.index_cast %67 : i32 to index
      %c2_60 = arith.constant 2 : index
      %c0_61 = arith.constant 0 : index
      %69 = vector.load %arg12[%68, %c2_60, %c0_61] : memref<12x12x128xf32, #tpu.memory_space<vmem>>, vector<1x10x128xf32>
      %70 = vector.shape_cast %69 : vector<1x10x128xf32> to vector<10x128xf32>
      %71 = arith.truncf %70 : vector<10x128xf32> to vector<10x128xbf16>
      %c5 = arith.constant 5 : index
      %c0_62 = arith.constant 0 : index
      %c0_63 = arith.constant 0 : index
      %72 = vector.load %arg4[%c5, %c0_62, %c0_63] : memref<9x128x128xbf16, #tpu.memory_space<vmem>>, vector<1x128x128xbf16>
      %73 = vector.shape_cast %72 : vector<1x128x128xbf16> to vector<128x128xbf16>
      %cst_64 = arith.constant dense<0.000000e+00> : vector<10x128xf32>
      %74 = tpu.matmul %71, %73, %cst_64 {dimension_numbers = #tpu.dot_dimension_numbers<[1], [0], [0], [1], [0, 0, 1, 1], [], []>} : vector<10x128xbf16>, vector<128x128xbf16>, vector<10x128xf32> -> vector<10x128xf32>
      %75 = arith.addf %66, %74 : vector<10x128xf32>
      %c2_i32 = arith.constant 2 : i32
      %76 = arith.addi %arg14, %c2_i32 : i32
      %77 = arith.index_cast %76 : i32 to index
      %c0_65 = arith.constant 0 : index
      %c0_66 = arith.constant 0 : index
      %78 = vector.load %arg12[%77, %c0_65, %c0_66] : memref<12x12x128xf32, #tpu.memory_space<vmem>>, vector<1x10x128xf32>
      %79 = vector.shape_cast %78 : vector<1x10x128xf32> to vector<10x128xf32>
      %80 = arith.truncf %79 : vector<10x128xf32> to vector<10x128xbf16>
      %c6 = arith.constant 6 : index
      %c0_67 = arith.constant 0 : index
      %c0_68 = arith.constant 0 : index
      %81 = vector.load %arg4[%c6, %c0_67, %c0_68] : memref<9x128x128xbf16, #tpu.memory_space<vmem>>, vector<1x128x128xbf16>
      %82 = vector.shape_cast %81 : vector<1x128x128xbf16> to vector<128x128xbf16>
      %cst_69 = arith.constant dense<0.000000e+00> : vector<10x128xf32>
      %83 = tpu.matmul %80, %82, %cst_69 {dimension_numbers = #tpu.dot_dimension_numbers<[1], [0], [0], [1], [0, 0, 1, 1], [], []>} : vector<10x128xbf16>, vector<128x128xbf16>, vector<10x128xf32> -> vector<10x128xf32>
      %84 = arith.addf %75, %83 : vector<10x128xf32>
      %c2_i32_70 = arith.constant 2 : i32
      %85 = arith.addi %arg14, %c2_i32_70 : i32
      %86 = arith.index_cast %85 : i32 to index
      %c1_71 = arith.constant 1 : index
      %c0_72 = arith.constant 0 : index
      %87 = vector.load %arg12[%86, %c1_71, %c0_72] : memref<12x12x128xf32, #tpu.memory_space<vmem>>, vector<1x10x128xf32>
      %88 = vector.shape_cast %87 : vector<1x10x128xf32> to vector<10x128xf32>
      %89 = arith.truncf %88 : vector<10x128xf32> to vector<10x128xbf16>
      %c7 = arith.constant 7 : index
      %c0_73 = arith.constant 0 : index
      %c0_74 = arith.constant 0 : index
      %90 = vector.load %arg4[%c7, %c0_73, %c0_74] : memref<9x128x128xbf16, #tpu.memory_space<vmem>>, vector<1x128x128xbf16>
      %91 = vector.shape_cast %90 : vector<1x128x128xbf16> to vector<128x128xbf16>
      %cst_75 = arith.constant dense<0.000000e+00> : vector<10x128xf32>
      %92 = tpu.matmul %89, %91, %cst_75 {dimension_numbers = #tpu.dot_dimension_numbers<[1], [0], [0], [1], [0, 0, 1, 1], [], []>} : vector<10x128xbf16>, vector<128x128xbf16>, vector<10x128xf32> -> vector<10x128xf32>
      %93 = arith.addf %84, %92 : vector<10x128xf32>
      %c2_i32_76 = arith.constant 2 : i32
      %94 = arith.addi %arg14, %c2_i32_76 : i32
      %95 = arith.index_cast %94 : i32 to index
      %c2_77 = arith.constant 2 : index
      %c0_78 = arith.constant 0 : index
      %96 = vector.load %arg12[%95, %c2_77, %c0_78] : memref<12x12x128xf32, #tpu.memory_space<vmem>>, vector<1x10x128xf32>
      %97 = vector.shape_cast %96 : vector<1x10x128xf32> to vector<10x128xf32>
      %98 = arith.truncf %97 : vector<10x128xf32> to vector<10x128xbf16>
      %c8 = arith.constant 8 : index
      %c0_79 = arith.constant 0 : index
      %c0_80 = arith.constant 0 : index
      %99 = vector.load %arg4[%c8, %c0_79, %c0_80] : memref<9x128x128xbf16, #tpu.memory_space<vmem>>, vector<1x128x128xbf16>
      %100 = vector.shape_cast %99 : vector<1x128x128xbf16> to vector<128x128xbf16>
      %cst_81 = arith.constant dense<0.000000e+00> : vector<10x128xf32>
      %101 = tpu.matmul %98, %100, %cst_81 {dimension_numbers = #tpu.dot_dimension_numbers<[1], [0], [0], [1], [0, 0, 1, 1], [], []>} : vector<10x128xbf16>, vector<128x128xbf16>, vector<10x128xf32> -> vector<10x128xf32>
      %102 = arith.addf %93, %101 : vector<10x128xf32>
      %103 = vector.broadcast %4 : vector<1x128xf32> to vector<10x128xf32>
      %104 = arith.addf %102, %103 : vector<10x128xf32>
      %cst_82 = arith.constant 0.000000e+00 : f32
      %105 = vector.broadcast %cst_82 : f32 to vector<10x128xf32>
      %106 = arith.maximumf %104, %105 : vector<10x128xf32>
      %107 = vector.shape_cast %106 : vector<10x128xf32> to vector<1x10x128xf32>
      %108 = arith.index_cast %arg14 : i32 to index
      %c0_83 = arith.constant 0 : index
      %c0_84 = arith.constant 0 : index
      %109 = vector.load %arg13[%108, %c0_83, %c0_84] : memref<10x10x128xf32, #tpu.memory_space<vmem>>, vector<1x10x128xf32>
      tpu.vector_store %arg13[%108, %c0_83, %c0_84], %107 {strides = array<i32>} : memref<10x10x128xf32, #tpu.memory_space<vmem>>, vector<1x10x128xf32>,
    }
    %c10_i32_11 = arith.constant 10 : i32
    %cst = arith.constant 0.000000e+00 : f32
    %6 = vector.broadcast %cst : f32 to vector<1x128xf32>
    %c0_i32_12 = arith.constant 0 : i32
    %c10_i32_13 = arith.constant 10 : i32
    %7 = arith.addi %c0_i32_12, %c10_i32_13 : i32
    %c1_i32_14 = arith.constant 1 : i32
    %8 = scf.for %arg14 = %c0_i32_12 to %7 step %c1_i32_14 iter_args(%arg15 = %6) -> (vector<1x128xf32>)  : i32 {
      %21 = arith.index_cast %arg14 : i32 to index
      %c0_27 = arith.constant 0 : index
      %c0_28 = arith.constant 0 : index
      %22 = vector.load %arg13[%21, %c0_27, %c0_28] : memref<10x10x128xf32, #tpu.memory_space<vmem>>, vector<1x1x128xf32>
      %23 = vector.shape_cast %22 : vector<1x1x128xf32> to vector<1x128xf32>
      %24 = arith.truncf %23 : vector<1x128xf32> to vector<1x128xbf16>
      %c10_i32_29 = arith.constant 10 : i32
      %25 = arith.muli %arg14, %c10_i32_29 : i32
      %c0_i32_30 = arith.constant 0 : i32
      %26 = arith.addi %25, %c0_i32_30 : i32
      %27 = arith.index_cast %26 : i32 to index
      %c0_31 = arith.constant 0 : index
      %c0_32 = arith.constant 0 : index
      %28 = vector.load %arg6[%27, %c0_31, %c0_32] : memref<100x128x128xbf16, #tpu.memory_space<vmem>>, vector<1x128x128xbf16>
      %29 = vector.shape_cast %28 : vector<1x128x128xbf16> to vector<128x128xbf16>
      %cst_33 = arith.constant dense<0.000000e+00> : vector<1x128xf32>
      %30 = tpu.matmul %24, %29, %cst_33 {dimension_numbers = #tpu.dot_dimension_numbers<[1], [0], [0], [1], [0, 0, 1, 1], [], []>} : vector<1x128xbf16>, vector<128x128xbf16>, vector<1x128xf32> -> vector<1x128xf32>
      %31 = arith.addf %arg15, %30 : vector<1x128xf32>
      %32 = arith.index_cast %arg14 : i32 to index
      %c1 = arith.constant 1 : index
      %c0_34 = arith.constant 0 : index
      %33 = vector.load %arg13[%32, %c1, %c0_34] : memref<10x10x128xf32, #tpu.memory_space<vmem>>, vector<1x1x128xf32>
      %34 = vector.shape_cast %33 : vector<1x1x128xf32> to vector<1x128xf32>
      %35 = arith.truncf %34 : vector<1x128xf32> to vector<1x128xbf16>
      %c10_i32_35 = arith.constant 10 : i32
      %36 = arith.muli %arg14, %c10_i32_35 : i32
      %c1_i32_36 = arith.constant 1 : i32
      %37 = arith.addi %36, %c1_i32_36 : i32
      %38 = arith.index_cast %37 : i32 to index
      %c0_37 = arith.constant 0 : index
      %c0_38 = arith.constant 0 : index
      %39 = vector.load %arg6[%38, %c0_37, %c0_38] : memref<100x128x128xbf16, #tpu.memory_space<vmem>>, vector<1x128x128xbf16>
      %40 = vector.shape_cast %39 : vector<1x128x128xbf16> to vector<128x128xbf16>
      %cst_39 = arith.constant dense<0.000000e+00> : vector<1x128xf32>
      %41 = tpu.matmul %35, %40, %cst_39 {dimension_numbers = #tpu.dot_dimension_numbers<[1], [0], [0], [1], [0, 0, 1, 1], [], []>} : vector<1x128xbf16>, vector<128x128xbf16>, vector<1x128xf32> -> vector<1x128xf32>
      %42 = arith.addf %31, %41 : vector<1x128xf32>
      %43 = arith.index_cast %arg14 : i32 to index
      %c2 = arith.constant 2 : index
      %c0_40 = arith.constant 0 : index
      %44 = vector.load %arg13[%43, %c2, %c0_40] : memref<10x10x128xf32, #tpu.memory_space<vmem>>, vector<1x1x128xf32>
      %45 = vector.shape_cast %44 : vector<1x1x128xf32> to vector<1x128xf32>
      %46 = arith.truncf %45 : vector<1x128xf32> to vector<1x128xbf16>
      %c10_i32_41 = arith.constant 10 : i32
      %47 = arith.muli %arg14, %c10_i32_41 : i32
      %c2_i32 = arith.constant 2 : i32
      %48 = arith.addi %47, %c2_i32 : i32
      %49 = arith.index_cast %48 : i32 to index
      %c0_42 = arith.constant 0 : index
      %c0_43 = arith.constant 0 : index
      %50 = vector.load %arg6[%49, %c0_42, %c0_43] : memref<100x128x128xbf16, #tpu.memory_space<vmem>>, vector<1x128x128xbf16>
      %51 = vector.shape_cast %50 : vector<1x128x128xbf16> to vector<128x128xbf16>
      %cst_44 = arith.constant dense<0.000000e+00> : vector<1x128xf32>
      %52 = tpu.matmul %46, %51, %cst_44 {dimension_numbers = #tpu.dot_dimension_numbers<[1], [0], [0], [1], [0, 0, 1, 1], [], []>} : vector<1x128xbf16>, vector<128x128xbf16>, vector<1x128xf32> -> vector<1x128xf32>
      %53 = arith.addf %42, %52 : vector<1x128xf32>
      %54 = arith.index_cast %arg14 : i32 to index
      %c3 = arith.constant 3 : index
      %c0_45 = arith.constant 0 : index
      %55 = vector.load %arg13[%54, %c3, %c0_45] : memref<10x10x128xf32, #tpu.memory_space<vmem>>, vector<1x1x128xf32>
      %56 = vector.shape_cast %55 : vector<1x1x128xf32> to vector<1x128xf32>
      %57 = arith.truncf %56 : vector<1x128xf32> to vector<1x128xbf16>
      %c10_i32_46 = arith.constant 10 : i32
      %58 = arith.muli %arg14, %c10_i32_46 : i32
      %c3_i32 = arith.constant 3 : i32
      %59 = arith.addi %58, %c3_i32 : i32
      %60 = arith.index_cast %59 : i32 to index
      %c0_47 = arith.constant 0 : index
      %c0_48 = arith.constant 0 : index
      %61 = vector.load %arg6[%60, %c0_47, %c0_48] : memref<100x128x128xbf16, #tpu.memory_space<vmem>>, vector<1x128x128xbf16>
      %62 = vector.shape_cast %61 : vector<1x128x128xbf16> to vector<128x128xbf16>
      %cst_49 = arith.constant dense<0.000000e+00> : vector<1x128xf32>
      %63 = tpu.matmul %57, %62, %cst_49 {dimension_numbers = #tpu.dot_dimension_numbers<[1], [0], [0], [1], [0, 0, 1, 1], [], []>} : vector<1x128xbf16>, vector<128x128xbf16>, vector<1x128xf32> -> vector<1x128xf32>
      %64 = arith.addf %53, %63 : vector<1x128xf32>
      %65 = arith.index_cast %arg14 : i32 to index
      %c4 = arith.constant 4 : index
      %c0_50 = arith.constant 0 : index
      %66 = vector.load %arg13[%65, %c4, %c0_50] : memref<10x10x128xf32, #tpu.memory_space<vmem>>, vector<1x1x128xf32>
      %67 = vector.shape_cast %66 : vector<1x1x128xf32> to vector<1x128xf32>
      %68 = arith.truncf %67 : vector<1x128xf32> to vector<1x128xbf16>
      %c10_i32_51 = arith.constant 10 : i32
      %69 = arith.muli %arg14, %c10_i32_51 : i32
      %c4_i32 = arith.constant 4 : i32
      %70 = arith.addi %69, %c4_i32 : i32
      %71 = arith.index_cast %70 : i32 to index
      %c0_52 = arith.constant 0 : index
      %c0_53 = arith.constant 0 : index
      %72 = vector.load %arg6[%71, %c0_52, %c0_53] : memref<100x128x128xbf16, #tpu.memory_space<vmem>>, vector<1x128x128xbf16>
      %73 = vector.shape_cast %72 : vector<1x128x128xbf16> to vector<128x128xbf16>
      %cst_54 = arith.constant dense<0.000000e+00> : vector<1x128xf32>
      %74 = tpu.matmul %68, %73, %cst_54 {dimension_numbers = #tpu.dot_dimension_numbers<[1], [0], [0], [1], [0, 0, 1, 1], [], []>} : vector<1x128xbf16>, vector<128x128xbf16>, vector<1x128xf32> -> vector<1x128xf32>
      %75 = arith.addf %64, %74 : vector<1x128xf32>
      %76 = arith.index_cast %arg14 : i32 to index
      %c5 = arith.constant 5 : index
      %c0_55 = arith.constant 0 : index
      %77 = vector.load %arg13[%76, %c5, %c0_55] : memref<10x10x128xf32, #tpu.memory_space<vmem>>, vector<1x1x128xf32>
      %78 = vector.shape_cast %77 : vector<1x1x128xf32> to vector<1x128xf32>
      %79 = arith.truncf %78 : vector<1x128xf32> to vector<1x128xbf16>
      %c10_i32_56 = arith.constant 10 : i32
      %80 = arith.muli %arg14, %c10_i32_56 : i32
      %c5_i32 = arith.constant 5 : i32
      %81 = arith.addi %80, %c5_i32 : i32
      %82 = arith.index_cast %81 : i32 to index
      %c0_57 = arith.constant 0 : index
      %c0_58 = arith.constant 0 : index
      %83 = vector.load %arg6[%82, %c0_57, %c0_58] : memref<100x128x128xbf16, #tpu.memory_space<vmem>>, vector<1x128x128xbf16>
      %84 = vector.shape_cast %83 : vector<1x128x128xbf16> to vector<128x128xbf16>
      %cst_59 = arith.constant dense<0.000000e+00> : vector<1x128xf32>
      %85 = tpu.matmul %79, %84, %cst_59 {dimension_numbers = #tpu.dot_dimension_numbers<[1], [0], [0], [1], [0, 0, 1, 1], [], []>} : vector<1x128xbf16>, vector<128x128xbf16>, vector<1x128xf32> -> vector<1x128xf32>
      %86 = arith.addf %75, %85 : vector<1x128xf32>
      %87 = arith.index_cast %arg14 : i32 to index
      %c6 = arith.constant 6 : index
      %c0_60 = arith.constant 0 : index
      %88 = vector.load %arg13[%87, %c6, %c0_60] : memref<10x10x128xf32, #tpu.memory_space<vmem>>, vector<1x1x128xf32>
      %89 = vector.shape_cast %88 : vector<1x1x128xf32> to vector<1x128xf32>
      %90 = arith.truncf %89 : vector<1x128xf32> to vector<1x128xbf16>
      %c10_i32_61 = arith.constant 10 : i32
      %91 = arith.muli %arg14, %c10_i32_61 : i32
      %c6_i32 = arith.constant 6 : i32
      %92 = arith.addi %91, %c6_i32 : i32
      %93 = arith.index_cast %92 : i32 to index
      %c0_62 = arith.constant 0 : index
      %c0_63 = arith.constant 0 : index
      %94 = vector.load %arg6[%93, %c0_62, %c0_63] : memref<100x128x128xbf16, #tpu.memory_space<vmem>>, vector<1x128x128xbf16>
      %95 = vector.shape_cast %94 : vector<1x128x128xbf16> to vector<128x128xbf16>
      %cst_64 = arith.constant dense<0.000000e+00> : vector<1x128xf32>
      %96 = tpu.matmul %90, %95, %cst_64 {dimension_numbers = #tpu.dot_dimension_numbers<[1], [0], [0], [1], [0, 0, 1, 1], [], []>} : vector<1x128xbf16>, vector<128x128xbf16>, vector<1x128xf32> -> vector<1x128xf32>
      %97 = arith.addf %86, %96 : vector<1x128xf32>
      %98 = arith.index_cast %arg14 : i32 to index
      %c7 = arith.constant 7 : index
      %c0_65 = arith.constant 0 : index
      %99 = vector.load %arg13[%98, %c7, %c0_65] : memref<10x10x128xf32, #tpu.memory_space<vmem>>, vector<1x1x128xf32>
      %100 = vector.shape_cast %99 : vector<1x1x128xf32> to vector<1x128xf32>
      %101 = arith.truncf %100 : vector<1x128xf32> to vector<1x128xbf16>
      %c10_i32_66 = arith.constant 10 : i32
      %102 = arith.muli %arg14, %c10_i32_66 : i32
      %c7_i32 = arith.constant 7 : i32
      %103 = arith.addi %102, %c7_i32 : i32
      %104 = arith.index_cast %103 : i32 to index
      %c0_67 = arith.constant 0 : index
      %c0_68 = arith.constant 0 : index
      %105 = vector.load %arg6[%104, %c0_67, %c0_68] : memref<100x128x128xbf16, #tpu.memory_space<vmem>>, vector<1x128x128xbf16>
      %106 = vector.shape_cast %105 : vector<1x128x128xbf16> to vector<128x128xbf16>
      %cst_69 = arith.constant dense<0.000000e+00> : vector<1x128xf32>
      %107 = tpu.matmul %101, %106, %cst_69 {dimension_numbers = #tpu.dot_dimension_numbers<[1], [0], [0], [1], [0, 0, 1, 1], [], []>} : vector<1x128xbf16>, vector<128x128xbf16>, vector<1x128xf32> -> vector<1x128xf32>
      %108 = arith.addf %97, %107 : vector<1x128xf32>
      %109 = arith.index_cast %arg14 : i32 to index
      %c8 = arith.constant 8 : index
      %c0_70 = arith.constant 0 : index
      %110 = vector.load %arg13[%109, %c8, %c0_70] : memref<10x10x128xf32, #tpu.memory_space<vmem>>, vector<1x1x128xf32>
      %111 = vector.shape_cast %110 : vector<1x1x128xf32> to vector<1x128xf32>
      %112 = arith.truncf %111 : vector<1x128xf32> to vector<1x128xbf16>
      %c10_i32_71 = arith.constant 10 : i32
      %113 = arith.muli %arg14, %c10_i32_71 : i32
      %c8_i32 = arith.constant 8 : i32
      %114 = arith.addi %113, %c8_i32 : i32
      %115 = arith.index_cast %114 : i32 to index
      %c0_72 = arith.constant 0 : index
      %c0_73 = arith.constant 0 : index
      %116 = vector.load %arg6[%115, %c0_72, %c0_73] : memref<100x128x128xbf16, #tpu.memory_space<vmem>>, vector<1x128x128xbf16>
      %117 = vector.shape_cast %116 : vector<1x128x128xbf16> to vector<128x128xbf16>
      %cst_74 = arith.constant dense<0.000000e+00> : vector<1x128xf32>
      %118 = tpu.matmul %112, %117, %cst_74 {dimension_numbers = #tpu.dot_dimension_numbers<[1], [0], [0], [1], [0, 0, 1, 1], [], []>} : vector<1x128xbf16>, vector<128x128xbf16>, vector<1x128xf32> -> vector<1x128xf32>
      %119 = arith.addf %108, %118 : vector<1x128xf32>
      %120 = arith.index_cast %arg14 : i32 to index
      %c9 = arith.constant 9 : index
      %c0_75 = arith.constant 0 : index
      %121 = vector.load %arg13[%120, %c9, %c0_75] : memref<10x10x128xf32, #tpu.memory_space<vmem>>, vector<1x1x128xf32>
      %122 = vector.shape_cast %121 : vector<1x1x128xf32> to vector<1x128xf32>
      %123 = arith.truncf %122 : vector<1x128xf32> to vector<1x128xbf16>
      %c10_i32_76 = arith.constant 10 : i32
      %124 = arith.muli %arg14, %c10_i32_76 : i32
      %c9_i32 = arith.constant 9 : i32
      %125 = arith.addi %124, %c9_i32 : i32
      %126 = arith.index_cast %125 : i32 to index
      %c0_77 = arith.constant 0 : index
      %c0_78 = arith.constant 0 : index
      %127 = vector.load %arg6[%126, %c0_77, %c0_78] : memref<100x128x128xbf16, #tpu.memory_space<vmem>>, vector<1x128x128xbf16>
      %128 = vector.shape_cast %127 : vector<1x128x128xbf16> to vector<128x128xbf16>
      %cst_79 = arith.constant dense<0.000000e+00> : vector<1x128xf32>
      %129 = tpu.matmul %123, %128, %cst_79 {dimension_numbers = #tpu.dot_dimension_numbers<[1], [0], [0], [1], [0, 0, 1, 1], [], []>} : vector<1x128xbf16>, vector<128x128xbf16>, vector<1x128xf32> -> vector<1x128xf32>
      %130 = arith.addf %119, %129 : vector<1x128xf32>
      scf.yield %130 : vector<1x128xf32>
    }
    %c10_i32_15 = arith.constant 10 : i32
    %c0_16 = arith.constant 0 : index
    %c0_17 = arith.constant 0 : index
    %9 = vector.load %arg7[%c0_16, %c0_17] : memref<1x128xf32, #tpu.memory_space<vmem>>, vector<1x128xf32>
    %10 = arith.addf %8, %9 : vector<1x128xf32>
    %cst_18 = arith.constant 0.000000e+00 : f32
    %11 = vector.broadcast %cst_18 : f32 to vector<1x128xf32>
    %12 = arith.maximumf %10, %11 : vector<1x128xf32>
    %13 = arith.truncf %12 : vector<1x128xf32> to vector<1x128xbf16>
    %c0_19 = arith.constant 0 : index
    %c0_20 = arith.constant 0 : index
    %14 = vector.load %arg8[%c0_19, %c0_20] : memref<128x128xbf16, #tpu.memory_space<vmem>>, vector<128x128xbf16>
    %cst_21 = arith.constant dense<0.000000e+00> : vector<1x128xf32>
    %15 = tpu.matmul %13, %14, %cst_21 {dimension_numbers = #tpu.dot_dimension_numbers<[1], [0], [0], [1], [0, 0, 1, 1], [], []>} : vector<1x128xbf16>, vector<128x128xbf16>, vector<1x128xf32> -> vector<1x128xf32>
    %c0_22 = arith.constant 0 : index
    %c0_23 = arith.constant 0 : index
    %16 = vector.load %arg9[%c0_22, %c0_23] : memref<1x128xf32, #tpu.memory_space<vmem>>, vector<1x128xf32>
    %17 = arith.addf %15, %16 : vector<1x128xf32>
    %c0_24 = arith.constant 0 : index
    %c0_25 = arith.constant 0 : index
    %c0_26 = arith.constant 0 : index
    %18 = vector.load %arg10[%c0_24, %c0_25, %c0_26] : memref<1x1x128xf32, #tpu.memory_space<vmem>>, vector<1x1x128xf32>
    %19 = vector.shape_cast %18 : vector<1x1x128xf32> to vector<1x128xf32>
    %20 = vector.shape_cast %17 : vector<1x128xf32> to vector<1x1x128xf32>
    tpu.vector_store %arg10[%c0_24, %c0_25, %c0_26], %20 {strides = array<i32>} : memref<1x1x128xf32, #tpu.memory_space<vmem>>, vector<1x1x128xf32>,
    return
  }
  func.func @transform_0(%arg0: i32) -> (i32, i32, i32, i32) {
    %c0_i32 = arith.constant 0 : i32
    %c0_i32_0 = arith.constant 0 : i32
    %c0_i32_1 = arith.constant 0 : i32
    %c0_i32_2 = arith.constant 0 : i32
    return %arg0, %c0_i32, %c0_i32_0, %c0_i32_1 : i32, i32, i32, i32
  }
  func.func @transform_1(%arg0: i32) -> (i32, i32, i32) {
    %c0_i32 = arith.constant 0 : i32
    %c0_i32_0 = arith.constant 0 : i32
    %c0_i32_1 = arith.constant 0 : i32
    %c0_i32_2 = arith.constant 0 : i32
    return %c0_i32, %c0_i32_0, %c0_i32_1 : i32, i32, i32
  }
  func.func @transform_2(%arg0: i32) -> (i32, i32) {
    %c0_i32 = arith.constant 0 : i32
    %c0_i32_0 = arith.constant 0 : i32
    %c0_i32_1 = arith.constant 0 : i32
    return %c0_i32, %c0_i32_0 : i32, i32
  }
  func.func @transform_3(%arg0: i32) -> (i32, i32, i32) {
    %c0_i32 = arith.constant 0 : i32
    %c0_i32_0 = arith.constant 0 : i32
    %c0_i32_1 = arith.constant 0 : i32
    %c0_i32_2 = arith.constant 0 : i32
    return %c0_i32, %c0_i32_0, %c0_i32_1 : i32, i32, i32
  }
  func.func @transform_4(%arg0: i32) -> (i32, i32) {
    %c0_i32 = arith.constant 0 : i32
    %c0_i32_0 = arith.constant 0 : i32
    %c0_i32_1 = arith.constant 0 : i32
    return %c0_i32, %c0_i32_0 : i32, i32
  }
  func.func @transform_5(%arg0: i32) -> (i32, i32, i32) {
    %c0_i32 = arith.constant 0 : i32
    %c0_i32_0 = arith.constant 0 : i32
    %c0_i32_1 = arith.constant 0 : i32
    %c0_i32_2 = arith.constant 0 : i32
    return %c0_i32, %c0_i32_0, %c0_i32_1 : i32, i32, i32
  }
  func.func @transform_6(%arg0: i32) -> (i32, i32) {
    %c0_i32 = arith.constant 0 : i32
    %c0_i32_0 = arith.constant 0 : i32
    %c0_i32_1 = arith.constant 0 : i32
    return %c0_i32, %c0_i32_0 : i32, i32
  }
  func.func @transform_7(%arg0: i32) -> (i32, i32) {
    %c0_i32 = arith.constant 0 : i32
    %c0_i32_0 = arith.constant 0 : i32
    %c0_i32_1 = arith.constant 0 : i32
    return %c0_i32, %c0_i32_0 : i32, i32
  }
  func.func @transform_8(%arg0: i32) -> (i32, i32) {
    %c0_i32 = arith.constant 0 : i32
    %c0_i32_0 = arith.constant 0 : i32
    %c0_i32_1 = arith.constant 0 : i32
    return %c0_i32, %c0_i32_0 : i32, i32
  }
  func.func @transform_9(%arg0: i32) -> (i32, i32, i32) {
    %c0_i32 = arith.constant 0 : i32
    %c0_i32_0 = arith.constant 0 : i32
    %c0_i32_1 = arith.constant 0 : i32
    return %arg0, %c0_i32, %c0_i32_0 : i32, i32, i32
  }
}

</mosaic_0001>

<llo_original>
// kernel: forward.1
$region0: #{forward.1}
  #allocation0 [shape = 'u32[]', space=smem, size = 0x4, offset = 0x4, fixed_abs, tag = 'smem constant byte address 0x4 - core index']
  #allocation1 [shape = 'u32[144,128]{1,0:T(1,128)}', space=vmem, size = 0x12000, scoped, tag = 'internal scratch']
  #allocation2 [shape = 'f32[14,14,128]{2,1,0:T(8,128)}', space=vmem, size = 0x1c000, scoped, tag = 'scratch operand']
  #allocation3 [shape = 'f32[12,12,128]{2,1,0:T(8,128)}', space=vmem, size = 0x18000, scoped, tag = 'scratch operand']
  #allocation4 [shape = 'f32[10,10,128]{2,1,0:T(8,128)}', space=vmem, size = 0x14000, scoped, tag = 'scratch operand']
  %s0 = inlined_call_operand.vmem [shape: f32[2,16,16,128], index: 0, kind: input, shape index: {}]
  %s1 = inlined_call_operand.hbm [shape: bf16[9,128,128], index: 1, kind: input, shape index: {}]
  %s2 = inlined_call_operand.hbm [shape: f32[1,128], index: 2, kind: input, shape index: {}]
  %s3 = inlined_call_operand.hbm [shape: bf16[9,128,128], index: 3, kind: input, shape index: {}]
  %s4 = inlined_call_operand.hbm [shape: f32[1,128], index: 4, kind: input, shape index: {}]
  %s5 = inlined_call_operand.hbm [shape: bf16[100,128,128], index: 5, kind: input, shape index: {}]
  %s6 = inlined_call_operand.hbm [shape: f32[1,128], index: 6, kind: input, shape index: {}]
  %s7 = inlined_call_operand.hbm [shape: bf16[128,128], index: 7, kind: input, shape index: {}]
  %s8 = inlined_call_operand.hbm [shape: f32[1,128], index: 8, kind: input, shape index: {}]
  %s9 = inlined_call_operand.hbm [shape: f32[2,1,128], index: 9, kind: output, shape index: {}]
  %s10 = sld [smem:[#allocation0]]
  $region129: #{forward.1} parent=0
    _
  %s12 = ssub.s32 1, %s10
  %s13 = scalar_select 0, %s12, %s10
  $region1: #{forward.1} parent=0
    #allocation5 [shape = 'u8[294912]{0}', space=vmem, size = 0x48000, scoped, tag = 'input window, operand 1, single buffered']
    #allocation6 [shape = 's32[2]{0}', space=sflag, size = 0x8, scoped, tag = 'scoped memory for forward.1']
    #allocation7 [shape = 's32[2]{0}', space=sflag, size = 0x8, scoped, tag = 'scoped memory for forward.1']
    #allocation8 [shape = 'u8[512]{0}', space=vmem, size = 0x400, scoped, tag = 'input window, operand 2, single buffered']
    #allocation9 [shape = 's32[1]{0}', space=sflag, size = 0x4, scoped, tag = 'scoped memory for forward.1']
    #allocation10 [shape = 'u8[294912]{0}', space=vmem, size = 0x48000, scoped, tag = 'input window, operand 3, single buffered']
    #allocation11 [shape = 'u8[512]{0}', space=vmem, size = 0x400, scoped, tag = 'input window, operand 4, single buffered']
    #allocation12 [shape = 's32[1]{0}', space=sflag, size = 0x4, scoped, tag = 'scoped memory for forward.1']
    #allocation13 [shape = 'u8[3276800]{0}', space=vmem, size = 0x320000, scoped, tag = 'input window, operand 5, single buffered']
    #allocation14 [shape = 'u8[512]{0}', space=vmem, size = 0x400, scoped, tag = 'input window, operand 6, single buffered']
    #allocation15 [shape = 's32[1]{0}', space=sflag, size = 0x4, scoped, tag = 'scoped memory for forward.1']
    #allocation16 [shape = 'u8[32768]{0}', space=vmem, size = 0x8000, scoped, tag = 'input window, operand 7, single buffered']
    #allocation17 [shape = 'u8[512]{0}', space=vmem, size = 0x400, scoped, tag = 'input window, operand 8, single buffered']
    #allocation18 [shape = 's32[1]{0}', space=sflag, size = 0x4, scoped, tag = 'scoped memory for forward.1']
    #allocation19 [shape = 'u8[1024]{0}', space=vmem, size = 0x400, scoped, tag = 'output window, operand 0']
    %14 = vsyncpa [#allocation6], 0
    %15 = vsyncpa [#allocation9], 0
    %16 = vsyncpa [#allocation12], 0
    %17 = vsyncpa [#allocation15], 0
    %18 = vsyncpa [#allocation18], 0
    %19 = vsyncpa [#allocation7], 0
    %s20 = scalar_lea.sflag [#allocation7], 1
    %21 = vsyncpa %s20, 0
    loop: start=0, step=1, limit=4
    $region2: #{forward.1} parent=1 // loop_pre_header
      _
    $region3: #{forward.1} parent=1 // loop_header
      %s23 = sphi 0, %s27
      %p24 = scmp.ge.s32.totalorder %s23, 4
      %s33 = sphi 0, %s35
      %s36 = sphi 0, %s33
      %s37 = sphi 0, %s36
      %s53 = sphi 0, %s37
      %s57 = sphi 0, %s57
      %s59 = sphi 0, %s57
      %s60 = sphi 0, %s59
      %s74 = sphi 0, %s60
      %s78 = sphi 0, %s78
      %s80 = sphi 0, %s78
      %s81 = sphi 0, %s80
      %s95 = sphi 0, %s81
      %s99 = sphi 0, %s99
      %s101 = sphi 0, %s99
      %s102 = sphi 0, %s101
      %s116 = sphi 0, %s102
      %s120 = sphi 0, %s120
      %s122 = sphi 0, %s120
      %s123 = sphi 0, %s122
      %s137 = sphi 0, %s123
      %s141 = sphi 0, %s141
      %s143 = sphi 0, %s141
      %s144 = sphi 0, %s143
      %s158 = sphi 0, %s144
      %s162 = sphi 0, %s162
      %s164 = sphi 0, %s162
      %s165 = sphi 0, %s164
      %s179 = sphi 0, %s165
      %s183 = sphi 0, %s183
      %s185 = sphi 0, %s183
      %s186 = sphi 0, %s185
      %s200 = sphi 0, %s186
      %s204 = sphi 0, %s204
      %s206 = sphi 0, %s204
      %s207 = sphi 0, %s206
      %s221 = sphi 0, %s207
      %s227 = sphi 0, %s229
      %s230 = sphi 0, %s227
      %s231 = sphi 0, %s230
      %s247 = sphi 0, %s231
    $region4: #{forward.1} parent=1 // loop_header_branch
      %26 = sbr.rel (%p24) target = $region8
    $region5: #{forward.1} parent=1 // loop_body
      %s28 = ssub.s32 %s23, 1
      %s29 = ssub.s32 %s23, 2
      %s30 = sadd.s32 %s23, 1
      %s31 = ssub.s32 %s23, %s30
      %p32 = scmp.eq.s32.totalorder %s31, 0
      %s34 = sadd.s32 %s33, 1
      %s35 = scalar_select %p32, %s33, %s34
      %p38 = pneg %p32
      %p39 = scmp.eq.s32.totalorder %s23, 1
      %p40 = por %p38, %p39
      %p41 = scmp.ne.s32.totalorder %s33, %s36
      %p42 = scmp.eq.s32.totalorder %s23, 0
      %p43 = por %p41, %p42
      %p44 = scmp.ne.s32.totalorder %s33, %s36
      %p45 = scmp.eq.s32.totalorder %s28, 1
      %p46 = por %p44, %p45
      %p47 = scmp.ne.s32.totalorder %s36, %s37
      %p48 = scmp.eq.s32.totalorder %s28, 0
      %p49 = por %p47, %p48
      %p50 = scmp.ne.s32.totalorder %s36, %s37
      %p51 = scmp.eq.s32.totalorder %s29, 1
      %p52 = por %p50, %p51
      %p54 = scmp.ne.s32.totalorder %s37, %s53
      %p55 = scmp.eq.s32.totalorder %s29, 0
      %p56 = por %p54, %p55
      %s58 = sadd.s32 %s57, 1
      %p61 = scmp.eq.s32.totalorder %s23, 1
      %p62 = scmp.ne.s32.totalorder %s57, %s59
      %p63 = scmp.eq.s32.totalorder %s23, 0
      %p64 = por %p62, %p63
      %p65 = scmp.ne.s32.totalorder %s57, %s59
      %p66 = scmp.eq.s32.totalorder %s28, 1
      %p67 = por %p65, %p66
      %p68 = scmp.ne.s32.totalorder %s59, %s60
      %p69 = scmp.eq.s32.totalorder %s28, 0
      %p70 = por %p68, %p69
      %p71 = scmp.ne.s32.totalorder %s59, %s60
      %p72 = scmp.eq.s32.totalorder %s29, 1
      %p73 = por %p71, %p72
      %p75 = scmp.ne.s32.totalorder %s60, %s74
      %p76 = scmp.eq.s32.totalorder %s29, 0
      %p77 = por %p75, %p76
      %s79 = sadd.s32 %s78, 1
      %p82 = scmp.eq.s32.totalorder %s23, 1
      %p83 = scmp.ne.s32.totalorder %s78, %s80
      %p84 = scmp.eq.s32.totalorder %s23, 0
      %p85 = por %p83, %p84
      %p86 = scmp.ne.s32.totalorder %s78, %s80
      %p87 = scmp.eq.s32.totalorder %s28, 1
      %p88 = por %p86, %p87
      %p89 = scmp.ne.s32.totalorder %s80, %s81
      %p90 = scmp.eq.s32.totalorder %s28, 0
      %p91 = por %p89, %p90
      %p92 = scmp.ne.s32.totalorder %s80, %s81
      %p93 = scmp.eq.s32.totalorder %s29, 1
      %p94 = por %p92, %p93
      %p96 = scmp.ne.s32.totalorder %s81, %s95
      %p97 = scmp.eq.s32.totalorder %s29, 0
      %p98 = por %p96, %p97
      %s100 = sadd.s32 %s99, 1
      %p103 = scmp.eq.s32.totalorder %s23, 1
      %p104 = scmp.ne.s32.totalorder %s99, %s101
      %p105 = scmp.eq.s32.totalorder %s23, 0
      %p106 = por %p104, %p105
      %p107 = scmp.ne.s32.totalorder %s99, %s101
      %p108 = scmp.eq.s32.totalorder %s28, 1
      %p109 = por %p107, %p108
      %p110 = scmp.ne.s32.totalorder %s101, %s102
      %p111 = scmp.eq.s32.totalorder %s28, 0
      %p112 = por %p110, %p111
      %p113 = scmp.ne.s32.totalorder %s101, %s102
      %p114 = scmp.eq.s32.totalorder %s29, 1
      %p115 = por %p113, %p114
      %p117 = scmp.ne.s32.totalorder %s102, %s116
      %p118 = scmp.eq.s32.totalorder %s29, 0
      %p119 = por %p117, %p118
      %s121 = sadd.s32 %s120, 1
      %p124 = scmp.eq.s32.totalorder %s23, 1
      %p125 = scmp.ne.s32.totalorder %s120, %s122
      %p126 = scmp.eq.s32.totalorder %s23, 0
      %p127 = por %p125, %p126
      %p128 = scmp.ne.s32.totalorder %s120, %s122
      %p129 = scmp.eq.s32.totalorder %s28, 1
      %p130 = por %p128, %p129
      %p131 = scmp.ne.s32.totalorder %s122, %s123
      %p132 = scmp.eq.s32.totalorder %s28, 0
      %p133 = por %p131, %p132
      %p134 = scmp.ne.s32.totalorder %s122, %s123
      %p135 = scmp.eq.s32.totalorder %s29, 1
      %p136 = por %p134, %p135
      %p138 = scmp.ne.s32.totalorder %s123, %s137
      %p139 = scmp.eq.s32.totalorder %s29, 0
      %p140 = por %p138, %p139
      %s142 = sadd.s32 %s141, 1
      %p145 = scmp.eq.s32.totalorder %s23, 1
      %p146 = scmp.ne.s32.totalorder %s141, %s143
      %p147 = scmp.eq.s32.totalorder %s23, 0
      %p148 = por %p146, %p147
      %p149 = scmp.ne.s32.totalorder %s141, %s143
      %p150 = scmp.eq.s32.totalorder %s28, 1
      %p151 = por %p149, %p150
      %p152 = scmp.ne.s32.totalorder %s143, %s144
      %p153 = scmp.eq.s32.totalorder %s28, 0
      %p154 = por %p152, %p153
      %p155 = scmp.ne.s32.totalorder %s143, %s144
      %p156 = scmp.eq.s32.totalorder %s29, 1
      %p157 = por %p155, %p156
      %p159 = scmp.ne.s32.totalorder %s144, %s158
      %p160 = scmp.eq.s32.totalorder %s29, 0
      %p161 = por %p159, %p160
      %s163 = sadd.s32 %s162, 1
      %p166 = scmp.eq.s32.totalorder %s23, 1
      %p167 = scmp.ne.s32.totalorder %s162, %s164
      %p168 = scmp.eq.s32.totalorder %s23, 0
      %p169 = por %p167, %p168
      %p170 = scmp.ne.s32.totalorder %s162, %s164
      %p171 = scmp.eq.s32.totalorder %s28, 1
      %p172 = por %p170, %p171
      %p173 = scmp.ne.s32.totalorder %s164, %s165
      %p174 = scmp.eq.s32.totalorder %s28, 0
      %p175 = por %p173, %p174
      %p176 = scmp.ne.s32.totalorder %s164, %s165
      %p177 = scmp.eq.s32.totalorder %s29, 1
      %p178 = por %p176, %p177
      %p180 = scmp.ne.s32.totalorder %s165, %s179
      %p181 = scmp.eq.s32.totalorder %s29, 0
      %p182 = por %p180, %p181
      %s184 = sadd.s32 %s183, 1
      %p187 = scmp.eq.s32.totalorder %s23, 1
      %p188 = scmp.ne.s32.totalorder %s183, %s185
      %p189 = scmp.eq.s32.totalorder %s23, 0
      %p190 = por %p188, %p189
      %p191 = scmp.ne.s32.totalorder %s183, %s185
      %p192 = scmp.eq.s32.totalorder %s28, 1
      %p193 = por %p191, %p192
      %p194 = scmp.ne.s32.totalorder %s185, %s186
      %p195 = scmp.eq.s32.totalorder %s28, 0
      %p196 = por %p194, %p195
      %p197 = scmp.ne.s32.totalorder %s185, %s186
      %p198 = scmp.eq.s32.totalorder %s29, 1
      %p199 = por %p197, %p198
      %p201 = scmp.ne.s32.totalorder %s186, %s200
      %p202 = scmp.eq.s32.totalorder %s29, 0
      %p203 = por %p201, %p202
      %s205 = sadd.s32 %s204, 1
      %p208 = scmp.eq.s32.totalorder %s23, 1
      %p209 = scmp.ne.s32.totalorder %s204, %s206
      %p210 = scmp.eq.s32.totalorder %s23, 0
      %p211 = por %p209, %p210
      %p212 = scmp.ne.s32.totalorder %s204, %s206
      %p213 = scmp.eq.s32.totalorder %s28, 1
      %p214 = por %p212, %p213
      %p215 = scmp.ne.s32.totalorder %s206, %s207
      %p216 = scmp.eq.s32.totalorder %s28, 0
      %p217 = por %p215, %p216
      %p218 = scmp.ne.s32.totalorder %s206, %s207
      %p219 = scmp.eq.s32.totalorder %s29, 1
      %p220 = por %p218, %p219
      %p222 = scmp.ne.s32.totalorder %s207, %s221
      %p223 = scmp.eq.s32.totalorder %s29, 0
      %p224 = por %p222, %p223
      %s225 = ssub.s32 %s23, %s30
      %p226 = scmp.eq.s32.totalorder %s225, 0
      %s228 = sadd.s32 %s227, 1
      %s229 = scalar_select %p226, %s227, %s228
      %p232 = pneg %p226
      %p233 = scmp.eq.s32.totalorder %s23, 1
      %p234 = por %p232, %p233
      %p235 = scmp.ne.s32.totalorder %s227, %s230
      %p236 = scmp.eq.s32.totalorder %s23, 0
      %p237 = por %p235, %p236
      %p238 = scmp.ne.s32.totalorder %s227, %s230
      %p239 = scmp.eq.s32.totalorder %s28, 1
      %p240 = por %p238, %p239
      %p241 = scmp.ne.s32.totalorder %s230, %s231
      %p242 = scmp.eq.s32.totalorder %s28, 0
      %p243 = por %p241, %p242
      %p244 = scmp.ne.s32.totalorder %s230, %s231
      %p245 = scmp.eq.s32.totalorder %s29, 1
      %p246 = por %p244, %p245
      %p248 = scmp.ne.s32.totalorder %s231, %s247
      %p249 = scmp.eq.s32.totalorder %s29, 0
      %p250 = por %p248, %p249
      %p251 = scmp.le.s32.totalorder 1, %s23
      %p252 = scmp.lt.s32.totalorder %s23, 3
      %p253 = pnand %p251, %p252
      %p254 = pneg %p253
      // Predicated region
      $region9: #{forward.1} parent=5 // pred_check
        _
      $region10: #{forward.1} parent=5 // pred_check_branch
        %256 = sbr.rel (%p253) target = $region12
      $region11: #{forward.1} parent=5 // pred_region
        %s257 = ssub.s32 %s23, 1
        // Predicated region
        $region13: #{forward.1} parent=11 // pred_check
          %p258 = pneg %p70
        $region14: #{forward.1} parent=11 // pred_check_branch
          %260 = sbr.rel (%p258) target = $region16
        $region15: #{forward.1} parent=11 // pred_region
          %s262 = ssub.s32 9216, 9216
          %263 = vsyncadd [#allocation6], %s262
          %s264 = sshll.u32 [#allocation5], 4
          %s265 = int_to_ptr.vmem [resolvable:$true] %s264
          %270 = dma.hbm_to_vmem [thread:$0]  %s1, 9216, %s265, [#allocation6], 64, 64, 4
        $region16: #{forward.1} parent=11 // pred_fallthru
          _
        // Predicated region
        $region17: #{forward.1} parent=11 // pred_check
          %p271 = pneg %p91
        $region18: #{forward.1} parent=11 // pred_check_branch
          %273 = sbr.rel (%p271) target = $region20
        $region19: #{forward.1} parent=11 // pred_region
          %s275 = ssub.s32 16, 16
          %276 = vsyncadd [#allocation9], %s275
          %s278 = sshll.u32 [#allocation8], 4
          %s279 = int_to_ptr.vmem [resolvable:$true] %s278
          %281 = dma.hbm_to_vmem [thread:$0]  %s2, 16, %s279, [#allocation9]
        $region20: #{forward.1} parent=11 // pred_fallthru
          _
        // Predicated region
        $region21: #{forward.1} parent=11 // pred_check
          %p282 = pneg %p112
        $region22: #{forward.1} parent=11 // pred_check_branch
          %284 = sbr.rel (%p282) target = $region24
        $region23: #{forward.1} parent=11 // pred_region
          %s286 = ssub.s32 9216, 9216
          %287 = vsyncadd [#allocation9], %s286
          %s288 = sshll.u32 [#allocation10], 4
          %s289 = int_to_ptr.vmem [resolvable:$true] %s288
          %294 = dma.hbm_to_vmem [thread:$0]  %s3, 9216, %s289, [#allocation9], 64, 64, 4
        $region24: #{forward.1} parent=11 // pred_fallthru
          _
        // Predicated region
        $region25: #{forward.1} parent=11 // pred_check
          %p295 = pneg %p133
        $region26: #{forward.1} parent=11 // pred_check_branch
          %297 = sbr.rel (%p295) target = $region28
        $region27: #{forward.1} parent=11 // pred_region
          %s299 = ssub.s32 16, 16
          %300 = vsyncadd [#allocation12], %s299
          %s302 = sshll.u32 [#allocation11], 4
          %s303 = int_to_ptr.vmem [resolvable:$true] %s302
          %305 = dma.hbm_to_vmem [thread:$0]  %s4, 16, %s303, [#allocation12]
        $region28: #{forward.1} parent=11 // pred_fallthru
          _
        // Predicated region
        $region29: #{forward.1} parent=11 // pred_check
          %p306 = pneg %p154
        $region30: #{forward.1} parent=11 // pred_check_branch
          %308 = sbr.rel (%p306) target = $region32
        $region31: #{forward.1} parent=11 // pred_region
          %s310 = ssub.s32 102400, 102400
          %311 = vsyncadd [#allocation12], %s310
          %s312 = sshll.u32 [#allocation13], 4
          %s313 = int_to_ptr.vmem [resolvable:$true] %s312
          %318 = dma.hbm_to_vmem [thread:$0]  %s5, 102400, %s313, [#allocation12], 64, 64, 4
        $region32: #{forward.1} parent=11 // pred_fallthru
          _
        // Predicated region
        $region33: #{forward.1} parent=11 // pred_check
          %p319 = pneg %p175
        $region34: #{forward.1} parent=11 // pred_check_branch
          %321 = sbr.rel (%p319) target = $region36
        $region35: #{forward.1} parent=11 // pred_region
          %s323 = ssub.s32 16, 16
          %324 = vsyncadd [#allocation15], %s323
          %s326 = sshll.u32 [#allocation14], 4
          %s327 = int_to_ptr.vmem [resolvable:$true] %s326
          %329 = dma.hbm_to_vmem [thread:$0]  %s6, 16, %s327, [#allocation15]
        $region36: #{forward.1} parent=11 // pred_fallthru
          _
        // Predicated region
        $region37: #{forward.1} parent=11 // pred_check
          %p330 = pneg %p196
        $region38: #{forward.1} parent=11 // pred_check_branch
          %332 = sbr.rel (%p330) target = $region40
        $region39: #{forward.1} parent=11 // pred_region
          %s334 = ssub.s32 1024, 1024
          %335 = vsyncadd [#allocation15], %s334
          %s336 = sshll.u32 [#allocation16], 4
          %s337 = int_to_ptr.vmem [resolvable:$true] %s336
          %342 = dma.hbm_to_vmem [thread:$0]  %s7, 1024, %s337, [#allocation15], 64, 64, 4
        $region40: #{forward.1} parent=11 // pred_fallthru
          _
        // Predicated region
        $region41: #{forward.1} parent=11 // pred_check
          %p343 = pneg %p217
        $region42: #{forward.1} parent=11 // pred_check_branch
          %345 = sbr.rel (%p343) target = $region44
        $region43: #{forward.1} parent=11 // pred_region
          %s347 = ssub.s32 16, 16
          %348 = vsyncadd [#allocation18], %s347
          %s350 = sshll.u32 [#allocation17], 4
          %s351 = int_to_ptr.vmem [resolvable:$true] %s350
          %353 = dma.hbm_to_vmem [thread:$0]  %s8, 16, %s351, [#allocation18]
        $region44: #{forward.1} parent=11 // pred_fallthru
          _
      $region12: #{forward.1} parent=5 // pred_fallthru
        _
      %p354 = scmp.lt.s32.totalorder %s23, 2
      // Predicated region
      $region45: #{forward.1} parent=5 // pred_check
        %p355 = pneg %p354
      $region46: #{forward.1} parent=5 // pred_check_branch
        %357 = sbr.rel (%p355) target = $region48
      $region47: #{forward.1} parent=5 // pred_region
        // Predicated region
        $region49: #{forward.1} parent=47 // pred_check
          %p358 = pneg %p43
        $region50: #{forward.1} parent=47 // pred_check_branch
          %360 = sbr.rel (%p358) target = $region52
        $region51: #{forward.1} parent=47 // pred_region
          %p361 = scmp.lt.s32.totalorder %s23, 1
          %s362 = scalar_select %p361, %s23, 1
          %s363 = smul.addr %s362, 32
          %s364 = smul.addr %s363, 8
          %s365 = scalar_lea.vmem %s0, %s364
        $region52: #{forward.1} parent=47 // pred_fallthru
          _
      $region48: #{forward.1} parent=5 // pred_fallthru
        _
      %p366 = scmp.le.s32.totalorder 1, %s23
      %p367 = scmp.lt.s32.totalorder %s23, 3
      %p368 = pnand %p366, %p367
      %p369 = pneg %p368
      // Predicated region
      $region53: #{forward.1} parent=5 // pred_check
        _
      $region54: #{forward.1} parent=5 // pred_check_branch
        %371 = sbr.rel (%p368) target = $region56
      $region55: #{forward.1} parent=5 // pred_region
        %s372 = ssub.s32 %s23, 1
        // Predicated region
        $region57: #{forward.1} parent=55 // pred_check
          %p373 = pneg %p70
        $region58: #{forward.1} parent=55 // pred_check_branch
          %375 = sbr.rel (%p373) target = $region60
        $region59: #{forward.1} parent=55 // pred_region
          %376 = dma.done [#allocation6], 9216
        $region60: #{forward.1} parent=55 // pred_fallthru
          _
        // Predicated region
        $region61: #{forward.1} parent=55 // pred_check
          %p377 = pneg %p91
        $region62: #{forward.1} parent=55 // pred_check_branch
          %379 = sbr.rel (%p377) target = $region64
        $region63: #{forward.1} parent=55 // pred_region
          %380 = dma.done [#allocation9], 16
        $region64: #{forward.1} parent=55 // pred_fallthru
          _
        // Predicated region
        $region65: #{forward.1} parent=55 // pred_check
          %p381 = pneg %p112
        $region66: #{forward.1} parent=55 // pred_check_branch
          %383 = sbr.rel (%p381) target = $region68
        $region67: #{forward.1} parent=55 // pred_region
          %384 = dma.done [#allocation9], 9216
        $region68: #{forward.1} parent=55 // pred_fallthru
          _
        // Predicated region
        $region69: #{forward.1} parent=55 // pred_check
          %p385 = pneg %p133
        $region70: #{forward.1} parent=55 // pred_check_branch
          %387 = sbr.rel (%p385) target = $region72
        $region71: #{forward.1} parent=55 // pred_region
          %388 = dma.done [#allocation12], 16
        $region72: #{forward.1} parent=55 // pred_fallthru
          _
        // Predicated region
        $region73: #{forward.1} parent=55 // pred_check
          %p389 = pneg %p154
        $region74: #{forward.1} parent=55 // pred_check_branch
          %391 = sbr.rel (%p389) target = $region76
        $region75: #{forward.1} parent=55 // pred_region
          %392 = dma.done [#allocation12], 102400
        $region76: #{forward.1} parent=55 // pred_fallthru
          _
        // Predicated region
        $region77: #{forward.1} parent=55 // pred_check
          %p393 = pneg %p175
        $region78: #{forward.1} parent=55 // pred_check_branch
          %395 = sbr.rel (%p393) target = $region80
        $region79: #{forward.1} parent=55 // pred_region
          %396 = dma.done [#allocation15], 16
        $region80: #{forward.1} parent=55 // pred_fallthru
          _
        // Predicated region
        $region81: #{forward.1} parent=55 // pred_check
          %p397 = pneg %p196
        $region82: #{forward.1} parent=55 // pred_check_branch
          %399 = sbr.rel (%p397) target = $region84
        $region83: #{forward.1} parent=55 // pred_region
          %400 = dma.done [#allocation15], 1024
        $region84: #{forward.1} parent=55 // pred_fallthru
          _
        // Predicated region
        $region85: #{forward.1} parent=55 // pred_check
          %p401 = pneg %p217
        $region86: #{forward.1} parent=55 // pred_check_branch
          %403 = sbr.rel (%p401) target = $region88
        $region87: #{forward.1} parent=55 // pred_region
          %404 = dma.done [#allocation18], 16
        $region88: #{forward.1} parent=55 // pred_fallthru
          _
        %p405 = scmp.lt.s32.totalorder %s28, 1
        %s406 = scalar_select %p405, %s28, 1
        %s407 = smul.addr %s406, 32
        %s408 = smul.addr %s407, 8
        %s409 = scalar_lea.vmem %s0, %s408
        %p410 = pneg %p49
        %p411 = pneg %p46
        %p412 = pneg %p70
        %p413 = pneg %p67
        %p414 = pneg %p91
        %p415 = pneg %p88
        %p416 = pneg %p112
        %p417 = pneg %p109
        %p418 = pneg %p133
        %p419 = pneg %p130
        %p420 = pneg %p154
        %p421 = pneg %p151
        %p422 = pneg %p175
        %p423 = pneg %p172
        %p424 = pneg %p196
        %p425 = pneg %p193
        %p426 = pneg %p217
        %p427 = pneg %p214
        %p428 = pneg %p243
        %p429 = pneg %p240
        %s430 = sand.u32 %s230, 1
        %s431 = scalar_lea.sflag [#allocation7], %s430
        %s432 = sand.u32 %s230, 1
        %s433 = scalar_lea.vmem [#allocation19], %s432
        %p434 = scmp.lt.s32.totalorder %s28, 1
        %s435 = scalar_select %p434, %s28, 1
        %s436 = smul.addr %s435, 32
        %s437 = smul.addr %s436, 8
        %s438 = scalar_lea.vmem %s0, %s437
        %v440 = vld [vmem:[#allocation8] sm:$0x1]
        loop: start=0, step=1, limit=14
        $region89: #{forward.1} parent=55 // loop_pre_header
          _
        $region90: #{forward.1} parent=55 // loop_header
          %s442 = sphi 0, %s446
          %p443 = scmp.ge.s32.totalorder %s442, 14
        $region91: #{forward.1} parent=55 // loop_header_branch
          %445 = sbr.rel (%p443) target = $region95
        $region92: #{forward.1} parent=55 // loop_body
          %s447 = smul.u32 %s442, 16
          %s448 = scalar_lea.vmem %s438, %s447
          %v449 = vld [vmem:[%s448] sm:$0xff]
          %v450 = vld [vmem:[%s448 + $0x8] sm:$0x3f]
          %v451 = vpack.c.bf16 %v450, %v449
          %v452 = vld [vmem:[#allocation5] sm:$0xf]
          %v453 = vld [vmem:[#allocation5 + $0x4] sm:$0xf]
          %v454 = vld [vmem:[#allocation5 + $0x8] sm:$0xf]
          %v455 = vld [vmem:[#allocation5 + $0xc] sm:$0xf]
          %v456 = vld [vmem:[#allocation5 + $0x10] sm:$0xf]
          %v457 = vld [vmem:[#allocation5 + $0x14] sm:$0xf]
          %v458 = vld [vmem:[#allocation5 + $0x18] sm:$0xf]
          %v459 = vld [vmem:[#allocation5 + $0x1c] sm:$0xf]
          %v460 = vld [vmem:[#allocation5 + $0x20] sm:$0xf]
          %v461 = vld [vmem:[#allocation5 + $0x24] sm:$0xf]
          %v462 = vld [vmem:[#allocation5 + $0x28] sm:$0xf]
          %v463 = vld [vmem:[#allocation5 + $0x2c] sm:$0xf]
          %v464 = vld [vmem:[#allocation5 + $0x30] sm:$0xf]
          %v465 = vld [vmem:[#allocation5 + $0x34] sm:$0xf]
          %v466 = vld [vmem:[#allocation5 + $0x38] sm:$0xf]
          %v467 = vld [vmem:[#allocation5 + $0x3c] sm:$0xf]
          %v468 = vld [vmem:[%s448 + $0x1] sm:$0xff]
          %v469 = vld [vmem:[%s448 + $0x9] sm:$0x3f]
          %v470 = vpack.c.bf16 %v469, %v468
          %s471 = scalar_lea.vmem [#allocation5], 64
          %v472 = vld [vmem:[%s471] sm:$0xf]
          %v473 = vld [vmem:[%s471 + $0x4] sm:$0xf]
          %v474 = vld [vmem:[%s471 + $0x8] sm:$0xf]
          %v475 = vld [vmem:[%s471 + $0xc] sm:$0xf]
          %v476 = vld [vmem:[%s471 + $0x10] sm:$0xf]
          %v477 = vld [vmem:[%s471 + $0x14] sm:$0xf]
          %v478 = vld [vmem:[%s471 + $0x18] sm:$0xf]
          %v479 = vld [vmem:[%s471 + $0x1c] sm:$0xf]
          %v480 = vld [vmem:[%s471 + $0x20] sm:$0xf]
          %v481 = vld [vmem:[%s471 + $0x24] sm:$0xf]
          %v482 = vld [vmem:[%s471 + $0x28] sm:$0xf]
          %v483 = vld [vmem:[%s471 + $0x2c] sm:$0xf]
          %v484 = vld [vmem:[%s471 + $0x30] sm:$0xf]
          %v485 = vld [vmem:[%s471 + $0x34] sm:$0xf]
          %v486 = vld [vmem:[%s471 + $0x38] sm:$0xf]
          %v487 = vld [vmem:[%s471 + $0x3c] sm:$0xf]
          %v504 = vunpack.c.l.b16 %v472
          %v505 = vunpack.c.l.b16 %v473
          %v506 = vunpack.c.l.b16 %v474
          %v507 = vunpack.c.l.b16 %v475
          %v508 = vunpack.c.l.b16 %v476
          %v509 = vunpack.c.l.b16 %v477
          %v510 = vunpack.c.l.b16 %v478
          %v511 = vunpack.c.l.b16 %v479
          %v512 = vunpack.c.l.b16 %v480
          %v513 = vunpack.c.l.b16 %v481
          %v514 = vunpack.c.l.b16 %v482
          %v515 = vunpack.c.l.b16 %v483
          %v516 = vunpack.c.l.b16 %v484
          %v517 = vunpack.c.l.b16 %v485
          %v518 = vunpack.c.l.b16 %v486
          %v519 = vunpack.c.l.b16 %v487
          %v520 = vpack.c.b16 %v505, %v504
          %v521 = vpack.c.b16 %v507, %v506
          %v522 = vpack.c.b16 %v509, %v508
          %v523 = vpack.c.b16 %v511, %v510
          %v524 = vpack.c.b16 %v513, %v512
          %v525 = vpack.c.b16 %v515, %v514
          %v526 = vpack.c.b16 %v517, %v516
          %v527 = vpack.c.b16 %v519, %v518
          %536 = vmatprep.subr.bf16.mxu0 0
          %537 = vmatpush1.bf16.msra.mxu0 %v520
          %538 = vmatprep.subr.bf16.mxu0 0
          %539 = vmatpush1.bf16.msra.mxu0 %v521
          %540 = vmatprep.subr.bf16.mxu0 0
          %541 = vmatpush1.bf16.msra.mxu0 %v522
          %542 = vmatprep.subr.bf16.mxu0 0
          %543 = vmatpush1.bf16.msra.mxu0 %v523
          %544 = vmatprep.subr.bf16.mxu0 0
          %545 = vmatpush1.bf16.msra.mxu0 %v524
          %546 = vmatprep.subr.bf16.mxu0 0
          %547 = vmatpush1.bf16.msra.mxu0 %v525
          %548 = vmatprep.subr.bf16.mxu0 0
          %549 = vmatpush1.bf16.msra.mxu0 %v526
          %550 = vmatprep.subr.bf16.mxu0 0
          %551 = vmatpush1.bf16.msra.mxu0 %v527
          %552 = vmatprep.subr.bf16.mxu0 0
          %553 = vmatpush1.bf16.msra.mxu0 0
          %554 = vmatprep.subr.bf16.mxu0 0
          %555 = vmatpush1.bf16.msra.mxu0 0
          %556 = vmatprep.subr.bf16.mxu0 0
          %557 = vmatpush1.bf16.msra.mxu0 0
          %558 = vmatprep.subr.bf16.mxu0 0
          %559 = vmatpush1.bf16.msra.mxu0 0
          %560 = vmatprep.subr.bf16.mxu0 0
          %561 = vmatpush1.bf16.msra.mxu0 0
          %562 = vmatprep.subr.bf16.mxu0 0
          %563 = vmatpush1.bf16.msra.mxu0 0
          %564 = vmatprep.subr.bf16.mxu0 0
          %565 = vmatpush1.bf16.msra.mxu0 0
          %566 = vmatprep.subr.bf16.mxu0 0
          %567 = vmatpush1.bf16.msra.mxu0 0
          %568 = vmatprep.mubr.bf16.mxu0 0
          %569 = vmatmul.mubr.bf16.gmra.mrb[0].mxu0 %v470
          %v570 = vpop.f32.mrb[0].mxu0
          %v571 = vadd.f32 0.0, %v570
          %v572 = vpop.f32.mrb[0].mxu0
          %v573 = vpop.f32.mrb[0].mxu0
          %v574 = vadd.f32 0.0, %v573
          %v575 = vpop.f32.mrb[0].mxu0
          %576 = vdwg.mxu0
          %v593 = vunpack.c.l.b16 %v452
          %v594 = vunpack.c.l.b16 %v453
          %v595 = vunpack.c.l.b16 %v454
          %v596 = vunpack.c.l.b16 %v455
          %v597 = vunpack.c.l.b16 %v456
          %v598 = vunpack.c.l.b16 %v457
          %v599 = vunpack.c.l.b16 %v458
          %v600 = vunpack.c.l.b16 %v459
          %v601 = vunpack.c.l.b16 %v460
          %v602 = vunpack.c.l.b16 %v461
          %v603 = vunpack.c.l.b16 %v462
          %v604 = vunpack.c.l.b16 %v463
          %v605 = vunpack.c.l.b16 %v464
          %v606 = vunpack.c.l.b16 %v465
          %v607 = vunpack.c.l.b16 %v466
          %v608 = vunpack.c.l.b16 %v467
          %v609 = vpack.c.b16 %v594, %v593
          %v610 = vpack.c.b16 %v596, %v595
          %v611 = vpack.c.b16 %v598, %v597
          %v612 = vpack.c.b16 %v600, %v599
          %v613 = vpack.c.b16 %v602, %v601
          %v614 = vpack.c.b16 %v604, %v603
          %v615 = vpack.c.b16 %v606, %v605
          %v616 = vpack.c.b16 %v608, %v607
          %625 = vmatprep.subr.bf16.mxu0 0
          %626 = vmatpush1.bf16.msra.mxu0 %v609
          %627 = vmatprep.subr.bf16.mxu0 0
          %628 = vmatpush1.bf16.msra.mxu0 %v610
          %629 = vmatprep.subr.bf16.mxu0 0
          %630 = vmatpush1.bf16.msra.mxu0 %v611
          %631 = vmatprep.subr.bf16.mxu0 0
          %632 = vmatpush1.bf16.msra.mxu0 %v612
          %633 = vmatprep.subr.bf16.mxu0 0
          %634 = vmatpush1.bf16.msra.mxu0 %v613
          %635 = vmatprep.subr.bf16.mxu0 0
          %636 = vmatpush1.bf16.msra.mxu0 %v614
          %637 = vmatprep.subr.bf16.mxu0 0
          %638 = vmatpush1.bf16.msra.mxu0 %v615
          %639 = vmatprep.subr.bf16.mxu0 0
          %640 = vmatpush1.bf16.msra.mxu0 %v616
          %641 = vmatprep.subr.bf16.mxu0 0
          %642 = vmatpush1.bf16.msra.mxu0 0
          %643 = vmatprep.subr.bf16.mxu0 0
          %644 = vmatpush1.bf16.msra.mxu0 0
          %645 = vmatprep.subr.bf16.mxu0 0
          %646 = vmatpush1.bf16.msra.mxu0 0
          %647 = vmatprep.subr.bf16.mxu0 0
          %648 = vmatpush1.bf16.msra.mxu0 0
          %649 = vmatprep.subr.bf16.mxu0 0
          %650 = vmatpush1.bf16.msra.mxu0 0
          %651 = vmatprep.subr.bf16.mxu0 0
          %652 = vmatpush1.bf16.msra.mxu0 0
          %653 = vmatprep.subr.bf16.mxu0 0
          %654 = vmatpush1.bf16.msra.mxu0 0
          %655 = vmatprep.subr.bf16.mxu0 0
          %656 = vmatpush1.bf16.msra.mxu0 0
          %657 = vmatprep.mubr.bf16.mxu0 0
          %658 = vmatmul.mubr.bf16.gmra.mrb[0].mxu0 %v451
          %v659 = vpop.f32.mrb[0].mxu0
          %v660 = vadd.f32 %v571, %v659
          %v661 = vpop.f32.mrb[0].mxu0
          %v662 = vpop.f32.mrb[0].mxu0
          %v663 = vadd.f32 %v574, %v662
          %v664 = vpop.f32.mrb[0].mxu0
          %665 = vdwg.mxu0
          %v666 = vld [vmem:[%s448 + $0x2] sm:$0xff]
          %v667 = vld [vmem:[%s448 + $0xa] sm:$0x3f]
          %v668 = vpack.c.bf16 %v667, %v666
          %s669 = scalar_lea.vmem [#allocation5], 128
          %v670 = vld [vmem:[%s669] sm:$0xf]
          %v671 = vld [vmem:[%s669 + $0x4] sm:$0xf]
          %v672 = vld [vmem:[%s669 + $0x8] sm:$0xf]
          %v673 = vld [vmem:[%s669 + $0xc] sm:$0xf]
          %v674 = vld [vmem:[%s669 + $0x10] sm:$0xf]
          %v675 = vld [vmem:[%s669 + $0x14] sm:$0xf]
          %v676 = vld [vmem:[%s669 + $0x18] sm:$0xf]
          %v677 = vld [vmem:[%s669 + $0x1c] sm:$0xf]
          %v678 = vld [vmem:[%s669 + $0x20] sm:$0xf]
          %v679 = vld [vmem:[%s669 + $0x24] sm:$0xf]
          %v680 = vld [vmem:[%s669 + $0x28] sm:$0xf]
          %v681 = vld [vmem:[%s669 + $0x2c] sm:$0xf]
          %v682 = vld [vmem:[%s669 + $0x30] sm:$0xf]
          %v683 = vld [vmem:[%s669 + $0x34] sm:$0xf]
          %v684 = vld [vmem:[%s669 + $0x38] sm:$0xf]
          %v685 = vld [vmem:[%s669 + $0x3c] sm:$0xf]
          %v702 = vunpack.c.l.b16 %v670
          %v703 = vunpack.c.l.b16 %v671
          %v704 = vunpack.c.l.b16 %v672
          %v705 = vunpack.c.l.b16 %v673
          %v706 = vunpack.c.l.b16 %v674
          %v707 = vunpack.c.l.b16 %v675
          %v708 = vunpack.c.l.b16 %v676
          %v709 = vunpack.c.l.b16 %v677
          %v710 = vunpack.c.l.b16 %v678
          %v711 = vunpack.c.l.b16 %v679
          %v712 = vunpack.c.l.b16 %v680
          %v713 = vunpack.c.l.b16 %v681
          %v714 = vunpack.c.l.b16 %v682
          %v715 = vunpack.c.l.b16 %v683
          %v716 = vunpack.c.l.b16 %v684
          %v717 = vunpack.c.l.b16 %v685
          %v718 = vpack.c.b16 %v703, %v702
          %v719 = vpack.c.b16 %v705, %v704
          %v720 = vpack.c.b16 %v707, %v706
          %v721 = vpack.c.b16 %v709, %v708
          %v722 = vpack.c.b16 %v711, %v710
          %v723 = vpack.c.b16 %v713, %v712
          %v724 = vpack.c.b16 %v715, %v714
          %v725 = vpack.c.b16 %v717, %v716
          %734 = vmatprep.subr.bf16.mxu0 0
          %735 = vmatpush1.bf16.msra.mxu0 %v718
          %736 = vmatprep.subr.bf16.mxu0 0
          %737 = vmatpush1.bf16.msra.mxu0 %v719
          %738 = vmatprep.subr.bf16.mxu0 0
          %739 = vmatpush1.bf16.msra.mxu0 %v720
          %740 = vmatprep.subr.bf16.mxu0 0
          %741 = vmatpush1.bf16.msra.mxu0 %v721
          %742 = vmatprep.subr.bf16.mxu0 0
          %743 = vmatpush1.bf16.msra.mxu0 %v722
          %744 = vmatprep.subr.bf16.mxu0 0
          %745 = vmatpush1.bf16.msra.mxu0 %v723
          %746 = vmatprep.subr.bf16.mxu0 0
          %747 = vmatpush1.bf16.msra.mxu0 %v724
          %748 = vmatprep.subr.bf16.mxu0 0
          %749 = vmatpush1.bf16.msra.mxu0 %v725
          %750 = vmatprep.subr.bf16.mxu0 0
          %751 = vmatpush1.bf16.msra.mxu0 0
          %752 = vmatprep.subr.bf16.mxu0 0
          %753 = vmatpush1.bf16.msra.mxu0 0
          %754 = vmatprep.subr.bf16.mxu0 0
          %755 = vmatpush1.bf16.msra.mxu0 0
          %756 = vmatprep.subr.bf16.mxu0 0
          %757 = vmatpush1.bf16.msra.mxu0 0
          %758 = vmatprep.subr.bf16.mxu0 0
          %759 = vmatpush1.bf16.msra.mxu0 0
          %760 = vmatprep.subr.bf16.mxu0 0
          %761 = vmatpush1.bf16.msra.mxu0 0
          %762 = vmatprep.subr.bf16.mxu0 0
          %763 = vmatpush1.bf16.msra.mxu0 0
          %764 = vmatprep.subr.bf16.mxu0 0
          %765 = vmatpush1.bf16.msra.mxu0 0
          %766 = vmatprep.mubr.bf16.mxu0 0
          %767 = vmatmul.mubr.bf16.gmra.mrb[0].mxu0 %v668
          %v768 = vpop.f32.mrb[0].mxu0
          %v769 = vadd.f32 0.0, %v768
          %v770 = vpop.f32.mrb[0].mxu0
          %v771 = vpop.f32.mrb[0].mxu0
          %v772 = vadd.f32 0.0, %v771
          %v773 = vpop.f32.mrb[0].mxu0
          %774 = vdwg.mxu0
          %v775 = vadd.f32 %v660, %v769
          %v776 = vadd.f32 %v663, %v772
          %s777 = sadd.s32 %s442, 1
          %s778 = smul.u32 %s777, 16
          %s779 = scalar_lea.vmem %s438, %s778
          %v780 = vld [vmem:[%s779] sm:$0xff]
          %v781 = vld [vmem:[%s779 + $0x8] sm:$0x3f]
          %v782 = vpack.c.bf16 %v781, %v780
          %s783 = scalar_lea.vmem [#allocation5], 192
          %v784 = vld [vmem:[%s783] sm:$0xf]
          %v785 = vld [vmem:[%s783 + $0x4] sm:$0xf]
          %v786 = vld [vmem:[%s783 + $0x8] sm:$0xf]
          %v787 = vld [vmem:[%s783 + $0xc] sm:$0xf]
          %v788 = vld [vmem:[%s783 + $0x10] sm:$0xf]
          %v789 = vld [vmem:[%s783 + $0x14] sm:$0xf]
          %v790 = vld [vmem:[%s783 + $0x18] sm:$0xf]
          %v791 = vld [vmem:[%s783 + $0x1c] sm:$0xf]
          %v792 = vld [vmem:[%s783 + $0x20] sm:$0xf]
          %v793 = vld [vmem:[%s783 + $0x24] sm:$0xf]
          %v794 = vld [vmem:[%s783 + $0x28] sm:$0xf]
          %v795 = vld [vmem:[%s783 + $0x2c] sm:$0xf]
          %v796 = vld [vmem:[%s783 + $0x30] sm:$0xf]
          %v797 = vld [vmem:[%s783 + $0x34] sm:$0xf]
          %v798 = vld [vmem:[%s783 + $0x38] sm:$0xf]
          %v799 = vld [vmem:[%s783 + $0x3c] sm:$0xf]
          %v816 = vunpack.c.l.b16 %v784
          %v817 = vunpack.c.l.b16 %v785
          %v818 = vunpack.c.l.b16 %v786
          %v819 = vunpack.c.l.b16 %v787
          %v820 = vunpack.c.l.b16 %v788
          %v821 = vunpack.c.l.b16 %v789
          %v822 = vunpack.c.l.b16 %v790
          %v823 = vunpack.c.l.b16 %v791
          %v824 = vunpack.c.l.b16 %v792
          %v825 = vunpack.c.l.b16 %v793
          %v826 = vunpack.c.l.b16 %v794
          %v827 = vunpack.c.l.b16 %v795
          %v828 = vunpack.c.l.b16 %v796
          %v829 = vunpack.c.l.b16 %v797
          %v830 = vunpack.c.l.b16 %v798
          %v831 = vunpack.c.l.b16 %v799
          %v832 = vpack.c.b16 %v817, %v816
          %v833 = vpack.c.b16 %v819, %v818
          %v834 = vpack.c.b16 %v821, %v820
          %v835 = vpack.c.b16 %v823, %v822
          %v836 = vpack.c.b16 %v825, %v824
          %v837 = vpack.c.b16 %v827, %v826
          %v838 = vpack.c.b16 %v829, %v828
          %v839 = vpack.c.b16 %v831, %v830
          %848 = vmatprep.subr.bf16.mxu0 0
          %849 = vmatpush1.bf16.msra.mxu0 %v832
          %850 = vmatprep.subr.bf16.mxu0 0
          %851 = vmatpush1.bf16.msra.mxu0 %v833
          %852 = vmatprep.subr.bf16.mxu0 0
          %853 = vmatpush1.bf16.msra.mxu0 %v834
          %854 = vmatprep.subr.bf16.mxu0 0
          %855 = vmatpush1.bf16.msra.mxu0 %v835
          %856 = vmatprep.subr.bf16.mxu0 0
          %857 = vmatpush1.bf16.msra.mxu0 %v836
          %858 = vmatprep.subr.bf16.mxu0 0
          %859 = vmatpush1.bf16.msra.mxu0 %v837
          %860 = vmatprep.subr.bf16.mxu0 0
          %861 = vmatpush1.bf16.msra.mxu0 %v838
          %862 = vmatprep.subr.bf16.mxu0 0
          %863 = vmatpush1.bf16.msra.mxu0 %v839
          %864 = vmatprep.subr.bf16.mxu0 0
          %865 = vmatpush1.bf16.msra.mxu0 0
          %866 = vmatprep.subr.bf16.mxu0 0
          %867 = vmatpush1.bf16.msra.mxu0 0
          %868 = vmatprep.subr.bf16.mxu0 0
          %869 = vmatpush1.bf16.msra.mxu0 0
          %870 = vmatprep.subr.bf16.mxu0 0
          %871 = vmatpush1.bf16.msra.mxu0 0
          %872 = vmatprep.subr.bf16.mxu0 0
          %873 = vmatpush1.bf16.msra.mxu0 0
          %874 = vmatprep.subr.bf16.mxu0 0
          %875 = vmatpush1.bf16.msra.mxu0 0
          %876 = vmatprep.subr.bf16.mxu0 0
          %877 = vmatpush1.bf16.msra.mxu0 0
          %878 = vmatprep.subr.bf16.mxu0 0
          %879 = vmatpush1.bf16.msra.mxu0 0
          %880 = vmatprep.mubr.bf16.mxu0 0
          %881 = vmatmul.mubr.bf16.gmra.mrb[0].mxu0 %v782
          %v882 = vpop.f32.mrb[0].mxu0
          %v883 = vadd.f32 0.0, %v882
          %v884 = vpop.f32.mrb[0].mxu0
          %v885 = vpop.f32.mrb[0].mxu0
          %v886 = vadd.f32 0.0, %v885
          %v887 = vpop.f32.mrb[0].mxu0
          %888 = vdwg.mxu0
          %v889 = vadd.f32 %v775, %v883
          %v890 = vadd.f32 %v776, %v886
          %v891 = vld [vmem:[%s779 + $0x1] sm:$0xff]
          %v892 = vld [vmem:[%s779 + $0x9] sm:$0x3f]
          %v893 = vpack.c.bf16 %v892, %v891
          %s894 = scalar_lea.vmem [#allocation5], 256
          %v895 = vld [vmem:[%s894] sm:$0xf]
          %v896 = vld [vmem:[%s894 + $0x4] sm:$0xf]
          %v897 = vld [vmem:[%s894 + $0x8] sm:$0xf]
          %v898 = vld [vmem:[%s894 + $0xc] sm:$0xf]
          %v899 = vld [vmem:[%s894 + $0x10] sm:$0xf]
          %v900 = vld [vmem:[%s894 + $0x14] sm:$0xf]
          %v901 = vld [vmem:[%s894 + $0x18] sm:$0xf]
          %v902 = vld [vmem:[%s894 + $0x1c] sm:$0xf]
          %v903 = vld [vmem:[%s894 + $0x20] sm:$0xf]
          %v904 = vld [vmem:[%s894 + $0x24] sm:$0xf]
          %v905 = vld [vmem:[%s894 + $0x28] sm:$0xf]
          %v906 = vld [vmem:[%s894 + $0x2c] sm:$0xf]
          %v907 = vld [vmem:[%s894 + $0x30] sm:$0xf]
          %v908 = vld [vmem:[%s894 + $0x34] sm:$0xf]
          %v909 = vld [vmem:[%s894 + $0x38] sm:$0xf]
          %v910 = vld [vmem:[%s894 + $0x3c] sm:$0xf]
          %v927 = vunpack.c.l.b16 %v895
          %v928 = vunpack.c.l.b16 %v896
          %v929 = vunpack.c.l.b16 %v897
          %v930 = vunpack.c.l.b16 %v898
          %v931 = vunpack.c.l.b16 %v899
          %v932 = vunpack.c.l.b16 %v900
          %v933 = vunpack.c.l.b16 %v901
          %v934 = vunpack.c.l.b16 %v902
          %v935 = vunpack.c.l.b16 %v903
          %v936 = vunpack.c.l.b16 %v904
          %v937 = vunpack.c.l.b16 %v905
          %v938 = vunpack.c.l.b16 %v906
          %v939 = vunpack.c.l.b16 %v907
          %v940 = vunpack.c.l.b16 %v908
          %v941 = vunpack.c.l.b16 %v909
          %v942 = vunpack.c.l.b16 %v910
          %v943 = vpack.c.b16 %v928, %v927
          %v944 = vpack.c.b16 %v930, %v929
          %v945 = vpack.c.b16 %v932, %v931
          %v946 = vpack.c.b16 %v934, %v933
          %v947 = vpack.c.b16 %v936, %v935
          %v948 = vpack.c.b16 %v938, %v937
          %v949 = vpack.c.b16 %v940, %v939
          %v950 = vpack.c.b16 %v942, %v941
          %959 = vmatprep.subr.bf16.mxu0 0
          %960 = vmatpush1.bf16.msra.mxu0 %v943
          %961 = vmatprep.subr.bf16.mxu0 0
          %962 = vmatpush1.bf16.msra.mxu0 %v944
          %963 = vmatprep.subr.bf16.mxu0 0
          %964 = vmatpush1.bf16.msra.mxu0 %v945
          %965 = vmatprep.subr.bf16.mxu0 0
          %966 = vmatpush1.bf16.msra.mxu0 %v946
          %967 = vmatprep.subr.bf16.mxu0 0
          %968 = vmatpush1.bf16.msra.mxu0 %v947
          %969 = vmatprep.subr.bf16.mxu0 0
          %970 = vmatpush1.bf16.msra.mxu0 %v948
          %971 = vmatprep.subr.bf16.mxu0 0
          %972 = vmatpush1.bf16.msra.mxu0 %v949
          %973 = vmatprep.subr.bf16.mxu0 0
          %974 = vmatpush1.bf16.msra.mxu0 %v950
          %975 = vmatprep.subr.bf16.mxu0 0
          %976 = vmatpush1.bf16.msra.mxu0 0
          %977 = vmatprep.subr.bf16.mxu0 0
          %978 = vmatpush1.bf16.msra.mxu0 0
          %979 = vmatprep.subr.bf16.mxu0 0
          %980 = vmatpush1.bf16.msra.mxu0 0
          %981 = vmatprep.subr.bf16.mxu0 0
          %982 = vmatpush1.bf16.msra.mxu0 0
          %983 = vmatprep.subr.bf16.mxu0 0
          %984 = vmatpush1.bf16.msra.mxu0 0
          %985 = vmatprep.subr.bf16.mxu0 0
          %986 = vmatpush1.bf16.msra.mxu0 0
          %987 = vmatprep.subr.bf16.mxu0 0
          %988 = vmatpush1.bf16.msra.mxu0 0
          %989 = vmatprep.subr.bf16.mxu0 0
          %990 = vmatpush1.bf16.msra.mxu0 0
          %991 = vmatprep.mubr.bf16.mxu0 0
          %992 = vmatmul.mubr.bf16.gmra.mrb[0].mxu0 %v893
          %v993 = vpop.f32.mrb[0].mxu0
          %v994 = vadd.f32 0.0, %v993
          %v995 = vpop.f32.mrb[0].mxu0
          %v996 = vpop.f32.mrb[0].mxu0
          %v997 = vadd.f32 0.0, %v996
          %v998 = vpop.f32.mrb[0].mxu0
          %999 = vdwg.mxu0
          %v1000 = vadd.f32 %v889, %v994
          %v1001 = vadd.f32 %v890, %v997
          %v1002 = vld [vmem:[%s779 + $0x2] sm:$0xff]
          %v1003 = vld [vmem:[%s779 + $0xa] sm:$0x3f]
          %v1004 = vpack.c.bf16 %v1003, %v1002
          %s1005 = scalar_lea.vmem [#allocation5], 320
          %v1006 = vld [vmem:[%s1005] sm:$0xf]
          %v1007 = vld [vmem:[%s1005 + $0x4] sm:$0xf]
          %v1008 = vld [vmem:[%s1005 + $0x8] sm:$0xf]
          %v1009 = vld [vmem:[%s1005 + $0xc] sm:$0xf]
          %v1010 = vld [vmem:[%s1005 + $0x10] sm:$0xf]
          %v1011 = vld [vmem:[%s1005 + $0x14] sm:$0xf]
          %v1012 = vld [vmem:[%s1005 + $0x18] sm:$0xf]
          %v1013 = vld [vmem:[%s1005 + $0x1c] sm:$0xf]
          %v1014 = vld [vmem:[%s1005 + $0x20] sm:$0xf]
          %v1015 = vld [vmem:[%s1005 + $0x24] sm:$0xf]
          %v1016 = vld [vmem:[%s1005 + $0x28] sm:$0xf]
          %v1017 = vld [vmem:[%s1005 + $0x2c] sm:$0xf]
          %v1018 = vld [vmem:[%s1005 + $0x30] sm:$0xf]
          %v1019 = vld [vmem:[%s1005 + $0x34] sm:$0xf]
          %v1020 = vld [vmem:[%s1005 + $0x38] sm:$0xf]
          %v1021 = vld [vmem:[%s1005 + $0x3c] sm:$0xf]
          %v1038 = vunpack.c.l.b16 %v1006
          %v1039 = vunpack.c.l.b16 %v1007
          %v1040 = vunpack.c.l.b16 %v1008
          %v1041 = vunpack.c.l.b16 %v1009
          %v1042 = vunpack.c.l.b16 %v1010
          %v1043 = vunpack.c.l.b16 %v1011
          %v1044 = vunpack.c.l.b16 %v1012
          %v1045 = vunpack.c.l.b16 %v1013
          %v1046 = vunpack.c.l.b16 %v1014
          %v1047 = vunpack.c.l.b16 %v1015
          %v1048 = vunpack.c.l.b16 %v1016
          %v1049 = vunpack.c.l.b16 %v1017
          %v1050 = vunpack.c.l.b16 %v1018
          %v1051 = vunpack.c.l.b16 %v1019
          %v1052 = vunpack.c.l.b16 %v1020
          %v1053 = vunpack.c.l.b16 %v1021
          %v1054 = vpack.c.b16 %v1039, %v1038
          %v1055 = vpack.c.b16 %v1041, %v1040
          %v1056 = vpack.c.b16 %v1043, %v1042
          %v1057 = vpack.c.b16 %v1045, %v1044
          %v1058 = vpack.c.b16 %v1047, %v1046
          %v1059 = vpack.c.b16 %v1049, %v1048
          %v1060 = vpack.c.b16 %v1051, %v1050
          %v1061 = vpack.c.b16 %v1053, %v1052
          %1070 = vmatprep.subr.bf16.mxu0 0
          %1071 = vmatpush1.bf16.msra.mxu0 %v1054
          %1072 = vmatprep.subr.bf16.mxu0 0
          %1073 = vmatpush1.bf16.msra.mxu0 %v1055
          %1074 = vmatprep.subr.bf16.mxu0 0
          %1075 = vmatpush1.bf16.msra.mxu0 %v1056
          %1076 = vmatprep.subr.bf16.mxu0 0
          %1077 = vmatpush1.bf16.msra.mxu0 %v1057
          %1078 = vmatprep.subr.bf16.mxu0 0
          %1079 = vmatpush1.bf16.msra.mxu0 %v1058
          %1080 = vmatprep.subr.bf16.mxu0 0
          %1081 = vmatpush1.bf16.msra.mxu0 %v1059
          %1082 = vmatprep.subr.bf16.mxu0 0
          %1083 = vmatpush1.bf16.msra.mxu0 %v1060
          %1084 = vmatprep.subr.bf16.mxu0 0
          %1085 = vmatpush1.bf16.msra.mxu0 %v1061
          %1086 = vmatprep.subr.bf16.mxu0 0
          %1087 = vmatpush1.bf16.msra.mxu0 0
          %1088 = vmatprep.subr.bf16.mxu0 0
          %1089 = vmatpush1.bf16.msra.mxu0 0
          %1090 = vmatprep.subr.bf16.mxu0 0
          %1091 = vmatpush1.bf16.msra.mxu0 0
          %1092 = vmatprep.subr.bf16.mxu0 0
          %1093 = vmatpush1.bf16.msra.mxu0 0
          %1094 = vmatprep.subr.bf16.mxu0 0
          %1095 = vmatpush1.bf16.msra.mxu0 0
          %1096 = vmatprep.subr.bf16.mxu0 0
          %1097 = vmatpush1.bf16.msra.mxu0 0
          %1098 = vmatprep.subr.bf16.mxu0 0
          %1099 = vmatpush1.bf16.msra.mxu0 0
          %1100 = vmatprep.subr.bf16.mxu0 0
          %1101 = vmatpush1.bf16.msra.mxu0 0
          %1102 = vmatprep.mubr.bf16.mxu0 0
          %1103 = vmatmul.mubr.bf16.gmra.mrb[0].mxu0 %v1004
          %v1104 = vpop.f32.mrb[0].mxu0
          %v1105 = vadd.f32 0.0, %v1104
          %v1106 = vpop.f32.mrb[0].mxu0
          %v1107 = vpop.f32.mrb[0].mxu0
          %v1108 = vadd.f32 0.0, %v1107
          %v1109 = vpop.f32.mrb[0].mxu0
          %1110 = vdwg.mxu0
          %v1111 = vadd.f32 %v1000, %v1105
          %v1112 = vadd.f32 %v1001, %v1108
          %s1113 = sadd.s32 %s442, 2
          %s1114 = smul.u32 %s1113, 16
          %s1115 = scalar_lea.vmem %s438, %s1114
          %v1116 = vld [vmem:[%s1115] sm:$0xff]
          %v1117 = vld [vmem:[%s1115 + $0x8] sm:$0x3f]
          %v1118 = vpack.c.bf16 %v1117, %v1116
          %s1119 = scalar_lea.vmem [#allocation5], 384
          %v1120 = vld [vmem:[%s1119] sm:$0xf]
          %v1121 = vld [vmem:[%s1119 + $0x4] sm:$0xf]
          %v1122 = vld [vmem:[%s1119 + $0x8] sm:$0xf]
          %v1123 = vld [vmem:[%s1119 + $0xc] sm:$0xf]
          %v1124 = vld [vmem:[%s1119 + $0x10] sm:$0xf]
          %v1125 = vld [vmem:[%s1119 + $0x14] sm:$0xf]
          %v1126 = vld [vmem:[%s1119 + $0x18] sm:$0xf]
          %v1127 = vld [vmem:[%s1119 + $0x1c] sm:$0xf]
          %v1128 = vld [vmem:[%s1119 + $0x20] sm:$0xf]
          %v1129 = vld [vmem:[%s1119 + $0x24] sm:$0xf]
          %v1130 = vld [vmem:[%s1119 + $0x28] sm:$0xf]
          %v1131 = vld [vmem:[%s1119 + $0x2c] sm:$0xf]
          %v1132 = vld [vmem:[%s1119 + $0x30] sm:$0xf]
          %v1133 = vld [vmem:[%s1119 + $0x34] sm:$0xf]
          %v1134 = vld [vmem:[%s1119 + $0x38] sm:$0xf]
          %v1135 = vld [vmem:[%s1119 + $0x3c] sm:$0xf]
          %v1152 = vunpack.c.l.b16 %v1120
          %v1153 = vunpack.c.l.b16 %v1121
          %v1154 = vunpack.c.l.b16 %v1122
          %v1155 = vunpack.c.l.b16 %v1123
          %v1156 = vunpack.c.l.b16 %v1124
          %v1157 = vunpack.c.l.b16 %v1125
          %v1158 = vunpack.c.l.b16 %v1126
          %v1159 = vunpack.c.l.b16 %v1127
          %v1160 = vunpack.c.l.b16 %v1128
          %v1161 = vunpack.c.l.b16 %v1129
          %v1162 = vunpack.c.l.b16 %v1130
          %v1163 = vunpack.c.l.b16 %v1131
          %v1164 = vunpack.c.l.b16 %v1132
          %v1165 = vunpack.c.l.b16 %v1133
          %v1166 = vunpack.c.l.b16 %v1134
          %v1167 = vunpack.c.l.b16 %v1135
          %v1168 = vpack.c.b16 %v1153, %v1152
          %v1169 = vpack.c.b16 %v1155, %v1154
          %v1170 = vpack.c.b16 %v1157, %v1156
          %v1171 = vpack.c.b16 %v1159, %v1158
          %v1172 = vpack.c.b16 %v1161, %v1160
          %v1173 = vpack.c.b16 %v1163, %v1162
          %v1174 = vpack.c.b16 %v1165, %v1164
          %v1175 = vpack.c.b16 %v1167, %v1166
          %1184 = vmatprep.subr.bf16.mxu0 0
          %1185 = vmatpush1.bf16.msra.mxu0 %v1168
          %1186 = vmatprep.subr.bf16.mxu0 0
          %1187 = vmatpush1.bf16.msra.mxu0 %v1169
          %1188 = vmatprep.subr.bf16.mxu0 0
          %1189 = vmatpush1.bf16.msra.mxu0 %v1170
          %1190 = vmatprep.subr.bf16.mxu0 0
          %1191 = vmatpush1.bf16.msra.mxu0 %v1171
          %1192 = vmatprep.subr.bf16.mxu0 0
          %1193 = vmatpush1.bf16.msra.mxu0 %v1172
          %1194 = vmatprep.subr.bf16.mxu0 0
          %1195 = vmatpush1.bf16.msra.mxu0 %v1173
          %1196 = vmatprep.subr.bf16.mxu0 0
          %1197 = vmatpush1.bf16.msra.mxu0 %v1174
          %1198 = vmatprep.subr.bf16.mxu0 0
          %1199 = vmatpush1.bf16.msra.mxu0 %v1175
          %1200 = vmatprep.subr.bf16.mxu0 0
          %1201 = vmatpush1.bf16.msra.mxu0 0
          %1202 = vmatprep.subr.bf16.mxu0 0
          %1203 = vmatpush1.bf16.msra.mxu0 0
          %1204 = vmatprep.subr.bf16.mxu0 0
          %1205 = vmatpush1.bf16.msra.mxu0 0
          %1206 = vmatprep.subr.bf16.mxu0 0
          %1207 = vmatpush1.bf16.msra.mxu0 0
          %1208 = vmatprep.subr.bf16.mxu0 0
          %1209 = vmatpush1.bf16.msra.mxu0 0
          %1210 = vmatprep.subr.bf16.mxu0 0
          %1211 = vmatpush1.bf16.msra.mxu0 0
          %1212 = vmatprep.subr.bf16.mxu0 0
          %1213 = vmatpush1.bf16.msra.mxu0 0
          %1214 = vmatprep.subr.bf16.mxu0 0
          %1215 = vmatpush1.bf16.msra.mxu0 0
          %1216 = vmatprep.mubr.bf16.mxu0 0
          %1217 = vmatmul.mubr.bf16.gmra.mrb[0].mxu0 %v1118
          %v1218 = vpop.f32.mrb[0].mxu0
          %v1219 = vadd.f32 0.0, %v1218
          %v1220 = vpop.f32.mrb[0].mxu0
          %v1221 = vpop.f32.mrb[0].mxu0
          %v1222 = vadd.f32 0.0, %v1221
          %v1223 = vpop.f32.mrb[0].mxu0
          %1224 = vdwg.mxu0
          %v1225 = vadd.f32 %v1111, %v1219
          %v1226 = vadd.f32 %v1112, %v1222
          %v1227 = vld [vmem:[%s1115 + $0x1] sm:$0xff]
          %v1228 = vld [vmem:[%s1115 + $0x9] sm:$0x3f]
          %v1229 = vpack.c.bf16 %v1228, %v1227
          %s1230 = scalar_lea.vmem [#allocation5], 448
          %v1231 = vld [vmem:[%s1230] sm:$0xf]
          %v1232 = vld [vmem:[%s1230 + $0x4] sm:$0xf]
          %v1233 = vld [vmem:[%s1230 + $0x8] sm:$0xf]
          %v1234 = vld [vmem:[%s1230 + $0xc] sm:$0xf]
          %v1235 = vld [vmem:[%s1230 + $0x10] sm:$0xf]
          %v1236 = vld [vmem:[%s1230 + $0x14] sm:$0xf]
          %v1237 = vld [vmem:[%s1230 + $0x18] sm:$0xf]
          %v1238 = vld [vmem:[%s1230 + $0x1c] sm:$0xf]
          %v1239 = vld [vmem:[%s1230 + $0x20] sm:$0xf]
          %v1240 = vld [vmem:[%s1230 + $0x24] sm:$0xf]
          %v1241 = vld [vmem:[%s1230 + $0x28] sm:$0xf]
          %v1242 = vld [vmem:[%s1230 + $0x2c] sm:$0xf]
          %v1243 = vld [vmem:[%s1230 + $0x30] sm:$0xf]
          %v1244 = vld [vmem:[%s1230 + $0x34] sm:$0xf]
          %v1245 = vld [vmem:[%s1230 + $0x38] sm:$0xf]
          %v1246 = vld [vmem:[%s1230 + $0x3c] sm:$0xf]
          %v1263 = vunpack.c.l.b16 %v1231
          %v1264 = vunpack.c.l.b16 %v1232
          %v1265 = vunpack.c.l.b16 %v1233
          %v1266 = vunpack.c.l.b16 %v1234
          %v1267 = vunpack.c.l.b16 %v1235
          %v1268 = vunpack.c.l.b16 %v1236
          %v1269 = vunpack.c.l.b16 %v1237
          %v1270 = vunpack.c.l.b16 %v1238
          %v1271 = vunpack.c.l.b16 %v1239
          %v1272 = vunpack.c.l.b16 %v1240
          %v1273 = vunpack.c.l.b16 %v1241
          %v1274 = vunpack.c.l.b16 %v1242
          %v1275 = vunpack.c.l.b16 %v1243
          %v1276 = vunpack.c.l.b16 %v1244
          %v1277 = vunpack.c.l.b16 %v1245
          %v1278 = vunpack.c.l.b16 %v1246
          %v1279 = vpack.c.b16 %v1264, %v1263
          %v1280 = vpack.c.b16 %v1266, %v1265
          %v1281 = vpack.c.b16 %v1268, %v1267
          %v1282 = vpack.c.b16 %v1270, %v1269
          %v1283 = vpack.c.b16 %v1272, %v1271
          %v1284 = vpack.c.b16 %v1274, %v1273
          %v1285 = vpack.c.b16 %v1276, %v1275
          %v1286 = vpack.c.b16 %v1278, %v1277
          %1295 = vmatprep.subr.bf16.mxu0 0
          %1296 = vmatpush1.bf16.msra.mxu0 %v1279
          %1297 = vmatprep.subr.bf16.mxu0 0
          %1298 = vmatpush1.bf16.msra.mxu0 %v1280
          %1299 = vmatprep.subr.bf16.mxu0 0
          %1300 = vmatpush1.bf16.msra.mxu0 %v1281
          %1301 = vmatprep.subr.bf16.mxu0 0
          %1302 = vmatpush1.bf16.msra.mxu0 %v1282
          %1303 = vmatprep.subr.bf16.mxu0 0
          %1304 = vmatpush1.bf16.msra.mxu0 %v1283
          %1305 = vmatprep.subr.bf16.mxu0 0
          %1306 = vmatpush1.bf16.msra.mxu0 %v1284
          %1307 = vmatprep.subr.bf16.mxu0 0
          %1308 = vmatpush1.bf16.msra.mxu0 %v1285
          %1309 = vmatprep.subr.bf16.mxu0 0
          %1310 = vmatpush1.bf16.msra.mxu0 %v1286
          %1311 = vmatprep.subr.bf16.mxu0 0
          %1312 = vmatpush1.bf16.msra.mxu0 0
          %1313 = vmatprep.subr.bf16.mxu0 0
          %1314 = vmatpush1.bf16.msra.mxu0 0
          %1315 = vmatprep.subr.bf16.mxu0 0
          %1316 = vmatpush1.bf16.msra.mxu0 0
          %1317 = vmatprep.subr.bf16.mxu0 0
          %1318 = vmatpush1.bf16.msra.mxu0 0
          %1319 = vmatprep.subr.bf16.mxu0 0
          %1320 = vmatpush1.bf16.msra.mxu0 0
          %1321 = vmatprep.subr.bf16.mxu0 0
          %1322 = vmatpush1.bf16.msra.mxu0 0
          %1323 = vmatprep.subr.bf16.mxu0 0
          %1324 = vmatpush1.bf16.msra.mxu0 0
          %1325 = vmatprep.subr.bf16.mxu0 0
          %1326 = vmatpush1.bf16.msra.mxu0 0
          %1327 = vmatprep.mubr.bf16.mxu0 0
          %1328 = vmatmul.mubr.bf16.gmra.mrb[0].mxu0 %v1229
          %v1329 = vpop.f32.mrb[0].mxu0
          %v1330 = vadd.f32 0.0, %v1329
          %v1331 = vpop.f32.mrb[0].mxu0
          %v1332 = vpop.f32.mrb[0].mxu0
          %v1333 = vadd.f32 0.0, %v1332
          %v1334 = vpop.f32.mrb[0].mxu0
          %1335 = vdwg.mxu0
          %v1336 = vadd.f32 %v1225, %v1330
          %v1337 = vadd.f32 %v1226, %v1333
          %v1338 = vld [vmem:[%s1115 + $0x2] sm:$0xff]
          %v1339 = vld [vmem:[%s1115 + $0xa] sm:$0x3f]
          %v1340 = vpack.c.bf16 %v1339, %v1338
          %s1341 = scalar_lea.vmem [#allocation5], 512
          %v1342 = vld [vmem:[%s1341] sm:$0xf]
          %v1343 = vld [vmem:[%s1341 + $0x4] sm:$0xf]
          %v1344 = vld [vmem:[%s1341 + $0x8] sm:$0xf]
          %v1345 = vld [vmem:[%s1341 + $0xc] sm:$0xf]
          %v1346 = vld [vmem:[%s1341 + $0x10] sm:$0xf]
          %v1347 = vld [vmem:[%s1341 + $0x14] sm:$0xf]
          %v1348 = vld [vmem:[%s1341 + $0x18] sm:$0xf]
          %v1349 = vld [vmem:[%s1341 + $0x1c] sm:$0xf]
          %v1350 = vld [vmem:[%s1341 + $0x20] sm:$0xf]
          %v1351 = vld [vmem:[%s1341 + $0x24] sm:$0xf]
          %v1352 = vld [vmem:[%s1341 + $0x28] sm:$0xf]
          %v1353 = vld [vmem:[%s1341 + $0x2c] sm:$0xf]
          %v1354 = vld [vmem:[%s1341 + $0x30] sm:$0xf]
          %v1355 = vld [vmem:[%s1341 + $0x34] sm:$0xf]
          %v1356 = vld [vmem:[%s1341 + $0x38] sm:$0xf]
          %v1357 = vld [vmem:[%s1341 + $0x3c] sm:$0xf]
          %v1374 = vunpack.c.l.b16 %v1342
          %v1375 = vunpack.c.l.b16 %v1343
          %v1376 = vunpack.c.l.b16 %v1344
          %v1377 = vunpack.c.l.b16 %v1345
          %v1378 = vunpack.c.l.b16 %v1346
          %v1379 = vunpack.c.l.b16 %v1347
          %v1380 = vunpack.c.l.b16 %v1348
          %v1381 = vunpack.c.l.b16 %v1349
          %v1382 = vunpack.c.l.b16 %v1350
          %v1383 = vunpack.c.l.b16 %v1351
          %v1384 = vunpack.c.l.b16 %v1352
          %v1385 = vunpack.c.l.b16 %v1353
          %v1386 = vunpack.c.l.b16 %v1354
          %v1387 = vunpack.c.l.b16 %v1355
          %v1388 = vunpack.c.l.b16 %v1356
          %v1389 = vunpack.c.l.b16 %v1357
          %v1390 = vpack.c.b16 %v1375, %v1374
          %v1391 = vpack.c.b16 %v1377, %v1376
          %v1392 = vpack.c.b16 %v1379, %v1378
          %v1393 = vpack.c.b16 %v1381, %v1380
          %v1394 = vpack.c.b16 %v1383, %v1382
          %v1395 = vpack.c.b16 %v1385, %v1384
          %v1396 = vpack.c.b16 %v1387, %v1386
          %v1397 = vpack.c.b16 %v1389, %v1388
          %1406 = vmatprep.subr.bf16.mxu0 0
          %1407 = vmatpush1.bf16.msra.mxu0 %v1390
          %1408 = vmatprep.subr.bf16.mxu0 0
          %1409 = vmatpush1.bf16.msra.mxu0 %v1391
          %1410 = vmatprep.subr.bf16.mxu0 0
          %1411 = vmatpush1.bf16.msra.mxu0 %v1392
          %1412 = vmatprep.subr.bf16.mxu0 0
          %1413 = vmatpush1.bf16.msra.mxu0 %v1393
          %1414 = vmatprep.subr.bf16.mxu0 0
          %1415 = vmatpush1.bf16.msra.mxu0 %v1394
          %1416 = vmatprep.subr.bf16.mxu0 0
          %1417 = vmatpush1.bf16.msra.mxu0 %v1395
          %1418 = vmatprep.subr.bf16.mxu0 0
          %1419 = vmatpush1.bf16.msra.mxu0 %v1396
          %1420 = vmatprep.subr.bf16.mxu0 0
          %1421 = vmatpush1.bf16.msra.mxu0 %v1397
          %1422 = vmatprep.subr.bf16.mxu0 0
          %1423 = vmatpush1.bf16.msra.mxu0 0
          %1424 = vmatprep.subr.bf16.mxu0 0
          %1425 = vmatpush1.bf16.msra.mxu0 0
          %1426 = vmatprep.subr.bf16.mxu0 0
          %1427 = vmatpush1.bf16.msra.mxu0 0
          %1428 = vmatprep.subr.bf16.mxu0 0
          %1429 = vmatpush1.bf16.msra.mxu0 0
          %1430 = vmatprep.subr.bf16.mxu0 0
          %1431 = vmatpush1.bf16.msra.mxu0 0
          %1432 = vmatprep.subr.bf16.mxu0 0
          %1433 = vmatpush1.bf16.msra.mxu0 0
          %1434 = vmatprep.subr.bf16.mxu0 0
          %1435 = vmatpush1.bf16.msra.mxu0 0
          %1436 = vmatprep.subr.bf16.mxu0 0
          %1437 = vmatpush1.bf16.msra.mxu0 0
          %1438 = vmatprep.mubr.bf16.mxu0 0
          %1439 = vmatmul.mubr.bf16.gmra.mrb[0].mxu0 %v1340
          %v1440 = vpop.f32.mrb[0].mxu0
          %v1441 = vadd.f32 0.0, %v1440
          %v1442 = vpop.f32.mrb[0].mxu0
          %v1443 = vpop.f32.mrb[0].mxu0
          %v1444 = vadd.f32 0.0, %v1443
          %v1445 = vpop.f32.mrb[0].mxu0
          %1446 = vdwg.mxu0
          %v1447 = vadd.f32 %v1336, %v1441
          %v1448 = vadd.f32 %v1337, %v1444
          %v1450 = vlaneseq
          %v1451 = vshrl.u32 %v1450, 7
          %v1452 = vsub.s32 0, %v1451
          %v1453 = vrot.slane %v440, %v1452
          %v1455 = vadd.f32 %v1447, %v1453
          %v1456 = vadd.f32 %v1448, %v1453
          %v1457 = vmax.f32 %v1455, 0.0
          %v1458 = vmax.f32 %v1456, 0.0
          %s1459 = scalar_lea.vmem [#allocation2], %s447
          %1460 = vst [vmem:[%s1459] sm:$0xff] %v1457
          %1461 = vst [vmem:[%s1459 + $0x8] sm:$0x3f] %v1458
        $region93: #{forward.1} parent=55 // loop_footer
          %s446 = sadd.s32 1, %s442
        $region94: #{forward.1} parent=55 // loop_footer_branch
          %441 = sbr.rel target = $region90
        $region95: #{forward.1} parent=55 // loop_exit
          _
        %v1462 = vld [vmem:[#allocation11] sm:$0x1]
        loop: start=0, step=1, limit=12
        $region96: #{forward.1} parent=55 // loop_pre_header
          _
        $region97: #{forward.1} parent=55 // loop_header
          %s1464 = sphi 0, %s1468
          %p1465 = scmp.ge.s32.totalorder %s1464, 12
        $region98: #{forward.1} parent=55 // loop_header_branch
          %1467 = sbr.rel (%p1465) target = $region102
        $region99: #{forward.1} parent=55 // loop_body
          %s1469 = smul.u32 %s1464, 16
          %s1470 = scalar_lea.vmem [#allocation2], %s1469
          %v1471 = vld [vmem:[%s1470] sm:$0xff]
          %v1472 = vld [vmem:[%s1470 + $0x8] sm:$0xf]
          %v1473 = vpack.c.bf16 %v1472, %v1471
          %v1474 = vld [vmem:[#allocation10] sm:$0xf]
          %v1475 = vld [vmem:[#allocation10 + $0x4] sm:$0xf]
          %v1476 = vld [vmem:[#allocation10 + $0x8] sm:$0xf]
          %v1477 = vld [vmem:[#allocation10 + $0xc] sm:$0xf]
          %v1478 = vld [vmem:[#allocation10 + $0x10] sm:$0xf]
          %v1479 = vld [vmem:[#allocation10 + $0x14] sm:$0xf]
          %v1480 = vld [vmem:[#allocation10 + $0x18] sm:$0xf]
          %v1481 = vld [vmem:[#allocation10 + $0x1c] sm:$0xf]
          %v1482 = vld [vmem:[#allocation10 + $0x20] sm:$0xf]
          %v1483 = vld [vmem:[#allocation10 + $0x24] sm:$0xf]
          %v1484 = vld [vmem:[#allocation10 + $0x28] sm:$0xf]
          %v1485 = vld [vmem:[#allocation10 + $0x2c] sm:$0xf]
          %v1486 = vld [vmem:[#allocation10 + $0x30] sm:$0xf]
          %v1487 = vld [vmem:[#allocation10 + $0x34] sm:$0xf]
          %v1488 = vld [vmem:[#allocation10 + $0x38] sm:$0xf]
          %v1489 = vld [vmem:[#allocation10 + $0x3c] sm:$0xf]
          %v1490 = vld [vmem:[%s1470 + $0x1] sm:$0xff]
          %v1491 = vld [vmem:[%s1470 + $0x9] sm:$0xf]
          %v1492 = vpack.c.bf16 %v1491, %v1490
          %s1493 = scalar_lea.vmem [#allocation10], 64
          %v1494 = vld [vmem:[%s1493] sm:$0xf]
          %v1495 = vld [vmem:[%s1493 + $0x4] sm:$0xf]
          %v1496 = vld [vmem:[%s1493 + $0x8] sm:$0xf]
          %v1497 = vld [vmem:[%s1493 + $0xc] sm:$0xf]
          %v1498 = vld [vmem:[%s1493 + $0x10] sm:$0xf]
          %v1499 = vld [vmem:[%s1493 + $0x14] sm:$0xf]
          %v1500 = vld [vmem:[%s1493 + $0x18] sm:$0xf]
          %v1501 = vld [vmem:[%s1493 + $0x1c] sm:$0xf]
          %v1502 = vld [vmem:[%s1493 + $0x20] sm:$0xf]
          %v1503 = vld [vmem:[%s1493 + $0x24] sm:$0xf]
          %v1504 = vld [vmem:[%s1493 + $0x28] sm:$0xf]
          %v1505 = vld [vmem:[%s1493 + $0x2c] sm:$0xf]
          %v1506 = vld [vmem:[%s1493 + $0x30] sm:$0xf]
          %v1507 = vld [vmem:[%s1493 + $0x34] sm:$0xf]
          %v1508 = vld [vmem:[%s1493 + $0x38] sm:$0xf]
          %v1509 = vld [vmem:[%s1493 + $0x3c] sm:$0xf]
          %v1526 = vunpack.c.l.b16 %v1494
          %v1527 = vunpack.c.l.b16 %v1495
          %v1528 = vunpack.c.l.b16 %v1496
          %v1529 = vunpack.c.l.b16 %v1497
          %v1530 = vunpack.c.l.b16 %v1498
          %v1531 = vunpack.c.l.b16 %v1499
          %v1532 = vunpack.c.l.b16 %v1500
          %v1533 = vunpack.c.l.b16 %v1501
          %v1534 = vunpack.c.l.b16 %v1502
          %v1535 = vunpack.c.l.b16 %v1503
          %v1536 = vunpack.c.l.b16 %v1504
          %v1537 = vunpack.c.l.b16 %v1505
          %v1538 = vunpack.c.l.b16 %v1506
          %v1539 = vunpack.c.l.b16 %v1507
          %v1540 = vunpack.c.l.b16 %v1508
          %v1541 = vunpack.c.l.b16 %v1509
          %v1542 = vpack.c.b16 %v1527, %v1526
          %v1543 = vpack.c.b16 %v1529, %v1528
          %v1544 = vpack.c.b16 %v1531, %v1530
          %v1545 = vpack.c.b16 %v1533, %v1532
          %v1546 = vpack.c.b16 %v1535, %v1534
          %v1547 = vpack.c.b16 %v1537, %v1536
          %v1548 = vpack.c.b16 %v1539, %v1538
          %v1549 = vpack.c.b16 %v1541, %v1540
          %1558 = vmatprep.subr.bf16.mxu0 0
          %1559 = vmatpush1.bf16.msra.mxu0 %v1542
          %1560 = vmatprep.subr.bf16.mxu0 0
          %1561 = vmatpush1.bf16.msra.mxu0 %v1543
          %1562 = vmatprep.subr.bf16.mxu0 0
          %1563 = vmatpush1.bf16.msra.mxu0 %v1544
          %1564 = vmatprep.subr.bf16.mxu0 0
          %1565 = vmatpush1.bf16.msra.mxu0 %v1545
          %1566 = vmatprep.subr.bf16.mxu0 0
          %1567 = vmatpush1.bf16.msra.mxu0 %v1546
          %1568 = vmatprep.subr.bf16.mxu0 0
          %1569 = vmatpush1.bf16.msra.mxu0 %v1547
          %1570 = vmatprep.subr.bf16.mxu0 0
          %1571 = vmatpush1.bf16.msra.mxu0 %v1548
          %1572 = vmatprep.subr.bf16.mxu0 0
          %1573 = vmatpush1.bf16.msra.mxu0 %v1549
          %1574 = vmatprep.subr.bf16.mxu0 0
          %1575 = vmatpush1.bf16.msra.mxu0 0
          %1576 = vmatprep.subr.bf16.mxu0 0
          %1577 = vmatpush1.bf16.msra.mxu0 0
          %1578 = vmatprep.subr.bf16.mxu0 0
          %1579 = vmatpush1.bf16.msra.mxu0 0
          %1580 = vmatprep.subr.bf16.mxu0 0
          %1581 = vmatpush1.bf16.msra.mxu0 0
          %1582 = vmatprep.subr.bf16.mxu0 0
          %1583 = vmatpush1.bf16.msra.mxu0 0
          %1584 = vmatprep.subr.bf16.mxu0 0
          %1585 = vmatpush1.bf16.msra.mxu0 0
          %1586 = vmatprep.subr.bf16.mxu0 0
          %1587 = vmatpush1.bf16.msra.mxu0 0
          %1588 = vmatprep.subr.bf16.mxu0 0
          %1589 = vmatpush1.bf16.msra.mxu0 0
          %1590 = vmatprep.mubr.bf16.mxu0 0
          %1591 = vmatmul.mubr.bf16.gmra.mrb[0].mxu0 %v1492
          %v1592 = vpop.f32.mrb[0].mxu0
          %v1593 = vadd.f32 0.0, %v1592
          %v1594 = vpop.f32.mrb[0].mxu0
          %v1595 = vpop.f32.mrb[0].mxu0
          %v1596 = vadd.f32 0.0, %v1595
          %v1597 = vpop.f32.mrb[0].mxu0
          %1598 = vdwg.mxu0
          %v1615 = vunpack.c.l.b16 %v1474
          %v1616 = vunpack.c.l.b16 %v1475
          %v1617 = vunpack.c.l.b16 %v1476
          %v1618 = vunpack.c.l.b16 %v1477
          %v1619 = vunpack.c.l.b16 %v1478
          %v1620 = vunpack.c.l.b16 %v1479
          %v1621 = vunpack.c.l.b16 %v1480
          %v1622 = vunpack.c.l.b16 %v1481
          %v1623 = vunpack.c.l.b16 %v1482
          %v1624 = vunpack.c.l.b16 %v1483
          %v1625 = vunpack.c.l.b16 %v1484
          %v1626 = vunpack.c.l.b16 %v1485
          %v1627 = vunpack.c.l.b16 %v1486
          %v1628 = vunpack.c.l.b16 %v1487
          %v1629 = vunpack.c.l.b16 %v1488
          %v1630 = vunpack.c.l.b16 %v1489
          %v1631 = vpack.c.b16 %v1616, %v1615
          %v1632 = vpack.c.b16 %v1618, %v1617
          %v1633 = vpack.c.b16 %v1620, %v1619
          %v1634 = vpack.c.b16 %v1622, %v1621
          %v1635 = vpack.c.b16 %v1624, %v1623
          %v1636 = vpack.c.b16 %v1626, %v1625
          %v1637 = vpack.c.b16 %v1628, %v1627
          %v1638 = vpack.c.b16 %v1630, %v1629
          %1647 = vmatprep.subr.bf16.mxu0 0
          %1648 = vmatpush1.bf16.msra.mxu0 %v1631
          %1649 = vmatprep.subr.bf16.mxu0 0
          %1650 = vmatpush1.bf16.msra.mxu0 %v1632
          %1651 = vmatprep.subr.bf16.mxu0 0
          %1652 = vmatpush1.bf16.msra.mxu0 %v1633
          %1653 = vmatprep.subr.bf16.mxu0 0
          %1654 = vmatpush1.bf16.msra.mxu0 %v1634
          %1655 = vmatprep.subr.bf16.mxu0 0
          %1656 = vmatpush1.bf16.msra.mxu0 %v1635
          %1657 = vmatprep.subr.bf16.mxu0 0
          %1658 = vmatpush1.bf16.msra.mxu0 %v1636
          %1659 = vmatprep.subr.bf16.mxu0 0
          %1660 = vmatpush1.bf16.msra.mxu0 %v1637
          %1661 = vmatprep.subr.bf16.mxu0 0
          %1662 = vmatpush1.bf16.msra.mxu0 %v1638
          %1663 = vmatprep.subr.bf16.mxu0 0
          %1664 = vmatpush1.bf16.msra.mxu0 0
          %1665 = vmatprep.subr.bf16.mxu0 0
          %1666 = vmatpush1.bf16.msra.mxu0 0
          %1667 = vmatprep.subr.bf16.mxu0 0
          %1668 = vmatpush1.bf16.msra.mxu0 0
          %1669 = vmatprep.subr.bf16.mxu0 0
          %1670 = vmatpush1.bf16.msra.mxu0 0
          %1671 = vmatprep.subr.bf16.mxu0 0
          %1672 = vmatpush1.bf16.msra.mxu0 0
          %1673 = vmatprep.subr.bf16.mxu0 0
          %1674 = vmatpush1.bf16.msra.mxu0 0
          %1675 = vmatprep.subr.bf16.mxu0 0
          %1676 = vmatpush1.bf16.msra.mxu0 0
          %1677 = vmatprep.subr.bf16.mxu0 0
          %1678 = vmatpush1.bf16.msra.mxu0 0
          %1679 = vmatprep.mubr.bf16.mxu0 0
          %1680 = vmatmul.mubr.bf16.gmra.mrb[0].mxu0 %v1473
          %v1681 = vpop.f32.mrb[0].mxu0
          %v1682 = vadd.f32 %v1593, %v1681
          %v1683 = vpop.f32.mrb[0].mxu0
          %v1684 = vpop.f32.mrb[0].mxu0
          %v1685 = vadd.f32 %v1596, %v1684
          %v1686 = vpop.f32.mrb[0].mxu0
          %1687 = vdwg.mxu0
          %v1688 = vld [vmem:[%s1470 + $0x2] sm:$0xff]
          %v1689 = vld [vmem:[%s1470 + $0xa] sm:$0xf]
          %v1690 = vpack.c.bf16 %v1689, %v1688
          %s1691 = scalar_lea.vmem [#allocation10], 128
          %v1692 = vld [vmem:[%s1691] sm:$0xf]
          %v1693 = vld [vmem:[%s1691 + $0x4] sm:$0xf]
          %v1694 = vld [vmem:[%s1691 + $0x8] sm:$0xf]
          %v1695 = vld [vmem:[%s1691 + $0xc] sm:$0xf]
          %v1696 = vld [vmem:[%s1691 + $0x10] sm:$0xf]
          %v1697 = vld [vmem:[%s1691 + $0x14] sm:$0xf]
          %v1698 = vld [vmem:[%s1691 + $0x18] sm:$0xf]
          %v1699 = vld [vmem:[%s1691 + $0x1c] sm:$0xf]
          %v1700 = vld [vmem:[%s1691 + $0x20] sm:$0xf]
          %v1701 = vld [vmem:[%s1691 + $0x24] sm:$0xf]
          %v1702 = vld [vmem:[%s1691 + $0x28] sm:$0xf]
          %v1703 = vld [vmem:[%s1691 + $0x2c] sm:$0xf]
          %v1704 = vld [vmem:[%s1691 + $0x30] sm:$0xf]
          %v1705 = vld [vmem:[%s1691 + $0x34] sm:$0xf]
          %v1706 = vld [vmem:[%s1691 + $0x38] sm:$0xf]
          %v1707 = vld [vmem:[%s1691 + $0x3c] sm:$0xf]
          %v1724 = vunpack.c.l.b16 %v1692
          %v1725 = vunpack.c.l.b16 %v1693
          %v1726 = vunpack.c.l.b16 %v1694
          %v1727 = vunpack.c.l.b16 %v1695
          %v1728 = vunpack.c.l.b16 %v1696
          %v1729 = vunpack.c.l.b16 %v1697
          %v1730 = vunpack.c.l.b16 %v1698
          %v1731 = vunpack.c.l.b16 %v1699
          %v1732 = vunpack.c.l.b16 %v1700
          %v1733 = vunpack.c.l.b16 %v1701
          %v1734 = vunpack.c.l.b16 %v1702
          %v1735 = vunpack.c.l.b16 %v1703
          %v1736 = vunpack.c.l.b16 %v1704
          %v1737 = vunpack.c.l.b16 %v1705
          %v1738 = vunpack.c.l.b16 %v1706
          %v1739 = vunpack.c.l.b16 %v1707
          %v1740 = vpack.c.b16 %v1725, %v1724
          %v1741 = vpack.c.b16 %v1727, %v1726
          %v1742 = vpack.c.b16 %v1729, %v1728
          %v1743 = vpack.c.b16 %v1731, %v1730
          %v1744 = vpack.c.b16 %v1733, %v1732
          %v1745 = vpack.c.b16 %v1735, %v1734
          %v1746 = vpack.c.b16 %v1737, %v1736
          %v1747 = vpack.c.b16 %v1739, %v1738
          %1756 = vmatprep.subr.bf16.mxu0 0
          %1757 = vmatpush1.bf16.msra.mxu0 %v1740
          %1758 = vmatprep.subr.bf16.mxu0 0
          %1759 = vmatpush1.bf16.msra.mxu0 %v1741
          %1760 = vmatprep.subr.bf16.mxu0 0
          %1761 = vmatpush1.bf16.msra.mxu0 %v1742
          %1762 = vmatprep.subr.bf16.mxu0 0
          %1763 = vmatpush1.bf16.msra.mxu0 %v1743
          %1764 = vmatprep.subr.bf16.mxu0 0
          %1765 = vmatpush1.bf16.msra.mxu0 %v1744
          %1766 = vmatprep.subr.bf16.mxu0 0
          %1767 = vmatpush1.bf16.msra.mxu0 %v1745
          %1768 = vmatprep.subr.bf16.mxu0 0
          %1769 = vmatpush1.bf16.msra.mxu0 %v1746
          %1770 = vmatprep.subr.bf16.mxu0 0
          %1771 = vmatpush1.bf16.msra.mxu0 %v1747
          %1772 = vmatprep.subr.bf16.mxu0 0
          %1773 = vmatpush1.bf16.msra.mxu0 0
          %1774 = vmatprep.subr.bf16.mxu0 0
          %1775 = vmatpush1.bf16.msra.mxu0 0
          %1776 = vmatprep.subr.bf16.mxu0 0
          %1777 = vmatpush1.bf16.msra.mxu0 0
          %1778 = vmatprep.subr.bf16.mxu0 0
          %1779 = vmatpush1.bf16.msra.mxu0 0
          %1780 = vmatprep.subr.bf16.mxu0 0
          %1781 = vmatpush1.bf16.msra.mxu0 0
          %1782 = vmatprep.subr.bf16.mxu0 0
          %1783 = vmatpush1.bf16.msra.mxu0 0
          %1784 = vmatprep.subr.bf16.mxu0 0
          %1785 = vmatpush1.bf16.msra.mxu0 0
          %1786 = vmatprep.subr.bf16.mxu0 0
          %1787 = vmatpush1.bf16.msra.mxu0 0
          %1788 = vmatprep.mubr.bf16.mxu0 0
          %1789 = vmatmul.mubr.bf16.gmra.mrb[0].mxu0 %v1690
          %v1790 = vpop.f32.mrb[0].mxu0
          %v1791 = vadd.f32 0.0, %v1790
          %v1792 = vpop.f32.mrb[0].mxu0
          %v1793 = vpop.f32.mrb[0].mxu0
          %v1794 = vadd.f32 0.0, %v1793
          %v1795 = vpop.f32.mrb[0].mxu0
          %1796 = vdwg.mxu0
          %v1797 = vadd.f32 %v1682, %v1791
          %v1798 = vadd.f32 %v1685, %v1794
          %s1799 = sadd.s32 %s1464, 1
          %s1800 = smul.u32 %s1799, 16
          %s1801 = scalar_lea.vmem [#allocation2], %s1800
          %v1802 = vld [vmem:[%s1801] sm:$0xff]
          %v1803 = vld [vmem:[%s1801 + $0x8] sm:$0xf]
          %v1804 = vpack.c.bf16 %v1803, %v1802
          %s1805 = scalar_lea.vmem [#allocation10], 192
          %v1806 = vld [vmem:[%s1805] sm:$0xf]
          %v1807 = vld [vmem:[%s1805 + $0x4] sm:$0xf]
          %v1808 = vld [vmem:[%s1805 + $0x8] sm:$0xf]
          %v1809 = vld [vmem:[%s1805 + $0xc] sm:$0xf]
          %v1810 = vld [vmem:[%s1805 + $0x10] sm:$0xf]
          %v1811 = vld [vmem:[%s1805 + $0x14] sm:$0xf]
          %v1812 = vld [vmem:[%s1805 + $0x18] sm:$0xf]
          %v1813 = vld [vmem:[%s1805 + $0x1c] sm:$0xf]
          %v1814 = vld [vmem:[%s1805 + $0x20] sm:$0xf]
          %v1815 = vld [vmem:[%s1805 + $0x24] sm:$0xf]
          %v1816 = vld [vmem:[%s1805 + $0x28] sm:$0xf]
          %v1817 = vld [vmem:[%s1805 + $0x2c] sm:$0xf]
          %v1818 = vld [vmem:[%s1805 + $0x30] sm:$0xf]
          %v1819 = vld [vmem:[%s1805 + $0x34] sm:$0xf]
          %v1820 = vld [vmem:[%s1805 + $0x38] sm:$0xf]
          %v1821 = vld [vmem:[%s1805 + $0x3c] sm:$0xf]
          %v1838 = vunpack.c.l.b16 %v1806
          %v1839 = vunpack.c.l.b16 %v1807
          %v1840 = vunpack.c.l.b16 %v1808
          %v1841 = vunpack.c.l.b16 %v1809
          %v1842 = vunpack.c.l.b16 %v1810
          %v1843 = vunpack.c.l.b16 %v1811
          %v1844 = vunpack.c.l.b16 %v1812
          %v1845 = vunpack.c.l.b16 %v1813
          %v1846 = vunpack.c.l.b16 %v1814
          %v1847 = vunpack.c.l.b16 %v1815
          %v1848 = vunpack.c.l.b16 %v1816
          %v1849 = vunpack.c.l.b16 %v1817
          %v1850 = vunpack.c.l.b16 %v1818
          %v1851 = vunpack.c.l.b16 %v1819
          %v1852 = vunpack.c.l.b16 %v1820
          %v1853 = vunpack.c.l.b16 %v1821
          %v1854 = vpack.c.b16 %v1839, %v1838
          %v1855 = vpack.c.b16 %v1841, %v1840
          %v1856 = vpack.c.b16 %v1843, %v1842
          %v1857 = vpack.c.b16 %v1845, %v1844
          %v1858 = vpack.c.b16 %v1847, %v1846
          %v1859 = vpack.c.b16 %v1849, %v1848
          %v1860 = vpack.c.b16 %v1851, %v1850
          %v1861 = vpack.c.b16 %v1853, %v1852
          %1870 = vmatprep.subr.bf16.mxu0 0
          %1871 = vmatpush1.bf16.msra.mxu0 %v1854
          %1872 = vmatprep.subr.bf16.mxu0 0
          %1873 = vmatpush1.bf16.msra.mxu0 %v1855
          %1874 = vmatprep.subr.bf16.mxu0 0
          %1875 = vmatpush1.bf16.msra.mxu0 %v1856
          %1876 = vmatprep.subr.bf16.mxu0 0
          %1877 = vmatpush1.bf16.msra.mxu0 %v1857
          %1878 = vmatprep.subr.bf16.mxu0 0
          %1879 = vmatpush1.bf16.msra.mxu0 %v1858
          %1880 = vmatprep.subr.bf16.mxu0 0
          %1881 = vmatpush1.bf16.msra.mxu0 %v1859
          %1882 = vmatprep.subr.bf16.mxu0 0
          %1883 = vmatpush1.bf16.msra.mxu0 %v1860
          %1884 = vmatprep.subr.bf16.mxu0 0
          %1885 = vmatpush1.bf16.msra.mxu0 %v1861
          %1886 = vmatprep.subr.bf16.mxu0 0
          %1887 = vmatpush1.bf16.msra.mxu0 0
          %1888 = vmatprep.subr.bf16.mxu0 0
          %1889 = vmatpush1.bf16.msra.mxu0 0
          %1890 = vmatprep.subr.bf16.mxu0 0
          %1891 = vmatpush1.bf16.msra.mxu0 0
          %1892 = vmatprep.subr.bf16.mxu0 0
          %1893 = vmatpush1.bf16.msra.mxu0 0
          %1894 = vmatprep.subr.bf16.mxu0 0
          %1895 = vmatpush1.bf16.msra.mxu0 0
          %1896 = vmatprep.subr.bf16.mxu0 0
          %1897 = vmatpush1.bf16.msra.mxu0 0
          %1898 = vmatprep.subr.bf16.mxu0 0
          %1899 = vmatpush1.bf16.msra.mxu0 0
          %1900 = vmatprep.subr.bf16.mxu0 0
          %1901 = vmatpush1.bf16.msra.mxu0 0
          %1902 = vmatprep.mubr.bf16.mxu0 0
          %1903 = vmatmul.mubr.bf16.gmra.mrb[0].mxu0 %v1804
          %v1904 = vpop.f32.mrb[0].mxu0
          %v1905 = vadd.f32 0.0, %v1904
          %v1906 = vpop.f32.mrb[0].mxu0
          %v1907 = vpop.f32.mrb[0].mxu0
          %v1908 = vadd.f32 0.0, %v1907
          %v1909 = vpop.f32.mrb[0].mxu0
          %1910 = vdwg.mxu0
          %v1911 = vadd.f32 %v1797, %v1905
          %v1912 = vadd.f32 %v1798, %v1908
          %v1913 = vld [vmem:[%s1801 + $0x1] sm:$0xff]
          %v1914 = vld [vmem:[%s1801 + $0x9] sm:$0xf]
          %v1915 = vpack.c.bf16 %v1914, %v1913
          %s1916 = scalar_lea.vmem [#allocation10], 256
          %v1917 = vld [vmem:[%s1916] sm:$0xf]
          %v1918 = vld [vmem:[%s1916 + $0x4] sm:$0xf]
          %v1919 = vld [vmem:[%s1916 + $0x8] sm:$0xf]
          %v1920 = vld [vmem:[%s1916 + $0xc] sm:$0xf]
          %v1921 = vld [vmem:[%s1916 + $0x10] sm:$0xf]
          %v1922 = vld [vmem:[%s1916 + $0x14] sm:$0xf]
          %v1923 = vld [vmem:[%s1916 + $0x18] sm:$0xf]
          %v1924 = vld [vmem:[%s1916 + $0x1c] sm:$0xf]
          %v1925 = vld [vmem:[%s1916 + $0x20] sm:$0xf]
          %v1926 = vld [vmem:[%s1916 + $0x24] sm:$0xf]
          %v1927 = vld [vmem:[%s1916 + $0x28] sm:$0xf]
          %v1928 = vld [vmem:[%s1916 + $0x2c] sm:$0xf]
          %v1929 = vld [vmem:[%s1916 + $0x30] sm:$0xf]
          %v1930 = vld [vmem:[%s1916 + $0x34] sm:$0xf]
          %v1931 = vld [vmem:[%s1916 + $0x38] sm:$0xf]
          %v1932 = vld [vmem:[%s1916 + $0x3c] sm:$0xf]
          %v1949 = vunpack.c.l.b16 %v1917
          %v1950 = vunpack.c.l.b16 %v1918
          %v1951 = vunpack.c.l.b16 %v1919
          %v1952 = vunpack.c.l.b16 %v1920
          %v1953 = vunpack.c.l.b16 %v1921
          %v1954 = vunpack.c.l.b16 %v1922
          %v1955 = vunpack.c.l.b16 %v1923
          %v1956 = vunpack.c.l.b16 %v1924
          %v1957 = vunpack.c.l.b16 %v1925
          %v1958 = vunpack.c.l.b16 %v1926
          %v1959 = vunpack.c.l.b16 %v1927
          %v1960 = vunpack.c.l.b16 %v1928
          %v1961 = vunpack.c.l.b16 %v1929
          %v1962 = vunpack.c.l.b16 %v1930
          %v1963 = vunpack.c.l.b16 %v1931
          %v1964 = vunpack.c.l.b16 %v1932
          %v1965 = vpack.c.b16 %v1950, %v1949
          %v1966 = vpack.c.b16 %v1952, %v1951
          %v1967 = vpack.c.b16 %v1954, %v1953
          %v1968 = vpack.c.b16 %v1956, %v1955
          %v1969 = vpack.c.b16 %v1958, %v1957
          %v1970 = vpack.c.b16 %v1960, %v1959
          %v1971 = vpack.c.b16 %v1962, %v1961
          %v1972 = vpack.c.b16 %v1964, %v1963
          %1981 = vmatprep.subr.bf16.mxu0 0
          %1982 = vmatpush1.bf16.msra.mxu0 %v1965
          %1983 = vmatprep.subr.bf16.mxu0 0
          %1984 = vmatpush1.bf16.msra.mxu0 %v1966
          %1985 = vmatprep.subr.bf16.mxu0 0
          %1986 = vmatpush1.bf16.msra.mxu0 %v1967
          %1987 = vmatprep.subr.bf16.mxu0 0
          %1988 = vmatpush1.bf16.msra.mxu0 %v1968
          %1989 = vmatprep.subr.bf16.mxu0 0
          %1990 = vmatpush1.bf16.msra.mxu0 %v1969
          %1991 = vmatprep.subr.bf16.mxu0 0
          %1992 = vmatpush1.bf16.msra.mxu0 %v1970
          %1993 = vmatprep.subr.bf16.mxu0 0
          %1994 = vmatpush1.bf16.msra.mxu0 %v1971
          %1995 = vmatprep.subr.bf16.mxu0 0
          %1996 = vmatpush1.bf16.msra.mxu0 %v1972
          %1997 = vmatprep.subr.bf16.mxu0 0
          %1998 = vmatpush1.bf16.msra.mxu0 0
          %1999 = vmatprep.subr.bf16.mxu0 0
          %2000 = vmatpush1.bf16.msra.mxu0 0
          %2001 = vmatprep.subr.bf16.mxu0 0
          %2002 = vmatpush1.bf16.msra.mxu0 0
          %2003 = vmatprep.subr.bf16.mxu0 0
          %2004 = vmatpush1.bf16.msra.mxu0 0
          %2005 = vmatprep.subr.bf16.mxu0 0
          %2006 = vmatpush1.bf16.msra.mxu0 0
          %2007 = vmatprep.subr.bf16.mxu0 0
          %2008 = vmatpush1.bf16.msra.mxu0 0
          %2009 = vmatprep.subr.bf16.mxu0 0
          %2010 = vmatpush1.bf16.msra.mxu0 0
          %2011 = vmatprep.subr.bf16.mxu0 0
          %2012 = vmatpush1.bf16.msra.mxu0 0
          %2013 = vmatprep.mubr.bf16.mxu0 0
          %2014 = vmatmul.mubr.bf16.gmra.mrb[0].mxu0 %v1915
          %v2015 = vpop.f32.mrb[0].mxu0
          %v2016 = vadd.f32 0.0, %v2015
          %v2017 = vpop.f32.mrb[0].mxu0
          %v2018 = vpop.f32.mrb[0].mxu0
          %v2019 = vadd.f32 0.0, %v2018
          %v2020 = vpop.f32.mrb[0].mxu0
          %2021 = vdwg.mxu0
          %v2022 = vadd.f32 %v1911, %v2016
          %v2023 = vadd.f32 %v1912, %v2019
          %v2024 = vld [vmem:[%s1801 + $0x2] sm:$0xff]
          %v2025 = vld [vmem:[%s1801 + $0xa] sm:$0xf]
          %v2026 = vpack.c.bf16 %v2025, %v2024
          %s2027 = scalar_lea.vmem [#allocation10], 320
          %v2028 = vld [vmem:[%s2027] sm:$0xf]
          %v2029 = vld [vmem:[%s2027 + $0x4] sm:$0xf]
          %v2030 = vld [vmem:[%s2027 + $0x8] sm:$0xf]
          %v2031 = vld [vmem:[%s2027 + $0xc] sm:$0xf]
          %v2032 = vld [vmem:[%s2027 + $0x10] sm:$0xf]
          %v2033 = vld [vmem:[%s2027 + $0x14] sm:$0xf]
          %v2034 = vld [vmem:[%s2027 + $0x18] sm:$0xf]
          %v2035 = vld [vmem:[%s2027 + $0x1c] sm:$0xf]
          %v2036 = vld [vmem:[%s2027 + $0x20] sm:$0xf]
          %v2037 = vld [vmem:[%s2027 + $0x24] sm:$0xf]
          %v2038 = vld [vmem:[%s2027 + $0x28] sm:$0xf]
          %v2039 = vld [vmem:[%s2027 + $0x2c] sm:$0xf]
          %v2040 = vld [vmem:[%s2027 + $0x30] sm:$0xf]
          %v2041 = vld [vmem:[%s2027 + $0x34] sm:$0xf]
          %v2042 = vld [vmem:[%s2027 + $0x38] sm:$0xf]
          %v2043 = vld [vmem:[%s2027 + $0x3c] sm:$0xf]
          %v2060 = vunpack.c.l.b16 %v2028
          %v2061 = vunpack.c.l.b16 %v2029
          %v2062 = vunpack.c.l.b16 %v2030
          %v2063 = vunpack.c.l.b16 %v2031
          %v2064 = vunpack.c.l.b16 %v2032
          %v2065 = vunpack.c.l.b16 %v2033
          %v2066 = vunpack.c.l.b16 %v2034
          %v2067 = vunpack.c.l.b16 %v2035
          %v2068 = vunpack.c.l.b16 %v2036
          %v2069 = vunpack.c.l.b16 %v2037
          %v2070 = vunpack.c.l.b16 %v2038
          %v2071 = vunpack.c.l.b16 %v2039
          %v2072 = vunpack.c.l.b16 %v2040
          %v2073 = vunpack.c.l.b16 %v2041
          %v2074 = vunpack.c.l.b16 %v2042
          %v2075 = vunpack.c.l.b16 %v2043
          %v2076 = vpack.c.b16 %v2061, %v2060
          %v2077 = vpack.c.b16 %v2063, %v2062
          %v2078 = vpack.c.b16 %v2065, %v2064
          %v2079 = vpack.c.b16 %v2067, %v2066
          %v2080 = vpack.c.b16 %v2069, %v2068
          %v2081 = vpack.c.b16 %v2071, %v2070
          %v2082 = vpack.c.b16 %v2073, %v2072
          %v2083 = vpack.c.b16 %v2075, %v2074
          %2092 = vmatprep.subr.bf16.mxu0 0
          %2093 = vmatpush1.bf16.msra.mxu0 %v2076
          %2094 = vmatprep.subr.bf16.mxu0 0
          %2095 = vmatpush1.bf16.msra.mxu0 %v2077
          %2096 = vmatprep.subr.bf16.mxu0 0
          %2097 = vmatpush1.bf16.msra.mxu0 %v2078
          %2098 = vmatprep.subr.bf16.mxu0 0
          %2099 = vmatpush1.bf16.msra.mxu0 %v2079
          %2100 = vmatprep.subr.bf16.mxu0 0
          %2101 = vmatpush1.bf16.msra.mxu0 %v2080
          %2102 = vmatprep.subr.bf16.mxu0 0
          %2103 = vmatpush1.bf16.msra.mxu0 %v2081
          %2104 = vmatprep.subr.bf16.mxu0 0
          %2105 = vmatpush1.bf16.msra.mxu0 %v2082
          %2106 = vmatprep.subr.bf16.mxu0 0
          %2107 = vmatpush1.bf16.msra.mxu0 %v2083
          %2108 = vmatprep.subr.bf16.mxu0 0
          %2109 = vmatpush1.bf16.msra.mxu0 0
          %2110 = vmatprep.subr.bf16.mxu0 0
          %2111 = vmatpush1.bf16.msra.mxu0 0
          %2112 = vmatprep.subr.bf16.mxu0 0
          %2113 = vmatpush1.bf16.msra.mxu0 0
          %2114 = vmatprep.subr.bf16.mxu0 0
          %2115 = vmatpush1.bf16.msra.mxu0 0
          %2116 = vmatprep.subr.bf16.mxu0 0
          %2117 = vmatpush1.bf16.msra.mxu0 0
          %2118 = vmatprep.subr.bf16.mxu0 0
          %2119 = vmatpush1.bf16.msra.mxu0 0
          %2120 = vmatprep.subr.bf16.mxu0 0
          %2121 = vmatpush1.bf16.msra.mxu0 0
          %2122 = vmatprep.subr.bf16.mxu0 0
          %2123 = vmatpush1.bf16.msra.mxu0 0
          %2124 = vmatprep.mubr.bf16.mxu0 0
          %2125 = vmatmul.mubr.bf16.gmra.mrb[0].mxu0 %v2026
          %v2126 = vpop.f32.mrb[0].mxu0
          %v2127 = vadd.f32 0.0, %v2126
          %v2128 = vpop.f32.mrb[0].mxu0
          %v2129 = vpop.f32.mrb[0].mxu0
          %v2130 = vadd.f32 0.0, %v2129
          %v2131 = vpop.f32.mrb[0].mxu0
          %2132 = vdwg.mxu0
          %v2133 = vadd.f32 %v2022, %v2127
          %v2134 = vadd.f32 %v2023, %v2130
          %s2135 = sadd.s32 %s1464, 2
          %s2136 = smul.u32 %s2135, 16
          %s2137 = scalar_lea.vmem [#allocation2], %s2136
          %v2138 = vld [vmem:[%s2137] sm:$0xff]
          %v2139 = vld [vmem:[%s2137 + $0x8] sm:$0xf]
          %v2140 = vpack.c.bf16 %v2139, %v2138
          %s2141 = scalar_lea.vmem [#allocation10], 384
          %v2142 = vld [vmem:[%s2141] sm:$0xf]
          %v2143 = vld [vmem:[%s2141 + $0x4] sm:$0xf]
          %v2144 = vld [vmem:[%s2141 + $0x8] sm:$0xf]
          %v2145 = vld [vmem:[%s2141 + $0xc] sm:$0xf]
          %v2146 = vld [vmem:[%s2141 + $0x10] sm:$0xf]
          %v2147 = vld [vmem:[%s2141 + $0x14] sm:$0xf]
          %v2148 = vld [vmem:[%s2141 + $0x18] sm:$0xf]
          %v2149 = vld [vmem:[%s2141 + $0x1c] sm:$0xf]
          %v2150 = vld [vmem:[%s2141 + $0x20] sm:$0xf]
          %v2151 = vld [vmem:[%s2141 + $0x24] sm:$0xf]
          %v2152 = vld [vmem:[%s2141 + $0x28] sm:$0xf]
          %v2153 = vld [vmem:[%s2141 + $0x2c] sm:$0xf]
          %v2154 = vld [vmem:[%s2141 + $0x30] sm:$0xf]
          %v2155 = vld [vmem:[%s2141 + $0x34] sm:$0xf]
          %v2156 = vld [vmem:[%s2141 + $0x38] sm:$0xf]
          %v2157 = vld [vmem:[%s2141 + $0x3c] sm:$0xf]
          %v2174 = vunpack.c.l.b16 %v2142
          %v2175 = vunpack.c.l.b16 %v2143
          %v2176 = vunpack.c.l.b16 %v2144
          %v2177 = vunpack.c.l.b16 %v2145
          %v2178 = vunpack.c.l.b16 %v2146
          %v2179 = vunpack.c.l.b16 %v2147
          %v2180 = vunpack.c.l.b16 %v2148
          %v2181 = vunpack.c.l.b16 %v2149
          %v2182 = vunpack.c.l.b16 %v2150
          %v2183 = vunpack.c.l.b16 %v2151
          %v2184 = vunpack.c.l.b16 %v2152
          %v2185 = vunpack.c.l.b16 %v2153
          %v2186 = vunpack.c.l.b16 %v2154
          %v2187 = vunpack.c.l.b16 %v2155
          %v2188 = vunpack.c.l.b16 %v2156
          %v2189 = vunpack.c.l.b16 %v2157
          %v2190 = vpack.c.b16 %v2175, %v2174
          %v2191 = vpack.c.b16 %v2177, %v2176
          %v2192 = vpack.c.b16 %v2179, %v2178
          %v2193 = vpack.c.b16 %v2181, %v2180
          %v2194 = vpack.c.b16 %v2183, %v2182
          %v2195 = vpack.c.b16 %v2185, %v2184
          %v2196 = vpack.c.b16 %v2187, %v2186
          %v2197 = vpack.c.b16 %v2189, %v2188
          %2206 = vmatprep.subr.bf16.mxu0 0
          %2207 = vmatpush1.bf16.msra.mxu0 %v2190
          %2208 = vmatprep.subr.bf16.mxu0 0
          %2209 = vmatpush1.bf16.msra.mxu0 %v2191
          %2210 = vmatprep.subr.bf16.mxu0 0
          %2211 = vmatpush1.bf16.msra.mxu0 %v2192
          %2212 = vmatprep.subr.bf16.mxu0 0
          %2213 = vmatpush1.bf16.msra.mxu0 %v2193
          %2214 = vmatprep.subr.bf16.mxu0 0
          %2215 = vmatpush1.bf16.msra.mxu0 %v2194
          %2216 = vmatprep.subr.bf16.mxu0 0
          %2217 = vmatpush1.bf16.msra.mxu0 %v2195
          %2218 = vmatprep.subr.bf16.mxu0 0
          %2219 = vmatpush1.bf16.msra.mxu0 %v2196
          %2220 = vmatprep.subr.bf16.mxu0 0
          %2221 = vmatpush1.bf16.msra.mxu0 %v2197
          %2222 = vmatprep.subr.bf16.mxu0 0
          %2223 = vmatpush1.bf16.msra.mxu0 0
          %2224 = vmatprep.subr.bf16.mxu0 0
          %2225 = vmatpush1.bf16.msra.mxu0 0
          %2226 = vmatprep.subr.bf16.mxu0 0
          %2227 = vmatpush1.bf16.msra.mxu0 0
          %2228 = vmatprep.subr.bf16.mxu0 0
          %2229 = vmatpush1.bf16.msra.mxu0 0
          %2230 = vmatprep.subr.bf16.mxu0 0
          %2231 = vmatpush1.bf16.msra.mxu0 0
          %2232 = vmatprep.subr.bf16.mxu0 0
          %2233 = vmatpush1.bf16.msra.mxu0 0
          %2234 = vmatprep.subr.bf16.mxu0 0
          %2235 = vmatpush1.bf16.msra.mxu0 0
          %2236 = vmatprep.subr.bf16.mxu0 0
          %2237 = vmatpush1.bf16.msra.mxu0 0
          %2238 = vmatprep.mubr.bf16.mxu0 0
          %2239 = vmatmul.mubr.bf16.gmra.mrb[0].mxu0 %v2140
          %v2240 = vpop.f32.mrb[0].mxu0
          %v2241 = vadd.f32 0.0, %v2240
          %v2242 = vpop.f32.mrb[0].mxu0
          %v2243 = vpop.f32.mrb[0].mxu0
          %v2244 = vadd.f32 0.0, %v2243
          %v2245 = vpop.f32.mrb[0].mxu0
          %2246 = vdwg.mxu0
          %v2247 = vadd.f32 %v2133, %v2241
          %v2248 = vadd.f32 %v2134, %v2244
          %v2249 = vld [vmem:[%s2137 + $0x1] sm:$0xff]
          %v2250 = vld [vmem:[%s2137 + $0x9] sm:$0xf]
          %v2251 = vpack.c.bf16 %v2250, %v2249
          %s2252 = scalar_lea.vmem [#allocation10], 448
          %v2253 = vld [vmem:[%s2252] sm:$0xf]
          %v2254 = vld [vmem:[%s2252 + $0x4] sm:$0xf]
          %v2255 = vld [vmem:[%s2252 + $0x8] sm:$0xf]
          %v2256 = vld [vmem:[%s2252 + $0xc] sm:$0xf]
          %v2257 = vld [vmem:[%s2252 + $0x10] sm:$0xf]
          %v2258 = vld [vmem:[%s2252 + $0x14] sm:$0xf]
          %v2259 = vld [vmem:[%s2252 + $0x18] sm:$0xf]
          %v2260 = vld [vmem:[%s2252 + $0x1c] sm:$0xf]
          %v2261 = vld [vmem:[%s2252 + $0x20] sm:$0xf]
          %v2262 = vld [vmem:[%s2252 + $0x24] sm:$0xf]
          %v2263 = vld [vmem:[%s2252 + $0x28] sm:$0xf]
          %v2264 = vld [vmem:[%s2252 + $0x2c] sm:$0xf]
          %v2265 = vld [vmem:[%s2252 + $0x30] sm:$0xf]
          %v2266 = vld [vmem:[%s2252 + $0x34] sm:$0xf]
          %v2267 = vld [vmem:[%s2252 + $0x38] sm:$0xf]
          %v2268 = vld [vmem:[%s2252 + $0x3c] sm:$0xf]
          %v2285 = vunpack.c.l.b16 %v2253
          %v2286 = vunpack.c.l.b16 %v2254
          %v2287 = vunpack.c.l.b16 %v2255
          %v2288 = vunpack.c.l.b16 %v2256
          %v2289 = vunpack.c.l.b16 %v2257
          %v2290 = vunpack.c.l.b16 %v2258
          %v2291 = vunpack.c.l.b16 %v2259
          %v2292 = vunpack.c.l.b16 %v2260
          %v2293 = vunpack.c.l.b16 %v2261
          %v2294 = vunpack.c.l.b16 %v2262
          %v2295 = vunpack.c.l.b16 %v2263
          %v2296 = vunpack.c.l.b16 %v2264
          %v2297 = vunpack.c.l.b16 %v2265
          %v2298 = vunpack.c.l.b16 %v2266
          %v2299 = vunpack.c.l.b16 %v2267
          %v2300 = vunpack.c.l.b16 %v2268
          %v2301 = vpack.c.b16 %v2286, %v2285
          %v2302 = vpack.c.b16 %v2288, %v2287
          %v2303 = vpack.c.b16 %v2290, %v2289
          %v2304 = vpack.c.b16 %v2292, %v2291
          %v2305 = vpack.c.b16 %v2294, %v2293
          %v2306 = vpack.c.b16 %v2296, %v2295
          %v2307 = vpack.c.b16 %v2298, %v2297
          %v2308 = vpack.c.b16 %v2300, %v2299
          %2317 = vmatprep.subr.bf16.mxu0 0
          %2318 = vmatpush1.bf16.msra.mxu0 %v2301
          %2319 = vmatprep.subr.bf16.mxu0 0
          %2320 = vmatpush1.bf16.msra.mxu0 %v2302
          %2321 = vmatprep.subr.bf16.mxu0 0
          %2322 = vmatpush1.bf16.msra.mxu0 %v2303
          %2323 = vmatprep.subr.bf16.mxu0 0
          %2324 = vmatpush1.bf16.msra.mxu0 %v2304
          %2325 = vmatprep.subr.bf16.mxu0 0
          %2326 = vmatpush1.bf16.msra.mxu0 %v2305
          %2327 = vmatprep.subr.bf16.mxu0 0
          %2328 = vmatpush1.bf16.msra.mxu0 %v2306
          %2329 = vmatprep.subr.bf16.mxu0 0
          %2330 = vmatpush1.bf16.msra.mxu0 %v2307
          %2331 = vmatprep.subr.bf16.mxu0 0
          %2332 = vmatpush1.bf16.msra.mxu0 %v2308
          %2333 = vmatprep.subr.bf16.mxu0 0
          %2334 = vmatpush1.bf16.msra.mxu0 0
          %2335 = vmatprep.subr.bf16.mxu0 0
          %2336 = vmatpush1.bf16.msra.mxu0 0
          %2337 = vmatprep.subr.bf16.mxu0 0
          %2338 = vmatpush1.bf16.msra.mxu0 0
          %2339 = vmatprep.subr.bf16.mxu0 0
          %2340 = vmatpush1.bf16.msra.mxu0 0
          %2341 = vmatprep.subr.bf16.mxu0 0
          %2342 = vmatpush1.bf16.msra.mxu0 0
          %2343 = vmatprep.subr.bf16.mxu0 0
          %2344 = vmatpush1.bf16.msra.mxu0 0
          %2345 = vmatprep.subr.bf16.mxu0 0
          %2346 = vmatpush1.bf16.msra.mxu0 0
          %2347 = vmatprep.subr.bf16.mxu0 0
          %2348 = vmatpush1.bf16.msra.mxu0 0
          %2349 = vmatprep.mubr.bf16.mxu0 0
          %2350 = vmatmul.mubr.bf16.gmra.mrb[0].mxu0 %v2251
          %v2351 = vpop.f32.mrb[0].mxu0
          %v2352 = vadd.f32 0.0, %v2351
          %v2353 = vpop.f32.mrb[0].mxu0
          %v2354 = vpop.f32.mrb[0].mxu0
          %v2355 = vadd.f32 0.0, %v2354
          %v2356 = vpop.f32.mrb[0].mxu0
          %2357 = vdwg.mxu0
          %v2358 = vadd.f32 %v2247, %v2352
          %v2359 = vadd.f32 %v2248, %v2355
          %v2360 = vld [vmem:[%s2137 + $0x2] sm:$0xff]
          %v2361 = vld [vmem:[%s2137 + $0xa] sm:$0xf]
          %v2362 = vpack.c.bf16 %v2361, %v2360
          %s2363 = scalar_lea.vmem [#allocation10], 512
          %v2364 = vld [vmem:[%s2363] sm:$0xf]
          %v2365 = vld [vmem:[%s2363 + $0x4] sm:$0xf]
          %v2366 = vld [vmem:[%s2363 + $0x8] sm:$0xf]
          %v2367 = vld [vmem:[%s2363 + $0xc] sm:$0xf]
          %v2368 = vld [vmem:[%s2363 + $0x10] sm:$0xf]
          %v2369 = vld [vmem:[%s2363 + $0x14] sm:$0xf]
          %v2370 = vld [vmem:[%s2363 + $0x18] sm:$0xf]
          %v2371 = vld [vmem:[%s2363 + $0x1c] sm:$0xf]
          %v2372 = vld [vmem:[%s2363 + $0x20] sm:$0xf]
          %v2373 = vld [vmem:[%s2363 + $0x24] sm:$0xf]
          %v2374 = vld [vmem:[%s2363 + $0x28] sm:$0xf]
          %v2375 = vld [vmem:[%s2363 + $0x2c] sm:$0xf]
          %v2376 = vld [vmem:[%s2363 + $0x30] sm:$0xf]
          %v2377 = vld [vmem:[%s2363 + $0x34] sm:$0xf]
          %v2378 = vld [vmem:[%s2363 + $0x38] sm:$0xf]
          %v2379 = vld [vmem:[%s2363 + $0x3c] sm:$0xf]
          %v2396 = vunpack.c.l.b16 %v2364
          %v2397 = vunpack.c.l.b16 %v2365
          %v2398 = vunpack.c.l.b16 %v2366
          %v2399 = vunpack.c.l.b16 %v2367
          %v2400 = vunpack.c.l.b16 %v2368
          %v2401 = vunpack.c.l.b16 %v2369
          %v2402 = vunpack.c.l.b16 %v2370
          %v2403 = vunpack.c.l.b16 %v2371
          %v2404 = vunpack.c.l.b16 %v2372
          %v2405 = vunpack.c.l.b16 %v2373
          %v2406 = vunpack.c.l.b16 %v2374
          %v2407 = vunpack.c.l.b16 %v2375
          %v2408 = vunpack.c.l.b16 %v2376
          %v2409 = vunpack.c.l.b16 %v2377
          %v2410 = vunpack.c.l.b16 %v2378
          %v2411 = vunpack.c.l.b16 %v2379
          %v2412 = vpack.c.b16 %v2397, %v2396
          %v2413 = vpack.c.b16 %v2399, %v2398
          %v2414 = vpack.c.b16 %v2401, %v2400
          %v2415 = vpack.c.b16 %v2403, %v2402
          %v2416 = vpack.c.b16 %v2405, %v2404
          %v2417 = vpack.c.b16 %v2407, %v2406
          %v2418 = vpack.c.b16 %v2409, %v2408
          %v2419 = vpack.c.b16 %v2411, %v2410
          %2428 = vmatprep.subr.bf16.mxu0 0
          %2429 = vmatpush1.bf16.msra.mxu0 %v2412
          %2430 = vmatprep.subr.bf16.mxu0 0
          %2431 = vmatpush1.bf16.msra.mxu0 %v2413
          %2432 = vmatprep.subr.bf16.mxu0 0
          %2433 = vmatpush1.bf16.msra.mxu0 %v2414
          %2434 = vmatprep.subr.bf16.mxu0 0
          %2435 = vmatpush1.bf16.msra.mxu0 %v2415
          %2436 = vmatprep.subr.bf16.mxu0 0
          %2437 = vmatpush1.bf16.msra.mxu0 %v2416
          %2438 = vmatprep.subr.bf16.mxu0 0
          %2439 = vmatpush1.bf16.msra.mxu0 %v2417
          %2440 = vmatprep.subr.bf16.mxu0 0
          %2441 = vmatpush1.bf16.msra.mxu0 %v2418
          %2442 = vmatprep.subr.bf16.mxu0 0
          %2443 = vmatpush1.bf16.msra.mxu0 %v2419
          %2444 = vmatprep.subr.bf16.mxu0 0
          %2445 = vmatpush1.bf16.msra.mxu0 0
          %2446 = vmatprep.subr.bf16.mxu0 0
          %2447 = vmatpush1.bf16.msra.mxu0 0
          %2448 = vmatprep.subr.bf16.mxu0 0
          %2449 = vmatpush1.bf16.msra.mxu0 0
          %2450 = vmatprep.subr.bf16.mxu0 0
          %2451 = vmatpush1.bf16.msra.mxu0 0
          %2452 = vmatprep.subr.bf16.mxu0 0
          %2453 = vmatpush1.bf16.msra.mxu0 0
          %2454 = vmatprep.subr.bf16.mxu0 0
          %2455 = vmatpush1.bf16.msra.mxu0 0
          %2456 = vmatprep.subr.bf16.mxu0 0
          %2457 = vmatpush1.bf16.msra.mxu0 0
          %2458 = vmatprep.subr.bf16.mxu0 0
          %2459 = vmatpush1.bf16.msra.mxu0 0
          %2460 = vmatprep.mubr.bf16.mxu0 0
          %2461 = vmatmul.mubr.bf16.gmra.mrb[0].mxu0 %v2362
          %v2462 = vpop.f32.mrb[0].mxu0
          %v2463 = vadd.f32 0.0, %v2462
          %v2464 = vpop.f32.mrb[0].mxu0
          %v2465 = vpop.f32.mrb[0].mxu0
          %v2466 = vadd.f32 0.0, %v2465
          %v2467 = vpop.f32.mrb[0].mxu0
          %2468 = vdwg.mxu0
          %v2469 = vadd.f32 %v2358, %v2463
          %v2470 = vadd.f32 %v2359, %v2466
          %v2472 = vlaneseq
          %v2473 = vshrl.u32 %v2472, 7
          %v2474 = vsub.s32 0, %v2473
          %v2475 = vrot.slane %v1462, %v2474
          %v2477 = vadd.f32 %v2469, %v2475
          %v2478 = vadd.f32 %v2470, %v2475
          %v2479 = vmax.f32 %v2477, 0.0
          %v2480 = vmax.f32 %v2478, 0.0
          %s2481 = scalar_lea.vmem [#allocation3], %s1469
          %2482 = vst [vmem:[%s2481] sm:$0xff] %v2479
          %2483 = vst [vmem:[%s2481 + $0x8] sm:$0xf] %v2480
        $region100: #{forward.1} parent=55 // loop_footer
          %s1468 = sadd.s32 1, %s1464
        $region101: #{forward.1} parent=55 // loop_footer_branch
          %1463 = sbr.rel target = $region97
        $region102: #{forward.1} parent=55 // loop_exit
          _
        %v2484 = vld [vmem:[#allocation11] sm:$0x1]
        loop: start=0, step=1, limit=10
        $region103: #{forward.1} parent=55 // loop_pre_header
          _
        $region104: #{forward.1} parent=55 // loop_header
          %s2486 = sphi 0, %s2490
          %p2487 = scmp.ge.s32.totalorder %s2486, 10
        $region105: #{forward.1} parent=55 // loop_header_branch
          %2489 = sbr.rel (%p2487) target = $region109
        $region106: #{forward.1} parent=55 // loop_body
          %s2491 = smul.u32 %s2486, 16
          %s2492 = scalar_lea.vmem [#allocation3], %s2491
          %v2493 = vld [vmem:[%s2492] sm:$0xff]
          %v2494 = vld [vmem:[%s2492 + $0x8] sm:$0x3]
          %v2495 = vpack.c.bf16 %v2494, %v2493
          %v2496 = vld [vmem:[#allocation10] sm:$0xf]
          %v2497 = vld [vmem:[#allocation10 + $0x4] sm:$0xf]
          %v2498 = vld [vmem:[#allocation10 + $0x8] sm:$0xf]
          %v2499 = vld [vmem:[#allocation10 + $0xc] sm:$0xf]
          %v2500 = vld [vmem:[#allocation10 + $0x10] sm:$0xf]
          %v2501 = vld [vmem:[#allocation10 + $0x14] sm:$0xf]
          %v2502 = vld [vmem:[#allocation10 + $0x18] sm:$0xf]
          %v2503 = vld [vmem:[#allocation10 + $0x1c] sm:$0xf]
          %v2504 = vld [vmem:[#allocation10 + $0x20] sm:$0xf]
          %v2505 = vld [vmem:[#allocation10 + $0x24] sm:$0xf]
          %v2506 = vld [vmem:[#allocation10 + $0x28] sm:$0xf]
          %v2507 = vld [vmem:[#allocation10 + $0x2c] sm:$0xf]
          %v2508 = vld [vmem:[#allocation10 + $0x30] sm:$0xf]
          %v2509 = vld [vmem:[#allocation10 + $0x34] sm:$0xf]
          %v2510 = vld [vmem:[#allocation10 + $0x38] sm:$0xf]
          %v2511 = vld [vmem:[#allocation10 + $0x3c] sm:$0xf]
          %v2512 = vld [vmem:[%s2492 + $0x1] sm:$0xff]
          %v2513 = vld [vmem:[%s2492 + $0x9] sm:$0x3]
          %v2514 = vpack.c.bf16 %v2513, %v2512
          %s2515 = scalar_lea.vmem [#allocation10], 64
          %v2516 = vld [vmem:[%s2515] sm:$0xf]
          %v2517 = vld [vmem:[%s2515 + $0x4] sm:$0xf]
          %v2518 = vld [vmem:[%s2515 + $0x8] sm:$0xf]
          %v2519 = vld [vmem:[%s2515 + $0xc] sm:$0xf]
          %v2520 = vld [vmem:[%s2515 + $0x10] sm:$0xf]
          %v2521 = vld [vmem:[%s2515 + $0x14] sm:$0xf]
          %v2522 = vld [vmem:[%s2515 + $0x18] sm:$0xf]
          %v2523 = vld [vmem:[%s2515 + $0x1c] sm:$0xf]
          %v2524 = vld [vmem:[%s2515 + $0x20] sm:$0xf]
          %v2525 = vld [vmem:[%s2515 + $0x24] sm:$0xf]
          %v2526 = vld [vmem:[%s2515 + $0x28] sm:$0xf]
          %v2527 = vld [vmem:[%s2515 + $0x2c] sm:$0xf]
          %v2528 = vld [vmem:[%s2515 + $0x30] sm:$0xf]
          %v2529 = vld [vmem:[%s2515 + $0x34] sm:$0xf]
          %v2530 = vld [vmem:[%s2515 + $0x38] sm:$0xf]
          %v2531 = vld [vmem:[%s2515 + $0x3c] sm:$0xf]
          %v2548 = vunpack.c.l.b16 %v2516
          %v2549 = vunpack.c.l.b16 %v2517
          %v2550 = vunpack.c.l.b16 %v2518
          %v2551 = vunpack.c.l.b16 %v2519
          %v2552 = vunpack.c.l.b16 %v2520
          %v2553 = vunpack.c.l.b16 %v2521
          %v2554 = vunpack.c.l.b16 %v2522
          %v2555 = vunpack.c.l.b16 %v2523
          %v2556 = vunpack.c.l.b16 %v2524
          %v2557 = vunpack.c.l.b16 %v2525
          %v2558 = vunpack.c.l.b16 %v2526
          %v2559 = vunpack.c.l.b16 %v2527
          %v2560 = vunpack.c.l.b16 %v2528
          %v2561 = vunpack.c.l.b16 %v2529
          %v2562 = vunpack.c.l.b16 %v2530
          %v2563 = vunpack.c.l.b16 %v2531
          %v2564 = vpack.c.b16 %v2549, %v2548
          %v2565 = vpack.c.b16 %v2551, %v2550
          %v2566 = vpack.c.b16 %v2553, %v2552
          %v2567 = vpack.c.b16 %v2555, %v2554
          %v2568 = vpack.c.b16 %v2557, %v2556
          %v2569 = vpack.c.b16 %v2559, %v2558
          %v2570 = vpack.c.b16 %v2561, %v2560
          %v2571 = vpack.c.b16 %v2563, %v2562
          %2580 = vmatprep.subr.bf16.mxu0 0
          %2581 = vmatpush1.bf16.msra.mxu0 %v2564
          %2582 = vmatprep.subr.bf16.mxu0 0
          %2583 = vmatpush1.bf16.msra.mxu0 %v2565
          %2584 = vmatprep.subr.bf16.mxu0 0
          %2585 = vmatpush1.bf16.msra.mxu0 %v2566
          %2586 = vmatprep.subr.bf16.mxu0 0
          %2587 = vmatpush1.bf16.msra.mxu0 %v2567
          %2588 = vmatprep.subr.bf16.mxu0 0
          %2589 = vmatpush1.bf16.msra.mxu0 %v2568
          %2590 = vmatprep.subr.bf16.mxu0 0
          %2591 = vmatpush1.bf16.msra.mxu0 %v2569
          %2592 = vmatprep.subr.bf16.mxu0 0
          %2593 = vmatpush1.bf16.msra.mxu0 %v2570
          %2594 = vmatprep.subr.bf16.mxu0 0
          %2595 = vmatpush1.bf16.msra.mxu0 %v2571
          %2596 = vmatprep.subr.bf16.mxu0 0
          %2597 = vmatpush1.bf16.msra.mxu0 0
          %2598 = vmatprep.subr.bf16.mxu0 0
          %2599 = vmatpush1.bf16.msra.mxu0 0
          %2600 = vmatprep.subr.bf16.mxu0 0
          %2601 = vmatpush1.bf16.msra.mxu0 0
          %2602 = vmatprep.subr.bf16.mxu0 0
          %2603 = vmatpush1.bf16.msra.mxu0 0
          %2604 = vmatprep.subr.bf16.mxu0 0
          %2605 = vmatpush1.bf16.msra.mxu0 0
          %2606 = vmatprep.subr.bf16.mxu0 0
          %2607 = vmatpush1.bf16.msra.mxu0 0
          %2608 = vmatprep.subr.bf16.mxu0 0
          %2609 = vmatpush1.bf16.msra.mxu0 0
          %2610 = vmatprep.subr.bf16.mxu0 0
          %2611 = vmatpush1.bf16.msra.mxu0 0
          %2612 = vmatprep.mubr.bf16.mxu0 0
          %2613 = vmatmul.mubr.bf16.gmra.mrb[0].mxu0 %v2514
          %v2614 = vpop.f32.mrb[0].mxu0
          %v2615 = vadd.f32 0.0, %v2614
          %v2616 = vpop.f32.mrb[0].mxu0
          %v2617 = vpop.f32.mrb[0].mxu0
          %v2618 = vadd.f32 0.0, %v2617
          %v2619 = vpop.f32.mrb[0].mxu0
          %2620 = vdwg.mxu0
          %v2637 = vunpack.c.l.b16 %v2496
          %v2638 = vunpack.c.l.b16 %v2497
          %v2639 = vunpack.c.l.b16 %v2498
          %v2640 = vunpack.c.l.b16 %v2499
          %v2641 = vunpack.c.l.b16 %v2500
          %v2642 = vunpack.c.l.b16 %v2501
          %v2643 = vunpack.c.l.b16 %v2502
          %v2644 = vunpack.c.l.b16 %v2503
          %v2645 = vunpack.c.l.b16 %v2504
          %v2646 = vunpack.c.l.b16 %v2505
          %v2647 = vunpack.c.l.b16 %v2506
          %v2648 = vunpack.c.l.b16 %v2507
          %v2649 = vunpack.c.l.b16 %v2508
          %v2650 = vunpack.c.l.b16 %v2509
          %v2651 = vunpack.c.l.b16 %v2510
          %v2652 = vunpack.c.l.b16 %v2511
          %v2653 = vpack.c.b16 %v2638, %v2637
          %v2654 = vpack.c.b16 %v2640, %v2639
          %v2655 = vpack.c.b16 %v2642, %v2641
          %v2656 = vpack.c.b16 %v2644, %v2643
          %v2657 = vpack.c.b16 %v2646, %v2645
          %v2658 = vpack.c.b16 %v2648, %v2647
          %v2659 = vpack.c.b16 %v2650, %v2649
          %v2660 = vpack.c.b16 %v2652, %v2651
          %2669 = vmatprep.subr.bf16.mxu0 0
          %2670 = vmatpush1.bf16.msra.mxu0 %v2653
          %2671 = vmatprep.subr.bf16.mxu0 0
          %2672 = vmatpush1.bf16.msra.mxu0 %v2654
          %2673 = vmatprep.subr.bf16.mxu0 0
          %2674 = vmatpush1.bf16.msra.mxu0 %v2655
          %2675 = vmatprep.subr.bf16.mxu0 0
          %2676 = vmatpush1.bf16.msra.mxu0 %v2656
          %2677 = vmatprep.subr.bf16.mxu0 0
          %2678 = vmatpush1.bf16.msra.mxu0 %v2657
          %2679 = vmatprep.subr.bf16.mxu0 0
          %2680 = vmatpush1.bf16.msra.mxu0 %v2658
          %2681 = vmatprep.subr.bf16.mxu0 0
          %2682 = vmatpush1.bf16.msra.mxu0 %v2659
          %2683 = vmatprep.subr.bf16.mxu0 0
          %2684 = vmatpush1.bf16.msra.mxu0 %v2660
          %2685 = vmatprep.subr.bf16.mxu0 0
          %2686 = vmatpush1.bf16.msra.mxu0 0
          %2687 = vmatprep.subr.bf16.mxu0 0
          %2688 = vmatpush1.bf16.msra.mxu0 0
          %2689 = vmatprep.subr.bf16.mxu0 0
          %2690 = vmatpush1.bf16.msra.mxu0 0
          %2691 = vmatprep.subr.bf16.mxu0 0
          %2692 = vmatpush1.bf16.msra.mxu0 0
          %2693 = vmatprep.subr.bf16.mxu0 0
          %2694 = vmatpush1.bf16.msra.mxu0 0
          %2695 = vmatprep.subr.bf16.mxu0 0
          %2696 = vmatpush1.bf16.msra.mxu0 0
          %2697 = vmatprep.subr.bf16.mxu0 0
          %2698 = vmatpush1.bf16.msra.mxu0 0
          %2699 = vmatprep.subr.bf16.mxu0 0
          %2700 = vmatpush1.bf16.msra.mxu0 0
          %2701 = vmatprep.mubr.bf16.mxu0 0
          %2702 = vmatmul.mubr.bf16.gmra.mrb[0].mxu0 %v2495
          %v2703 = vpop.f32.mrb[0].mxu0
          %v2704 = vadd.f32 %v2615, %v2703
          %v2705 = vpop.f32.mrb[0].mxu0
          %v2706 = vpop.f32.mrb[0].mxu0
          %v2707 = vadd.f32 %v2618, %v2706
          %v2708 = vpop.f32.mrb[0].mxu0
          %2709 = vdwg.mxu0
          %v2710 = vld [vmem:[%s2492 + $0x2] sm:$0xff]
          %v2711 = vld [vmem:[%s2492 + $0xa] sm:$0x3]
          %v2712 = vpack.c.bf16 %v2711, %v2710
          %s2713 = scalar_lea.vmem [#allocation10], 128
          %v2714 = vld [vmem:[%s2713] sm:$0xf]
          %v2715 = vld [vmem:[%s2713 + $0x4] sm:$0xf]
          %v2716 = vld [vmem:[%s2713 + $0x8] sm:$0xf]
          %v2717 = vld [vmem:[%s2713 + $0xc] sm:$0xf]
          %v2718 = vld [vmem:[%s2713 + $0x10] sm:$0xf]
          %v2719 = vld [vmem:[%s2713 + $0x14] sm:$0xf]
          %v2720 = vld [vmem:[%s2713 + $0x18] sm:$0xf]
          %v2721 = vld [vmem:[%s2713 + $0x1c] sm:$0xf]
          %v2722 = vld [vmem:[%s2713 + $0x20] sm:$0xf]
          %v2723 = vld [vmem:[%s2713 + $0x24] sm:$0xf]
          %v2724 = vld [vmem:[%s2713 + $0x28] sm:$0xf]
          %v2725 = vld [vmem:[%s2713 + $0x2c] sm:$0xf]
          %v2726 = vld [vmem:[%s2713 + $0x30] sm:$0xf]
          %v2727 = vld [vmem:[%s2713 + $0x34] sm:$0xf]
          %v2728 = vld [vmem:[%s2713 + $0x38] sm:$0xf]
          %v2729 = vld [vmem:[%s2713 + $0x3c] sm:$0xf]
          %v2746 = vunpack.c.l.b16 %v2714
          %v2747 = vunpack.c.l.b16 %v2715
          %v2748 = vunpack.c.l.b16 %v2716
          %v2749 = vunpack.c.l.b16 %v2717
          %v2750 = vunpack.c.l.b16 %v2718
          %v2751 = vunpack.c.l.b16 %v2719
          %v2752 = vunpack.c.l.b16 %v2720
          %v2753 = vunpack.c.l.b16 %v2721
          %v2754 = vunpack.c.l.b16 %v2722
          %v2755 = vunpack.c.l.b16 %v2723
          %v2756 = vunpack.c.l.b16 %v2724
          %v2757 = vunpack.c.l.b16 %v2725
          %v2758 = vunpack.c.l.b16 %v2726
          %v2759 = vunpack.c.l.b16 %v2727
          %v2760 = vunpack.c.l.b16 %v2728
          %v2761 = vunpack.c.l.b16 %v2729
          %v2762 = vpack.c.b16 %v2747, %v2746
          %v2763 = vpack.c.b16 %v2749, %v2748
          %v2764 = vpack.c.b16 %v2751, %v2750
          %v2765 = vpack.c.b16 %v2753, %v2752
          %v2766 = vpack.c.b16 %v2755, %v2754
          %v2767 = vpack.c.b16 %v2757, %v2756
          %v2768 = vpack.c.b16 %v2759, %v2758
          %v2769 = vpack.c.b16 %v2761, %v2760
          %2778 = vmatprep.subr.bf16.mxu0 0
          %2779 = vmatpush1.bf16.msra.mxu0 %v2762
          %2780 = vmatprep.subr.bf16.mxu0 0
          %2781 = vmatpush1.bf16.msra.mxu0 %v2763
          %2782 = vmatprep.subr.bf16.mxu0 0
          %2783 = vmatpush1.bf16.msra.mxu0 %v2764
          %2784 = vmatprep.subr.bf16.mxu0 0
          %2785 = vmatpush1.bf16.msra.mxu0 %v2765
          %2786 = vmatprep.subr.bf16.mxu0 0
          %2787 = vmatpush1.bf16.msra.mxu0 %v2766
          %2788 = vmatprep.subr.bf16.mxu0 0
          %2789 = vmatpush1.bf16.msra.mxu0 %v2767
          %2790 = vmatprep.subr.bf16.mxu0 0
          %2791 = vmatpush1.bf16.msra.mxu0 %v2768
          %2792 = vmatprep.subr.bf16.mxu0 0
          %2793 = vmatpush1.bf16.msra.mxu0 %v2769
          %2794 = vmatprep.subr.bf16.mxu0 0
          %2795 = vmatpush1.bf16.msra.mxu0 0
          %2796 = vmatprep.subr.bf16.mxu0 0
          %2797 = vmatpush1.bf16.msra.mxu0 0
          %2798 = vmatprep.subr.bf16.mxu0 0
          %2799 = vmatpush1.bf16.msra.mxu0 0
          %2800 = vmatprep.subr.bf16.mxu0 0
          %2801 = vmatpush1.bf16.msra.mxu0 0
          %2802 = vmatprep.subr.bf16.mxu0 0
          %2803 = vmatpush1.bf16.msra.mxu0 0
          %2804 = vmatprep.subr.bf16.mxu0 0
          %2805 = vmatpush1.bf16.msra.mxu0 0
          %2806 = vmatprep.subr.bf16.mxu0 0
          %2807 = vmatpush1.bf16.msra.mxu0 0
          %2808 = vmatprep.subr.bf16.mxu0 0
          %2809 = vmatpush1.bf16.msra.mxu0 0
          %2810 = vmatprep.mubr.bf16.mxu0 0
          %2811 = vmatmul.mubr.bf16.gmra.mrb[0].mxu0 %v2712
          %v2812 = vpop.f32.mrb[0].mxu0
          %v2813 = vadd.f32 0.0, %v2812
          %v2814 = vpop.f32.mrb[0].mxu0
          %v2815 = vpop.f32.mrb[0].mxu0
          %v2816 = vadd.f32 0.0, %v2815
          %v2817 = vpop.f32.mrb[0].mxu0
          %2818 = vdwg.mxu0
          %v2819 = vadd.f32 %v2704, %v2813
          %v2820 = vadd.f32 %v2707, %v2816
          %s2821 = sadd.s32 %s2486, 1
          %s2822 = smul.u32 %s2821, 16
          %s2823 = scalar_lea.vmem [#allocation3], %s2822
          %v2824 = vld [vmem:[%s2823] sm:$0xff]
          %v2825 = vld [vmem:[%s2823 + $0x8] sm:$0x3]
          %v2826 = vpack.c.bf16 %v2825, %v2824
          %s2827 = scalar_lea.vmem [#allocation10], 192
          %v2828 = vld [vmem:[%s2827] sm:$0xf]
          %v2829 = vld [vmem:[%s2827 + $0x4] sm:$0xf]
          %v2830 = vld [vmem:[%s2827 + $0x8] sm:$0xf]
          %v2831 = vld [vmem:[%s2827 + $0xc] sm:$0xf]
          %v2832 = vld [vmem:[%s2827 + $0x10] sm:$0xf]
          %v2833 = vld [vmem:[%s2827 + $0x14] sm:$0xf]
          %v2834 = vld [vmem:[%s2827 + $0x18] sm:$0xf]
          %v2835 = vld [vmem:[%s2827 + $0x1c] sm:$0xf]
          %v2836 = vld [vmem:[%s2827 + $0x20] sm:$0xf]
          %v2837 = vld [vmem:[%s2827 + $0x24] sm:$0xf]
          %v2838 = vld [vmem:[%s2827 + $0x28] sm:$0xf]
          %v2839 = vld [vmem:[%s2827 + $0x2c] sm:$0xf]
          %v2840 = vld [vmem:[%s2827 + $0x30] sm:$0xf]
          %v2841 = vld [vmem:[%s2827 + $0x34] sm:$0xf]
          %v2842 = vld [vmem:[%s2827 + $0x38] sm:$0xf]
          %v2843 = vld [vmem:[%s2827 + $0x3c] sm:$0xf]
          %v2860 = vunpack.c.l.b16 %v2828
          %v2861 = vunpack.c.l.b16 %v2829
          %v2862 = vunpack.c.l.b16 %v2830
          %v2863 = vunpack.c.l.b16 %v2831
          %v2864 = vunpack.c.l.b16 %v2832
          %v2865 = vunpack.c.l.b16 %v2833
          %v2866 = vunpack.c.l.b16 %v2834
          %v2867 = vunpack.c.l.b16 %v2835
          %v2868 = vunpack.c.l.b16 %v2836
          %v2869 = vunpack.c.l.b16 %v2837
          %v2870 = vunpack.c.l.b16 %v2838
          %v2871 = vunpack.c.l.b16 %v2839
          %v2872 = vunpack.c.l.b16 %v2840
          %v2873 = vunpack.c.l.b16 %v2841
          %v2874 = vunpack.c.l.b16 %v2842
          %v2875 = vunpack.c.l.b16 %v2843
          %v2876 = vpack.c.b16 %v2861, %v2860
          %v2877 = vpack.c.b16 %v2863, %v2862
          %v2878 = vpack.c.b16 %v2865, %v2864
          %v2879 = vpack.c.b16 %v2867, %v2866
          %v2880 = vpack.c.b16 %v2869, %v2868
          %v2881 = vpack.c.b16 %v2871, %v2870
          %v2882 = vpack.c.b16 %v2873, %v2872
          %v2883 = vpack.c.b16 %v2875, %v2874
          %2892 = vmatprep.subr.bf16.mxu0 0
          %2893 = vmatpush1.bf16.msra.mxu0 %v2876
          %2894 = vmatprep.subr.bf16.mxu0 0
          %2895 = vmatpush1.bf16.msra.mxu0 %v2877
          %2896 = vmatprep.subr.bf16.mxu0 0
          %2897 = vmatpush1.bf16.msra.mxu0 %v2878
          %2898 = vmatprep.subr.bf16.mxu0 0
          %2899 = vmatpush1.bf16.msra.mxu0 %v2879
          %2900 = vmatprep.subr.bf16.mxu0 0
          %2901 = vmatpush1.bf16.msra.mxu0 %v2880
          %2902 = vmatprep.subr.bf16.mxu0 0
          %2903 = vmatpush1.bf16.msra.mxu0 %v2881
          %2904 = vmatprep.subr.bf16.mxu0 0
          %2905 = vmatpush1.bf16.msra.mxu0 %v2882
          %2906 = vmatprep.subr.bf16.mxu0 0
          %2907 = vmatpush1.bf16.msra.mxu0 %v2883
          %2908 = vmatprep.subr.bf16.mxu0 0
          %2909 = vmatpush1.bf16.msra.mxu0 0
          %2910 = vmatprep.subr.bf16.mxu0 0
          %2911 = vmatpush1.bf16.msra.mxu0 0
          %2912 = vmatprep.subr.bf16.mxu0 0
          %2913 = vmatpush1.bf16.msra.mxu0 0
          %2914 = vmatprep.subr.bf16.mxu0 0
          %2915 = vmatpush1.bf16.msra.mxu0 0
          %2916 = vmatprep.subr.bf16.mxu0 0
          %2917 = vmatpush1.bf16.msra.mxu0 0
          %2918 = vmatprep.subr.bf16.mxu0 0
          %2919 = vmatpush1.bf16.msra.mxu0 0
          %2920 = vmatprep.subr.bf16.mxu0 0
          %2921 = vmatpush1.bf16.msra.mxu0 0
          %2922 = vmatprep.subr.bf16.mxu0 0
          %2923 = vmatpush1.bf16.msra.mxu0 0
          %2924 = vmatprep.mubr.bf16.mxu0 0
          %2925 = vmatmul.mubr.bf16.gmra.mrb[0].mxu0 %v2826
          %v2926 = vpop.f32.mrb[0].mxu0
          %v2927 = vadd.f32 0.0, %v2926
          %v2928 = vpop.f32.mrb[0].mxu0
          %v2929 = vpop.f32.mrb[0].mxu0
          %v2930 = vadd.f32 0.0, %v2929
          %v2931 = vpop.f32.mrb[0].mxu0
          %2932 = vdwg.mxu0
          %v2933 = vadd.f32 %v2819, %v2927
          %v2934 = vadd.f32 %v2820, %v2930
          %v2935 = vld [vmem:[%s2823 + $0x1] sm:$0xff]
          %v2936 = vld [vmem:[%s2823 + $0x9] sm:$0x3]
          %v2937 = vpack.c.bf16 %v2936, %v2935
          %s2938 = scalar_lea.vmem [#allocation10], 256
          %v2939 = vld [vmem:[%s2938] sm:$0xf]
          %v2940 = vld [vmem:[%s2938 + $0x4] sm:$0xf]
          %v2941 = vld [vmem:[%s2938 + $0x8] sm:$0xf]
          %v2942 = vld [vmem:[%s2938 + $0xc] sm:$0xf]
          %v2943 = vld [vmem:[%s2938 + $0x10] sm:$0xf]
          %v2944 = vld [vmem:[%s2938 + $0x14] sm:$0xf]
          %v2945 = vld [vmem:[%s2938 + $0x18] sm:$0xf]
          %v2946 = vld [vmem:[%s2938 + $0x1c] sm:$0xf]
          %v2947 = vld [vmem:[%s2938 + $0x20] sm:$0xf]
          %v2948 = vld [vmem:[%s2938 + $0x24] sm:$0xf]
          %v2949 = vld [vmem:[%s2938 + $0x28] sm:$0xf]
          %v2950 = vld [vmem:[%s2938 + $0x2c] sm:$0xf]
          %v2951 = vld [vmem:[%s2938 + $0x30] sm:$0xf]
          %v2952 = vld [vmem:[%s2938 + $0x34] sm:$0xf]
          %v2953 = vld [vmem:[%s2938 + $0x38] sm:$0xf]
          %v2954 = vld [vmem:[%s2938 + $0x3c] sm:$0xf]
          %v2971 = vunpack.c.l.b16 %v2939
          %v2972 = vunpack.c.l.b16 %v2940
          %v2973 = vunpack.c.l.b16 %v2941
          %v2974 = vunpack.c.l.b16 %v2942
          %v2975 = vunpack.c.l.b16 %v2943
          %v2976 = vunpack.c.l.b16 %v2944
          %v2977 = vunpack.c.l.b16 %v2945
          %v2978 = vunpack.c.l.b16 %v2946
          %v2979 = vunpack.c.l.b16 %v2947
          %v2980 = vunpack.c.l.b16 %v2948
          %v2981 = vunpack.c.l.b16 %v2949
          %v2982 = vunpack.c.l.b16 %v2950
          %v2983 = vunpack.c.l.b16 %v2951
          %v2984 = vunpack.c.l.b16 %v2952
          %v2985 = vunpack.c.l.b16 %v2953
          %v2986 = vunpack.c.l.b16 %v2954
          %v2987 = vpack.c.b16 %v2972, %v2971
          %v2988 = vpack.c.b16 %v2974, %v2973
          %v2989 = vpack.c.b16 %v2976, %v2975
          %v2990 = vpack.c.b16 %v2978, %v2977
          %v2991 = vpack.c.b16 %v2980, %v2979
          %v2992 = vpack.c.b16 %v2982, %v2981
          %v2993 = vpack.c.b16 %v2984, %v2983
          %v2994 = vpack.c.b16 %v2986, %v2985
          %3003 = vmatprep.subr.bf16.mxu0 0
          %3004 = vmatpush1.bf16.msra.mxu0 %v2987
          %3005 = vmatprep.subr.bf16.mxu0 0
          %3006 = vmatpush1.bf16.msra.mxu0 %v2988
          %3007 = vmatprep.subr.bf16.mxu0 0
          %3008 = vmatpush1.bf16.msra.mxu0 %v2989
          %3009 = vmatprep.subr.bf16.mxu0 0
          %3010 = vmatpush1.bf16.msra.mxu0 %v2990
          %3011 = vmatprep.subr.bf16.mxu0 0
          %3012 = vmatpush1.bf16.msra.mxu0 %v2991
          %3013 = vmatprep.subr.bf16.mxu0 0
          %3014 = vmatpush1.bf16.msra.mxu0 %v2992
          %3015 = vmatprep.subr.bf16.mxu0 0
          %3016 = vmatpush1.bf16.msra.mxu0 %v2993
          %3017 = vmatprep.subr.bf16.mxu0 0
          %3018 = vmatpush1.bf16.msra.mxu0 %v2994
          %3019 = vmatprep.subr.bf16.mxu0 0
          %3020 = vmatpush1.bf16.msra.mxu0 0
          %3021 = vmatprep.subr.bf16.mxu0 0
          %3022 = vmatpush1.bf16.msra.mxu0 0
          %3023 = vmatprep.subr.bf16.mxu0 0
          %3024 = vmatpush1.bf16.msra.mxu0 0
          %3025 = vmatprep.subr.bf16.mxu0 0
          %3026 = vmatpush1.bf16.msra.mxu0 0
          %3027 = vmatprep.subr.bf16.mxu0 0
          %3028 = vmatpush1.bf16.msra.mxu0 0
          %3029 = vmatprep.subr.bf16.mxu0 0
          %3030 = vmatpush1.bf16.msra.mxu0 0
          %3031 = vmatprep.subr.bf16.mxu0 0
          %3032 = vmatpush1.bf16.msra.mxu0 0
          %3033 = vmatprep.subr.bf16.mxu0 0
          %3034 = vmatpush1.bf16.msra.mxu0 0
          %3035 = vmatprep.mubr.bf16.mxu0 0
          %3036 = vmatmul.mubr.bf16.gmra.mrb[0].mxu0 %v2937
          %v3037 = vpop.f32.mrb[0].mxu0
          %v3038 = vadd.f32 0.0, %v3037
          %v3039 = vpop.f32.mrb[0].mxu0
          %v3040 = vpop.f32.mrb[0].mxu0
          %v3041 = vadd.f32 0.0, %v3040
          %v3042 = vpop.f32.mrb[0].mxu0
          %3043 = vdwg.mxu0
          %v3044 = vadd.f32 %v2933, %v3038
          %v3045 = vadd.f32 %v2934, %v3041
          %v3046 = vld [vmem:[%s2823 + $0x2] sm:$0xff]
          %v3047 = vld [vmem:[%s2823 + $0xa] sm:$0x3]
          %v3048 = vpack.c.bf16 %v3047, %v3046
          %s3049 = scalar_lea.vmem [#allocation10], 320
          %v3050 = vld [vmem:[%s3049] sm:$0xf]
          %v3051 = vld [vmem:[%s3049 + $0x4] sm:$0xf]
          %v3052 = vld [vmem:[%s3049 + $0x8] sm:$0xf]
          %v3053 = vld [vmem:[%s3049 + $0xc] sm:$0xf]
          %v3054 = vld [vmem:[%s3049 + $0x10] sm:$0xf]
          %v3055 = vld [vmem:[%s3049 + $0x14] sm:$0xf]
          %v3056 = vld [vmem:[%s3049 + $0x18] sm:$0xf]
          %v3057 = vld [vmem:[%s3049 + $0x1c] sm:$0xf]
          %v3058 = vld [vmem:[%s3049 + $0x20] sm:$0xf]
          %v3059 = vld [vmem:[%s3049 + $0x24] sm:$0xf]
          %v3060 = vld [vmem:[%s3049 + $0x28] sm:$0xf]
          %v3061 = vld [vmem:[%s3049 + $0x2c] sm:$0xf]
          %v3062 = vld [vmem:[%s3049 + $0x30] sm:$0xf]
          %v3063 = vld [vmem:[%s3049 + $0x34] sm:$0xf]
          %v3064 = vld [vmem:[%s3049 + $0x38] sm:$0xf]
          %v3065 = vld [vmem:[%s3049 + $0x3c] sm:$0xf]
          %v3082 = vunpack.c.l.b16 %v3050
          %v3083 = vunpack.c.l.b16 %v3051
          %v3084 = vunpack.c.l.b16 %v3052
          %v3085 = vunpack.c.l.b16 %v3053
          %v3086 = vunpack.c.l.b16 %v3054
          %v3087 = vunpack.c.l.b16 %v3055
          %v3088 = vunpack.c.l.b16 %v3056
          %v3089 = vunpack.c.l.b16 %v3057
          %v3090 = vunpack.c.l.b16 %v3058
          %v3091 = vunpack.c.l.b16 %v3059
          %v3092 = vunpack.c.l.b16 %v3060
          %v3093 = vunpack.c.l.b16 %v3061
          %v3094 = vunpack.c.l.b16 %v3062
          %v3095 = vunpack.c.l.b16 %v3063
          %v3096 = vunpack.c.l.b16 %v3064
          %v3097 = vunpack.c.l.b16 %v3065
          %v3098 = vpack.c.b16 %v3083, %v3082
          %v3099 = vpack.c.b16 %v3085, %v3084
          %v3100 = vpack.c.b16 %v3087, %v3086
          %v3101 = vpack.c.b16 %v3089, %v3088
          %v3102 = vpack.c.b16 %v3091, %v3090
          %v3103 = vpack.c.b16 %v3093, %v3092
          %v3104 = vpack.c.b16 %v3095, %v3094
          %v3105 = vpack.c.b16 %v3097, %v3096
          %3114 = vmatprep.subr.bf16.mxu0 0
          %3115 = vmatpush1.bf16.msra.mxu0 %v3098
          %3116 = vmatprep.subr.bf16.mxu0 0
          %3117 = vmatpush1.bf16.msra.mxu0 %v3099
          %3118 = vmatprep.subr.bf16.mxu0 0
          %3119 = vmatpush1.bf16.msra.mxu0 %v3100
          %3120 = vmatprep.subr.bf16.mxu0 0
          %3121 = vmatpush1.bf16.msra.mxu0 %v3101
          %3122 = vmatprep.subr.bf16.mxu0 0
          %3123 = vmatpush1.bf16.msra.mxu0 %v3102
          %3124 = vmatprep.subr.bf16.mxu0 0
          %3125 = vmatpush1.bf16.msra.mxu0 %v3103
          %3126 = vmatprep.subr.bf16.mxu0 0
          %3127 = vmatpush1.bf16.msra.mxu0 %v3104
          %3128 = vmatprep.subr.bf16.mxu0 0
          %3129 = vmatpush1.bf16.msra.mxu0 %v3105
          %3130 = vmatprep.subr.bf16.mxu0 0
          %3131 = vmatpush1.bf16.msra.mxu0 0
          %3132 = vmatprep.subr.bf16.mxu0 0
          %3133 = vmatpush1.bf16.msra.mxu0 0
          %3134 = vmatprep.subr.bf16.mxu0 0
          %3135 = vmatpush1.bf16.msra.mxu0 0
          %3136 = vmatprep.subr.bf16.mxu0 0
          %3137 = vmatpush1.bf16.msra.mxu0 0
          %3138 = vmatprep.subr.bf16.mxu0 0
          %3139 = vmatpush1.bf16.msra.mxu0 0
          %3140 = vmatprep.subr.bf16.mxu0 0
          %3141 = vmatpush1.bf16.msra.mxu0 0
          %3142 = vmatprep.subr.bf16.mxu0 0
          %3143 = vmatpush1.bf16.msra.mxu0 0
          %3144 = vmatprep.subr.bf16.mxu0 0
          %3145 = vmatpush1.bf16.msra.mxu0 0
          %3146 = vmatprep.mubr.bf16.mxu0 0
          %3147 = vmatmul.mubr.bf16.gmra.mrb[0].mxu0 %v3048
          %v3148 = vpop.f32.mrb[0].mxu0
          %v3149 = vadd.f32 0.0, %v3148
          %v3150 = vpop.f32.mrb[0].mxu0
          %v3151 = vpop.f32.mrb[0].mxu0
          %v3152 = vadd.f32 0.0, %v3151
          %v3153 = vpop.f32.mrb[0].mxu0
          %3154 = vdwg.mxu0
          %v3155 = vadd.f32 %v3044, %v3149
          %v3156 = vadd.f32 %v3045, %v3152
          %s3157 = sadd.s32 %s2486, 2
          %s3158 = smul.u32 %s3157, 16
          %s3159 = scalar_lea.vmem [#allocation3], %s3158
          %v3160 = vld [vmem:[%s3159] sm:$0xff]
          %v3161 = vld [vmem:[%s3159 + $0x8] sm:$0x3]
          %v3162 = vpack.c.bf16 %v3161, %v3160
          %s3163 = scalar_lea.vmem [#allocation10], 384
          %v3164 = vld [vmem:[%s3163] sm:$0xf]
          %v3165 = vld [vmem:[%s3163 + $0x4] sm:$0xf]
          %v3166 = vld [vmem:[%s3163 + $0x8] sm:$0xf]
          %v3167 = vld [vmem:[%s3163 + $0xc] sm:$0xf]
          %v3168 = vld [vmem:[%s3163 + $0x10] sm:$0xf]
          %v3169 = vld [vmem:[%s3163 + $0x14] sm:$0xf]
          %v3170 = vld [vmem:[%s3163 + $0x18] sm:$0xf]
          %v3171 = vld [vmem:[%s3163 + $0x1c] sm:$0xf]
          %v3172 = vld [vmem:[%s3163 + $0x20] sm:$0xf]
          %v3173 = vld [vmem:[%s3163 + $0x24] sm:$0xf]
          %v3174 = vld [vmem:[%s3163 + $0x28] sm:$0xf]
          %v3175 = vld [vmem:[%s3163 + $0x2c] sm:$0xf]
          %v3176 = vld [vmem:[%s3163 + $0x30] sm:$0xf]
          %v3177 = vld [vmem:[%s3163 + $0x34] sm:$0xf]
          %v3178 = vld [vmem:[%s3163 + $0x38] sm:$0xf]
          %v3179 = vld [vmem:[%s3163 + $0x3c] sm:$0xf]
          %v3196 = vunpack.c.l.b16 %v3164
          %v3197 = vunpack.c.l.b16 %v3165
          %v3198 = vunpack.c.l.b16 %v3166
          %v3199 = vunpack.c.l.b16 %v3167
          %v3200 = vunpack.c.l.b16 %v3168
          %v3201 = vunpack.c.l.b16 %v3169
          %v3202 = vunpack.c.l.b16 %v3170
          %v3203 = vunpack.c.l.b16 %v3171
          %v3204 = vunpack.c.l.b16 %v3172
          %v3205 = vunpack.c.l.b16 %v3173
          %v3206 = vunpack.c.l.b16 %v3174
          %v3207 = vunpack.c.l.b16 %v3175
          %v3208 = vunpack.c.l.b16 %v3176
          %v3209 = vunpack.c.l.b16 %v3177
          %v3210 = vunpack.c.l.b16 %v3178
          %v3211 = vunpack.c.l.b16 %v3179
          %v3212 = vpack.c.b16 %v3197, %v3196
          %v3213 = vpack.c.b16 %v3199, %v3198
          %v3214 = vpack.c.b16 %v3201, %v3200
          %v3215 = vpack.c.b16 %v3203, %v3202
          %v3216 = vpack.c.b16 %v3205, %v3204
          %v3217 = vpack.c.b16 %v3207, %v3206
          %v3218 = vpack.c.b16 %v3209, %v3208
          %v3219 = vpack.c.b16 %v3211, %v3210
          %3228 = vmatprep.subr.bf16.mxu0 0
          %3229 = vmatpush1.bf16.msra.mxu0 %v3212
          %3230 = vmatprep.subr.bf16.mxu0 0
          %3231 = vmatpush1.bf16.msra.mxu0 %v3213
          %3232 = vmatprep.subr.bf16.mxu0 0
          %3233 = vmatpush1.bf16.msra.mxu0 %v3214
          %3234 = vmatprep.subr.bf16.mxu0 0
          %3235 = vmatpush1.bf16.msra.mxu0 %v3215
          %3236 = vmatprep.subr.bf16.mxu0 0
          %3237 = vmatpush1.bf16.msra.mxu0 %v3216
          %3238 = vmatprep.subr.bf16.mxu0 0
          %3239 = vmatpush1.bf16.msra.mxu0 %v3217
          %3240 = vmatprep.subr.bf16.mxu0 0
          %3241 = vmatpush1.bf16.msra.mxu0 %v3218
          %3242 = vmatprep.subr.bf16.mxu0 0
          %3243 = vmatpush1.bf16.msra.mxu0 %v3219
          %3244 = vmatprep.subr.bf16.mxu0 0
          %3245 = vmatpush1.bf16.msra.mxu0 0
          %3246 = vmatprep.subr.bf16.mxu0 0
          %3247 = vmatpush1.bf16.msra.mxu0 0
          %3248 = vmatprep.subr.bf16.mxu0 0
          %3249 = vmatpush1.bf16.msra.mxu0 0
          %3250 = vmatprep.subr.bf16.mxu0 0
          %3251 = vmatpush1.bf16.msra.mxu0 0
          %3252 = vmatprep.subr.bf16.mxu0 0
          %3253 = vmatpush1.bf16.msra.mxu0 0
          %3254 = vmatprep.subr.bf16.mxu0 0
          %3255 = vmatpush1.bf16.msra.mxu0 0
          %3256 = vmatprep.subr.bf16.mxu0 0
          %3257 = vmatpush1.bf16.msra.mxu0 0
          %3258 = vmatprep.subr.bf16.mxu0 0
          %3259 = vmatpush1.bf16.msra.mxu0 0
          %3260 = vmatprep.mubr.bf16.mxu0 0
          %3261 = vmatmul.mubr.bf16.gmra.mrb[0].mxu0 %v3162
          %v3262 = vpop.f32.mrb[0].mxu0
          %v3263 = vadd.f32 0.0, %v3262
          %v3264 = vpop.f32.mrb[0].mxu0
          %v3265 = vpop.f32.mrb[0].mxu0
          %v3266 = vadd.f32 0.0, %v3265
          %v3267 = vpop.f32.mrb[0].mxu0
          %3268 = vdwg.mxu0
          %v3269 = vadd.f32 %v3155, %v3263
          %v3270 = vadd.f32 %v3156, %v3266
          %v3271 = vld [vmem:[%s3159 + $0x1] sm:$0xff]
          %v3272 = vld [vmem:[%s3159 + $0x9] sm:$0x3]
          %v3273 = vpack.c.bf16 %v3272, %v3271
          %s3274 = scalar_lea.vmem [#allocation10], 448
          %v3275 = vld [vmem:[%s3274] sm:$0xf]
          %v3276 = vld [vmem:[%s3274 + $0x4] sm:$0xf]
          %v3277 = vld [vmem:[%s3274 + $0x8] sm:$0xf]
          %v3278 = vld [vmem:[%s3274 + $0xc] sm:$0xf]
          %v3279 = vld [vmem:[%s3274 + $0x10] sm:$0xf]
          %v3280 = vld [vmem:[%s3274 + $0x14] sm:$0xf]
          %v3281 = vld [vmem:[%s3274 + $0x18] sm:$0xf]
          %v3282 = vld [vmem:[%s3274 + $0x1c] sm:$0xf]
          %v3283 = vld [vmem:[%s3274 + $0x20] sm:$0xf]
          %v3284 = vld [vmem:[%s3274 + $0x24] sm:$0xf]
          %v3285 = vld [vmem:[%s3274 + $0x28] sm:$0xf]
          %v3286 = vld [vmem:[%s3274 + $0x2c] sm:$0xf]
          %v3287 = vld [vmem:[%s3274 + $0x30] sm:$0xf]
          %v3288 = vld [vmem:[%s3274 + $0x34] sm:$0xf]
          %v3289 = vld [vmem:[%s3274 + $0x38] sm:$0xf]
          %v3290 = vld [vmem:[%s3274 + $0x3c] sm:$0xf]
          %v3307 = vunpack.c.l.b16 %v3275
          %v3308 = vunpack.c.l.b16 %v3276
          %v3309 = vunpack.c.l.b16 %v3277
          %v3310 = vunpack.c.l.b16 %v3278
          %v3311 = vunpack.c.l.b16 %v3279
          %v3312 = vunpack.c.l.b16 %v3280
          %v3313 = vunpack.c.l.b16 %v3281
          %v3314 = vunpack.c.l.b16 %v3282
          %v3315 = vunpack.c.l.b16 %v3283
          %v3316 = vunpack.c.l.b16 %v3284
          %v3317 = vunpack.c.l.b16 %v3285
          %v3318 = vunpack.c.l.b16 %v3286
          %v3319 = vunpack.c.l.b16 %v3287
          %v3320 = vunpack.c.l.b16 %v3288
          %v3321 = vunpack.c.l.b16 %v3289
          %v3322 = vunpack.c.l.b16 %v3290
          %v3323 = vpack.c.b16 %v3308, %v3307
          %v3324 = vpack.c.b16 %v3310, %v3309
          %v3325 = vpack.c.b16 %v3312, %v3311
          %v3326 = vpack.c.b16 %v3314, %v3313
          %v3327 = vpack.c.b16 %v3316, %v3315
          %v3328 = vpack.c.b16 %v3318, %v3317
          %v3329 = vpack.c.b16 %v3320, %v3319
          %v3330 = vpack.c.b16 %v3322, %v3321
          %3339 = vmatprep.subr.bf16.mxu0 0
          %3340 = vmatpush1.bf16.msra.mxu0 %v3323
          %3341 = vmatprep.subr.bf16.mxu0 0
          %3342 = vmatpush1.bf16.msra.mxu0 %v3324
          %3343 = vmatprep.subr.bf16.mxu0 0
          %3344 = vmatpush1.bf16.msra.mxu0 %v3325
          %3345 = vmatprep.subr.bf16.mxu0 0
          %3346 = vmatpush1.bf16.msra.mxu0 %v3326
          %3347 = vmatprep.subr.bf16.mxu0 0
          %3348 = vmatpush1.bf16.msra.mxu0 %v3327
          %3349 = vmatprep.subr.bf16.mxu0 0
          %3350 = vmatpush1.bf16.msra.mxu0 %v3328
          %3351 = vmatprep.subr.bf16.mxu0 0
          %3352 = vmatpush1.bf16.msra.mxu0 %v3329
          %3353 = vmatprep.subr.bf16.mxu0 0
          %3354 = vmatpush1.bf16.msra.mxu0 %v3330
          %3355 = vmatprep.subr.bf16.mxu0 0
          %3356 = vmatpush1.bf16.msra.mxu0 0
          %3357 = vmatprep.subr.bf16.mxu0 0
          %3358 = vmatpush1.bf16.msra.mxu0 0
          %3359 = vmatprep.subr.bf16.mxu0 0
          %3360 = vmatpush1.bf16.msra.mxu0 0
          %3361 = vmatprep.subr.bf16.mxu0 0
          %3362 = vmatpush1.bf16.msra.mxu0 0
          %3363 = vmatprep.subr.bf16.mxu0 0
          %3364 = vmatpush1.bf16.msra.mxu0 0
          %3365 = vmatprep.subr.bf16.mxu0 0
          %3366 = vmatpush1.bf16.msra.mxu0 0
          %3367 = vmatprep.subr.bf16.mxu0 0
          %3368 = vmatpush1.bf16.msra.mxu0 0
          %3369 = vmatprep.subr.bf16.mxu0 0
          %3370 = vmatpush1.bf16.msra.mxu0 0
          %3371 = vmatprep.mubr.bf16.mxu0 0
          %3372 = vmatmul.mubr.bf16.gmra.mrb[0].mxu0 %v3273
          %v3373 = vpop.f32.mrb[0].mxu0
          %v3374 = vadd.f32 0.0, %v3373
          %v3375 = vpop.f32.mrb[0].mxu0
          %v3376 = vpop.f32.mrb[0].mxu0
          %v3377 = vadd.f32 0.0, %v3376
          %v3378 = vpop.f32.mrb[0].mxu0
          %3379 = vdwg.mxu0
          %v3380 = vadd.f32 %v3269, %v3374
          %v3381 = vadd.f32 %v3270, %v3377
          %v3382 = vld [vmem:[%s3159 + $0x2] sm:$0xff]
          %v3383 = vld [vmem:[%s3159 + $0xa] sm:$0x3]
          %v3384 = vpack.c.bf16 %v3383, %v3382
          %s3385 = scalar_lea.vmem [#allocation10], 512
          %v3386 = vld [vmem:[%s3385] sm:$0xf]
          %v3387 = vld [vmem:[%s3385 + $0x4] sm:$0xf]
          %v3388 = vld [vmem:[%s3385 + $0x8] sm:$0xf]
          %v3389 = vld [vmem:[%s3385 + $0xc] sm:$0xf]
          %v3390 = vld [vmem:[%s3385 + $0x10] sm:$0xf]
          %v3391 = vld [vmem:[%s3385 + $0x14] sm:$0xf]
          %v3392 = vld [vmem:[%s3385 + $0x18] sm:$0xf]
          %v3393 = vld [vmem:[%s3385 + $0x1c] sm:$0xf]
          %v3394 = vld [vmem:[%s3385 + $0x20] sm:$0xf]
          %v3395 = vld [vmem:[%s3385 + $0x24] sm:$0xf]
          %v3396 = vld [vmem:[%s3385 + $0x28] sm:$0xf]
          %v3397 = vld [vmem:[%s3385 + $0x2c] sm:$0xf]
          %v3398 = vld [vmem:[%s3385 + $0x30] sm:$0xf]
          %v3399 = vld [vmem:[%s3385 + $0x34] sm:$0xf]
          %v3400 = vld [vmem:[%s3385 + $0x38] sm:$0xf]
          %v3401 = vld [vmem:[%s3385 + $0x3c] sm:$0xf]
          %v3418 = vunpack.c.l.b16 %v3386
          %v3419 = vunpack.c.l.b16 %v3387
          %v3420 = vunpack.c.l.b16 %v3388
          %v3421 = vunpack.c.l.b16 %v3389
          %v3422 = vunpack.c.l.b16 %v3390
          %v3423 = vunpack.c.l.b16 %v3391
          %v3424 = vunpack.c.l.b16 %v3392
          %v3425 = vunpack.c.l.b16 %v3393
          %v3426 = vunpack.c.l.b16 %v3394
          %v3427 = vunpack.c.l.b16 %v3395
          %v3428 = vunpack.c.l.b16 %v3396
          %v3429 = vunpack.c.l.b16 %v3397
          %v3430 = vunpack.c.l.b16 %v3398
          %v3431 = vunpack.c.l.b16 %v3399
          %v3432 = vunpack.c.l.b16 %v3400
          %v3433 = vunpack.c.l.b16 %v3401
          %v3434 = vpack.c.b16 %v3419, %v3418
          %v3435 = vpack.c.b16 %v3421, %v3420
          %v3436 = vpack.c.b16 %v3423, %v3422
          %v3437 = vpack.c.b16 %v3425, %v3424
          %v3438 = vpack.c.b16 %v3427, %v3426
          %v3439 = vpack.c.b16 %v3429, %v3428
          %v3440 = vpack.c.b16 %v3431, %v3430
          %v3441 = vpack.c.b16 %v3433, %v3432
          %3450 = vmatprep.subr.bf16.mxu0 0
          %3451 = vmatpush1.bf16.msra.mxu0 %v3434
          %3452 = vmatprep.subr.bf16.mxu0 0
          %3453 = vmatpush1.bf16.msra.mxu0 %v3435
          %3454 = vmatprep.subr.bf16.mxu0 0
          %3455 = vmatpush1.bf16.msra.mxu0 %v3436
          %3456 = vmatprep.subr.bf16.mxu0 0
          %3457 = vmatpush1.bf16.msra.mxu0 %v3437
          %3458 = vmatprep.subr.bf16.mxu0 0
          %3459 = vmatpush1.bf16.msra.mxu0 %v3438
          %3460 = vmatprep.subr.bf16.mxu0 0
          %3461 = vmatpush1.bf16.msra.mxu0 %v3439
          %3462 = vmatprep.subr.bf16.mxu0 0
          %3463 = vmatpush1.bf16.msra.mxu0 %v3440
          %3464 = vmatprep.subr.bf16.mxu0 0
          %3465 = vmatpush1.bf16.msra.mxu0 %v3441
          %3466 = vmatprep.subr.bf16.mxu0 0
          %3467 = vmatpush1.bf16.msra.mxu0 0
          %3468 = vmatprep.subr.bf16.mxu0 0
          %3469 = vmatpush1.bf16.msra.mxu0 0
          %3470 = vmatprep.subr.bf16.mxu0 0
          %3471 = vmatpush1.bf16.msra.mxu0 0
          %3472 = vmatprep.subr.bf16.mxu0 0
          %3473 = vmatpush1.bf16.msra.mxu0 0
          %3474 = vmatprep.subr.bf16.mxu0 0
          %3475 = vmatpush1.bf16.msra.mxu0 0
          %3476 = vmatprep.subr.bf16.mxu0 0
          %3477 = vmatpush1.bf16.msra.mxu0 0
          %3478 = vmatprep.subr.bf16.mxu0 0
          %3479 = vmatpush1.bf16.msra.mxu0 0
          %3480 = vmatprep.subr.bf16.mxu0 0
          %3481 = vmatpush1.bf16.msra.mxu0 0
          %3482 = vmatprep.mubr.bf16.mxu0 0
          %3483 = vmatmul.mubr.bf16.gmra.mrb[0].mxu0 %v3384
          %v3484 = vpop.f32.mrb[0].mxu0
          %v3485 = vadd.f32 0.0, %v3484
          %v3486 = vpop.f32.mrb[0].mxu0
          %v3487 = vpop.f32.mrb[0].mxu0
          %v3488 = vadd.f32 0.0, %v3487
          %v3489 = vpop.f32.mrb[0].mxu0
          %3490 = vdwg.mxu0
          %v3491 = vadd.f32 %v3380, %v3485
          %v3492 = vadd.f32 %v3381, %v3488
          %v3494 = vlaneseq
          %v3495 = vshrl.u32 %v3494, 7
          %v3496 = vsub.s32 0, %v3495
          %v3497 = vrot.slane %v2484, %v3496
          %v3499 = vadd.f32 %v3491, %v3497
          %v3500 = vadd.f32 %v3492, %v3497
          %v3501 = vmax.f32 %v3499, 0.0
          %v3502 = vmax.f32 %v3500, 0.0
          %s3503 = scalar_lea.vmem [#allocation4], %s2491
          %3504 = vst [vmem:[%s3503] sm:$0xff] %v3501
          %3505 = vst [vmem:[%s3503 + $0x8] sm:$0x3] %v3502
        $region107: #{forward.1} parent=55 // loop_footer
          %s2490 = sadd.s32 1, %s2486
        $region108: #{forward.1} parent=55 // loop_footer_branch
          %2485 = sbr.rel target = $region104
        $region109: #{forward.1} parent=55 // loop_exit
          _
        loop: start=0, step=1, limit=10
        $region110: #{forward.1} parent=55 // loop_pre_header
          _
        $region111: #{forward.1} parent=55 // loop_header
          %s3507 = sphi 0, %s3511
          %p3508 = scmp.ge.s32.totalorder %s3507, 10
          %v3512 = vphi 0.0, %v4624
        $region112: #{forward.1} parent=55 // loop_header_branch
          %3510 = sbr.rel (%p3508) target = $region116
        $region113: #{forward.1} parent=55 // loop_body
          %s3513 = smul.u32 %s3507, 16
          %s3514 = scalar_lea.vmem [#allocation4], %s3513
          %v3515 = vld [vmem:[%s3514] sm:$0x1]
          %v3516 = vpack.c.bf16 %v3515, %v3515
          %s3517 = smul.u32 %s3507, 10
          %s3518 = smul.u32 %s3517, 16
          %s3519 = smul.addr %s3518, 4
          %s3520 = scalar_lea.vmem [#allocation13], %s3519
          %v3521 = vld [vmem:[%s3520] sm:$0xf]
          %v3522 = vld [vmem:[%s3520 + $0x4] sm:$0xf]
          %v3523 = vld [vmem:[%s3520 + $0x8] sm:$0xf]
          %v3524 = vld [vmem:[%s3520 + $0xc] sm:$0xf]
          %v3525 = vld [vmem:[%s3520 + $0x10] sm:$0xf]
          %v3526 = vld [vmem:[%s3520 + $0x14] sm:$0xf]
          %v3527 = vld [vmem:[%s3520 + $0x18] sm:$0xf]
          %v3528 = vld [vmem:[%s3520 + $0x1c] sm:$0xf]
          %v3529 = vld [vmem:[%s3520 + $0x20] sm:$0xf]
          %v3530 = vld [vmem:[%s3520 + $0x24] sm:$0xf]
          %v3531 = vld [vmem:[%s3520 + $0x28] sm:$0xf]
          %v3532 = vld [vmem:[%s3520 + $0x2c] sm:$0xf]
          %v3533 = vld [vmem:[%s3520 + $0x30] sm:$0xf]
          %v3534 = vld [vmem:[%s3520 + $0x34] sm:$0xf]
          %v3535 = vld [vmem:[%s3520 + $0x38] sm:$0xf]
          %v3536 = vld [vmem:[%s3520 + $0x3c] sm:$0xf]
          %v3553 = vunpack.c.l.b16 %v3521
          %v3554 = vunpack.c.l.b16 %v3522
          %v3555 = vunpack.c.l.b16 %v3523
          %v3556 = vunpack.c.l.b16 %v3524
          %v3557 = vunpack.c.l.b16 %v3525
          %v3558 = vunpack.c.l.b16 %v3526
          %v3559 = vunpack.c.l.b16 %v3527
          %v3560 = vunpack.c.l.b16 %v3528
          %v3561 = vunpack.c.l.b16 %v3529
          %v3562 = vunpack.c.l.b16 %v3530
          %v3563 = vunpack.c.l.b16 %v3531
          %v3564 = vunpack.c.l.b16 %v3532
          %v3565 = vunpack.c.l.b16 %v3533
          %v3566 = vunpack.c.l.b16 %v3534
          %v3567 = vunpack.c.l.b16 %v3535
          %v3568 = vunpack.c.l.b16 %v3536
          %v3569 = vpack.c.b16 %v3554, %v3553
          %v3570 = vpack.c.b16 %v3556, %v3555
          %v3571 = vpack.c.b16 %v3558, %v3557
          %v3572 = vpack.c.b16 %v3560, %v3559
          %v3573 = vpack.c.b16 %v3562, %v3561
          %v3574 = vpack.c.b16 %v3564, %v3563
          %v3575 = vpack.c.b16 %v3566, %v3565
          %v3576 = vpack.c.b16 %v3568, %v3567
          %3585 = vmatprep.subr.bf16.mxu0 0
          %3586 = vmatpush1.bf16.msra.mxu0 %v3569
          %3587 = vmatprep.subr.bf16.mxu0 0
          %3588 = vmatpush1.bf16.msra.mxu0 %v3570
          %3589 = vmatprep.subr.bf16.mxu0 0
          %3590 = vmatpush1.bf16.msra.mxu0 %v3571
          %3591 = vmatprep.subr.bf16.mxu0 0
          %3592 = vmatpush1.bf16.msra.mxu0 %v3572
          %3593 = vmatprep.subr.bf16.mxu0 0
          %3594 = vmatpush1.bf16.msra.mxu0 %v3573
          %3595 = vmatprep.subr.bf16.mxu0 0
          %3596 = vmatpush1.bf16.msra.mxu0 %v3574
          %3597 = vmatprep.subr.bf16.mxu0 0
          %3598 = vmatpush1.bf16.msra.mxu0 %v3575
          %3599 = vmatprep.subr.bf16.mxu0 0
          %3600 = vmatpush1.bf16.msra.mxu0 %v3576
          %3601 = vmatprep.subr.bf16.mxu0 0
          %3602 = vmatpush1.bf16.msra.mxu0 0
          %3603 = vmatprep.subr.bf16.mxu0 0
          %3604 = vmatpush1.bf16.msra.mxu0 0
          %3605 = vmatprep.subr.bf16.mxu0 0
          %3606 = vmatpush1.bf16.msra.mxu0 0
          %3607 = vmatprep.subr.bf16.mxu0 0
          %3608 = vmatpush1.bf16.msra.mxu0 0
          %3609 = vmatprep.subr.bf16.mxu0 0
          %3610 = vmatpush1.bf16.msra.mxu0 0
          %3611 = vmatprep.subr.bf16.mxu0 0
          %3612 = vmatpush1.bf16.msra.mxu0 0
          %3613 = vmatprep.subr.bf16.mxu0 0
          %3614 = vmatpush1.bf16.msra.mxu0 0
          %3615 = vmatprep.subr.bf16.mxu0 0
          %3616 = vmatpush1.bf16.msra.mxu0 0
          %3617 = vmatprep.mubr.bf16.mxu0 0
          %3618 = vmatmul.mubr.bf16.gmra.mrb[0].mxu0 %v3516
          %v3619 = vpop.f32.mrb[0].mxu0
          %v3620 = vadd.f32 0.0, %v3619
          %v3621 = vpop.f32.mrb[0].mxu0
          %v3622 = vpop.f32.mrb[0].mxu0
          %v3623 = vpop.f32.mrb[0].mxu0
          %3624 = vdwg.mxu0
          %v3625 = vadd.f32 %v3512, %v3620
          %v3626 = vld [vmem:[%s3514 + $0x1] sm:$0x1]
          %v3627 = vpack.c.bf16 %v3626, %v3626
          %s3628 = sadd.s32 %s3517, 1
          %s3629 = smul.u32 %s3628, 16
          %s3630 = smul.addr %s3629, 4
          %s3631 = scalar_lea.vmem [#allocation13], %s3630
          %v3632 = vld [vmem:[%s3631] sm:$0xf]
          %v3633 = vld [vmem:[%s3631 + $0x4] sm:$0xf]
          %v3634 = vld [vmem:[%s3631 + $0x8] sm:$0xf]
          %v3635 = vld [vmem:[%s3631 + $0xc] sm:$0xf]
          %v3636 = vld [vmem:[%s3631 + $0x10] sm:$0xf]
          %v3637 = vld [vmem:[%s3631 + $0x14] sm:$0xf]
          %v3638 = vld [vmem:[%s3631 + $0x18] sm:$0xf]
          %v3639 = vld [vmem:[%s3631 + $0x1c] sm:$0xf]
          %v3640 = vld [vmem:[%s3631 + $0x20] sm:$0xf]
          %v3641 = vld [vmem:[%s3631 + $0x24] sm:$0xf]
          %v3642 = vld [vmem:[%s3631 + $0x28] sm:$0xf]
          %v3643 = vld [vmem:[%s3631 + $0x2c] sm:$0xf]
          %v3644 = vld [vmem:[%s3631 + $0x30] sm:$0xf]
          %v3645 = vld [vmem:[%s3631 + $0x34] sm:$0xf]
          %v3646 = vld [vmem:[%s3631 + $0x38] sm:$0xf]
          %v3647 = vld [vmem:[%s3631 + $0x3c] sm:$0xf]
          %v3664 = vunpack.c.l.b16 %v3632
          %v3665 = vunpack.c.l.b16 %v3633
          %v3666 = vunpack.c.l.b16 %v3634
          %v3667 = vunpack.c.l.b16 %v3635
          %v3668 = vunpack.c.l.b16 %v3636
          %v3669 = vunpack.c.l.b16 %v3637
          %v3670 = vunpack.c.l.b16 %v3638
          %v3671 = vunpack.c.l.b16 %v3639
          %v3672 = vunpack.c.l.b16 %v3640
          %v3673 = vunpack.c.l.b16 %v3641
          %v3674 = vunpack.c.l.b16 %v3642
          %v3675 = vunpack.c.l.b16 %v3643
          %v3676 = vunpack.c.l.b16 %v3644
          %v3677 = vunpack.c.l.b16 %v3645
          %v3678 = vunpack.c.l.b16 %v3646
          %v3679 = vunpack.c.l.b16 %v3647
          %v3680 = vpack.c.b16 %v3665, %v3664
          %v3681 = vpack.c.b16 %v3667, %v3666
          %v3682 = vpack.c.b16 %v3669, %v3668
          %v3683 = vpack.c.b16 %v3671, %v3670
          %v3684 = vpack.c.b16 %v3673, %v3672
          %v3685 = vpack.c.b16 %v3675, %v3674
          %v3686 = vpack.c.b16 %v3677, %v3676
          %v3687 = vpack.c.b16 %v3679, %v3678
          %3696 = vmatprep.subr.bf16.mxu0 0
          %3697 = vmatpush1.bf16.msra.mxu0 %v3680
          %3698 = vmatprep.subr.bf16.mxu0 0
          %3699 = vmatpush1.bf16.msra.mxu0 %v3681
          %3700 = vmatprep.subr.bf16.mxu0 0
          %3701 = vmatpush1.bf16.msra.mxu0 %v3682
          %3702 = vmatprep.subr.bf16.mxu0 0
          %3703 = vmatpush1.bf16.msra.mxu0 %v3683
          %3704 = vmatprep.subr.bf16.mxu0 0
          %3705 = vmatpush1.bf16.msra.mxu0 %v3684
          %3706 = vmatprep.subr.bf16.mxu0 0
          %3707 = vmatpush1.bf16.msra.mxu0 %v3685
          %3708 = vmatprep.subr.bf16.mxu0 0
          %3709 = vmatpush1.bf16.msra.mxu0 %v3686
          %3710 = vmatprep.subr.bf16.mxu0 0
          %3711 = vmatpush1.bf16.msra.mxu0 %v3687
          %3712 = vmatprep.subr.bf16.mxu0 0
          %3713 = vmatpush1.bf16.msra.mxu0 0
          %3714 = vmatprep.subr.bf16.mxu0 0
          %3715 = vmatpush1.bf16.msra.mxu0 0
          %3716 = vmatprep.subr.bf16.mxu0 0
          %3717 = vmatpush1.bf16.msra.mxu0 0
          %3718 = vmatprep.subr.bf16.mxu0 0
          %3719 = vmatpush1.bf16.msra.mxu0 0
          %3720 = vmatprep.subr.bf16.mxu0 0
          %3721 = vmatpush1.bf16.msra.mxu0 0
          %3722 = vmatprep.subr.bf16.mxu0 0
          %3723 = vmatpush1.bf16.msra.mxu0 0
          %3724 = vmatprep.subr.bf16.mxu0 0
          %3725 = vmatpush1.bf16.msra.mxu0 0
          %3726 = vmatprep.subr.bf16.mxu0 0
          %3727 = vmatpush1.bf16.msra.mxu0 0
          %3728 = vmatprep.mubr.bf16.mxu0 0
          %3729 = vmatmul.mubr.bf16.gmra.mrb[0].mxu0 %v3627
          %v3730 = vpop.f32.mrb[0].mxu0
          %v3731 = vadd.f32 0.0, %v3730
          %v3732 = vpop.f32.mrb[0].mxu0
          %v3733 = vpop.f32.mrb[0].mxu0
          %v3734 = vpop.f32.mrb[0].mxu0
          %3735 = vdwg.mxu0
          %v3736 = vadd.f32 %v3625, %v3731
          %v3737 = vld [vmem:[%s3514 + $0x2] sm:$0x1]
          %v3738 = vpack.c.bf16 %v3737, %v3737
          %s3739 = sadd.s32 %s3517, 2
          %s3740 = smul.u32 %s3739, 16
          %s3741 = smul.addr %s3740, 4
          %s3742 = scalar_lea.vmem [#allocation13], %s3741
          %v3743 = vld [vmem:[%s3742] sm:$0xf]
          %v3744 = vld [vmem:[%s3742 + $0x4] sm:$0xf]
          %v3745 = vld [vmem:[%s3742 + $0x8] sm:$0xf]
          %v3746 = vld [vmem:[%s3742 + $0xc] sm:$0xf]
          %v3747 = vld [vmem:[%s3742 + $0x10] sm:$0xf]
          %v3748 = vld [vmem:[%s3742 + $0x14] sm:$0xf]
          %v3749 = vld [vmem:[%s3742 + $0x18] sm:$0xf]
          %v3750 = vld [vmem:[%s3742 + $0x1c] sm:$0xf]
          %v3751 = vld [vmem:[%s3742 + $0x20] sm:$0xf]
          %v3752 = vld [vmem:[%s3742 + $0x24] sm:$0xf]
          %v3753 = vld [vmem:[%s3742 + $0x28] sm:$0xf]
          %v3754 = vld [vmem:[%s3742 + $0x2c] sm:$0xf]
          %v3755 = vld [vmem:[%s3742 + $0x30] sm:$0xf]
          %v3756 = vld [vmem:[%s3742 + $0x34] sm:$0xf]
          %v3757 = vld [vmem:[%s3742 + $0x38] sm:$0xf]
          %v3758 = vld [vmem:[%s3742 + $0x3c] sm:$0xf]
          %v3775 = vunpack.c.l.b16 %v3743
          %v3776 = vunpack.c.l.b16 %v3744
          %v3777 = vunpack.c.l.b16 %v3745
          %v3778 = vunpack.c.l.b16 %v3746
          %v3779 = vunpack.c.l.b16 %v3747
          %v3780 = vunpack.c.l.b16 %v3748
          %v3781 = vunpack.c.l.b16 %v3749
          %v3782 = vunpack.c.l.b16 %v3750
          %v3783 = vunpack.c.l.b16 %v3751
          %v3784 = vunpack.c.l.b16 %v3752
          %v3785 = vunpack.c.l.b16 %v3753
          %v3786 = vunpack.c.l.b16 %v3754
          %v3787 = vunpack.c.l.b16 %v3755
          %v3788 = vunpack.c.l.b16 %v3756
          %v3789 = vunpack.c.l.b16 %v3757
          %v3790 = vunpack.c.l.b16 %v3758
          %v3791 = vpack.c.b16 %v3776, %v3775
          %v3792 = vpack.c.b16 %v3778, %v3777
          %v3793 = vpack.c.b16 %v3780, %v3779
          %v3794 = vpack.c.b16 %v3782, %v3781
          %v3795 = vpack.c.b16 %v3784, %v3783
          %v3796 = vpack.c.b16 %v3786, %v3785
          %v3797 = vpack.c.b16 %v3788, %v3787
          %v3798 = vpack.c.b16 %v3790, %v3789
          %3807 = vmatprep.subr.bf16.mxu0 0
          %3808 = vmatpush1.bf16.msra.mxu0 %v3791
          %3809 = vmatprep.subr.bf16.mxu0 0
          %3810 = vmatpush1.bf16.msra.mxu0 %v3792
          %3811 = vmatprep.subr.bf16.mxu0 0
          %3812 = vmatpush1.bf16.msra.mxu0 %v3793
          %3813 = vmatprep.subr.bf16.mxu0 0
          %3814 = vmatpush1.bf16.msra.mxu0 %v3794
          %3815 = vmatprep.subr.bf16.mxu0 0
          %3816 = vmatpush1.bf16.msra.mxu0 %v3795
          %3817 = vmatprep.subr.bf16.mxu0 0
          %3818 = vmatpush1.bf16.msra.mxu0 %v3796
          %3819 = vmatprep.subr.bf16.mxu0 0
          %3820 = vmatpush1.bf16.msra.mxu0 %v3797
          %3821 = vmatprep.subr.bf16.mxu0 0
          %3822 = vmatpush1.bf16.msra.mxu0 %v3798
          %3823 = vmatprep.subr.bf16.mxu0 0
          %3824 = vmatpush1.bf16.msra.mxu0 0
          %3825 = vmatprep.subr.bf16.mxu0 0
          %3826 = vmatpush1.bf16.msra.mxu0 0
          %3827 = vmatprep.subr.bf16.mxu0 0
          %3828 = vmatpush1.bf16.msra.mxu0 0
          %3829 = vmatprep.subr.bf16.mxu0 0
          %3830 = vmatpush1.bf16.msra.mxu0 0
          %3831 = vmatprep.subr.bf16.mxu0 0
          %3832 = vmatpush1.bf16.msra.mxu0 0
          %3833 = vmatprep.subr.bf16.mxu0 0
          %3834 = vmatpush1.bf16.msra.mxu0 0
          %3835 = vmatprep.subr.bf16.mxu0 0
          %3836 = vmatpush1.bf16.msra.mxu0 0
          %3837 = vmatprep.subr.bf16.mxu0 0
          %3838 = vmatpush1.bf16.msra.mxu0 0
          %3839 = vmatprep.mubr.bf16.mxu0 0
          %3840 = vmatmul.mubr.bf16.gmra.mrb[0].mxu0 %v3738
          %v3841 = vpop.f32.mrb[0].mxu0
          %v3842 = vadd.f32 0.0, %v3841
          %v3843 = vpop.f32.mrb[0].mxu0
          %v3844 = vpop.f32.mrb[0].mxu0
          %v3845 = vpop.f32.mrb[0].mxu0
          %3846 = vdwg.mxu0
          %v3847 = vadd.f32 %v3736, %v3842
          %v3848 = vld [vmem:[%s3514 + $0x3] sm:$0x1]
          %v3849 = vpack.c.bf16 %v3848, %v3848
          %s3850 = sadd.s32 %s3517, 3
          %s3851 = smul.u32 %s3850, 16
          %s3852 = smul.addr %s3851, 4
          %s3853 = scalar_lea.vmem [#allocation13], %s3852
          %v3854 = vld [vmem:[%s3853] sm:$0xf]
          %v3855 = vld [vmem:[%s3853 + $0x4] sm:$0xf]
          %v3856 = vld [vmem:[%s3853 + $0x8] sm:$0xf]
          %v3857 = vld [vmem:[%s3853 + $0xc] sm:$0xf]
          %v3858 = vld [vmem:[%s3853 + $0x10] sm:$0xf]
          %v3859 = vld [vmem:[%s3853 + $0x14] sm:$0xf]
          %v3860 = vld [vmem:[%s3853 + $0x18] sm:$0xf]
          %v3861 = vld [vmem:[%s3853 + $0x1c] sm:$0xf]
          %v3862 = vld [vmem:[%s3853 + $0x20] sm:$0xf]
          %v3863 = vld [vmem:[%s3853 + $0x24] sm:$0xf]
          %v3864 = vld [vmem:[%s3853 + $0x28] sm:$0xf]
          %v3865 = vld [vmem:[%s3853 + $0x2c] sm:$0xf]
          %v3866 = vld [vmem:[%s3853 + $0x30] sm:$0xf]
          %v3867 = vld [vmem:[%s3853 + $0x34] sm:$0xf]
          %v3868 = vld [vmem:[%s3853 + $0x38] sm:$0xf]
          %v3869 = vld [vmem:[%s3853 + $0x3c] sm:$0xf]
          %v3886 = vunpack.c.l.b16 %v3854
          %v3887 = vunpack.c.l.b16 %v3855
          %v3888 = vunpack.c.l.b16 %v3856
          %v3889 = vunpack.c.l.b16 %v3857
          %v3890 = vunpack.c.l.b16 %v3858
          %v3891 = vunpack.c.l.b16 %v3859
          %v3892 = vunpack.c.l.b16 %v3860
          %v3893 = vunpack.c.l.b16 %v3861
          %v3894 = vunpack.c.l.b16 %v3862
          %v3895 = vunpack.c.l.b16 %v3863
          %v3896 = vunpack.c.l.b16 %v3864
          %v3897 = vunpack.c.l.b16 %v3865
          %v3898 = vunpack.c.l.b16 %v3866
          %v3899 = vunpack.c.l.b16 %v3867
          %v3900 = vunpack.c.l.b16 %v3868
          %v3901 = vunpack.c.l.b16 %v3869
          %v3902 = vpack.c.b16 %v3887, %v3886
          %v3903 = vpack.c.b16 %v3889, %v3888
          %v3904 = vpack.c.b16 %v3891, %v3890
          %v3905 = vpack.c.b16 %v3893, %v3892
          %v3906 = vpack.c.b16 %v3895, %v3894
          %v3907 = vpack.c.b16 %v3897, %v3896
          %v3908 = vpack.c.b16 %v3899, %v3898
          %v3909 = vpack.c.b16 %v3901, %v3900
          %3918 = vmatprep.subr.bf16.mxu0 0
          %3919 = vmatpush1.bf16.msra.mxu0 %v3902
          %3920 = vmatprep.subr.bf16.mxu0 0
          %3921 = vmatpush1.bf16.msra.mxu0 %v3903
          %3922 = vmatprep.subr.bf16.mxu0 0
          %3923 = vmatpush1.bf16.msra.mxu0 %v3904
          %3924 = vmatprep.subr.bf16.mxu0 0
          %3925 = vmatpush1.bf16.msra.mxu0 %v3905
          %3926 = vmatprep.subr.bf16.mxu0 0
          %3927 = vmatpush1.bf16.msra.mxu0 %v3906
          %3928 = vmatprep.subr.bf16.mxu0 0
          %3929 = vmatpush1.bf16.msra.mxu0 %v3907
          %3930 = vmatprep.subr.bf16.mxu0 0
          %3931 = vmatpush1.bf16.msra.mxu0 %v3908
          %3932 = vmatprep.subr.bf16.mxu0 0
          %3933 = vmatpush1.bf16.msra.mxu0 %v3909
          %3934 = vmatprep.subr.bf16.mxu0 0
          %3935 = vmatpush1.bf16.msra.mxu0 0
          %3936 = vmatprep.subr.bf16.mxu0 0
          %3937 = vmatpush1.bf16.msra.mxu0 0
          %3938 = vmatprep.subr.bf16.mxu0 0
          %3939 = vmatpush1.bf16.msra.mxu0 0
          %3940 = vmatprep.subr.bf16.mxu0 0
          %3941 = vmatpush1.bf16.msra.mxu0 0
          %3942 = vmatprep.subr.bf16.mxu0 0
          %3943 = vmatpush1.bf16.msra.mxu0 0
          %3944 = vmatprep.subr.bf16.mxu0 0
          %3945 = vmatpush1.bf16.msra.mxu0 0
          %3946 = vmatprep.subr.bf16.mxu0 0
          %3947 = vmatpush1.bf16.msra.mxu0 0
          %3948 = vmatprep.subr.bf16.mxu0 0
          %3949 = vmatpush1.bf16.msra.mxu0 0
          %3950 = vmatprep.mubr.bf16.mxu0 0
          %3951 = vmatmul.mubr.bf16.gmra.mrb[0].mxu0 %v3849
          %v3952 = vpop.f32.mrb[0].mxu0
          %v3953 = vadd.f32 0.0, %v3952
          %v3954 = vpop.f32.mrb[0].mxu0
          %v3955 = vpop.f32.mrb[0].mxu0
          %v3956 = vpop.f32.mrb[0].mxu0
          %3957 = vdwg.mxu0
          %v3958 = vadd.f32 %v3847, %v3953
          %v3959 = vld [vmem:[%s3514 + $0x4] sm:$0x1]
          %v3960 = vpack.c.bf16 %v3959, %v3959
          %s3961 = sadd.s32 %s3517, 4
          %s3962 = smul.u32 %s3961, 16
          %s3963 = smul.addr %s3962, 4
          %s3964 = scalar_lea.vmem [#allocation13], %s3963
          %v3965 = vld [vmem:[%s3964] sm:$0xf]
          %v3966 = vld [vmem:[%s3964 + $0x4] sm:$0xf]
          %v3967 = vld [vmem:[%s3964 + $0x8] sm:$0xf]
          %v3968 = vld [vmem:[%s3964 + $0xc] sm:$0xf]
          %v3969 = vld [vmem:[%s3964 + $0x10] sm:$0xf]
          %v3970 = vld [vmem:[%s3964 + $0x14] sm:$0xf]
          %v3971 = vld [vmem:[%s3964 + $0x18] sm:$0xf]
          %v3972 = vld [vmem:[%s3964 + $0x1c] sm:$0xf]
          %v3973 = vld [vmem:[%s3964 + $0x20] sm:$0xf]
          %v3974 = vld [vmem:[%s3964 + $0x24] sm:$0xf]
          %v3975 = vld [vmem:[%s3964 + $0x28] sm:$0xf]
          %v3976 = vld [vmem:[%s3964 + $0x2c] sm:$0xf]
          %v3977 = vld [vmem:[%s3964 + $0x30] sm:$0xf]
          %v3978 = vld [vmem:[%s3964 + $0x34] sm:$0xf]
          %v3979 = vld [vmem:[%s3964 + $0x38] sm:$0xf]
          %v3980 = vld [vmem:[%s3964 + $0x3c] sm:$0xf]
          %v3997 = vunpack.c.l.b16 %v3965
          %v3998 = vunpack.c.l.b16 %v3966
          %v3999 = vunpack.c.l.b16 %v3967
          %v4000 = vunpack.c.l.b16 %v3968
          %v4001 = vunpack.c.l.b16 %v3969
          %v4002 = vunpack.c.l.b16 %v3970
          %v4003 = vunpack.c.l.b16 %v3971
          %v4004 = vunpack.c.l.b16 %v3972
          %v4005 = vunpack.c.l.b16 %v3973
          %v4006 = vunpack.c.l.b16 %v3974
          %v4007 = vunpack.c.l.b16 %v3975
          %v4008 = vunpack.c.l.b16 %v3976
          %v4009 = vunpack.c.l.b16 %v3977
          %v4010 = vunpack.c.l.b16 %v3978
          %v4011 = vunpack.c.l.b16 %v3979
          %v4012 = vunpack.c.l.b16 %v3980
          %v4013 = vpack.c.b16 %v3998, %v3997
          %v4014 = vpack.c.b16 %v4000, %v3999
          %v4015 = vpack.c.b16 %v4002, %v4001
          %v4016 = vpack.c.b16 %v4004, %v4003
          %v4017 = vpack.c.b16 %v4006, %v4005
          %v4018 = vpack.c.b16 %v4008, %v4007
          %v4019 = vpack.c.b16 %v4010, %v4009
          %v4020 = vpack.c.b16 %v4012, %v4011
          %4029 = vmatprep.subr.bf16.mxu0 0
          %4030 = vmatpush1.bf16.msra.mxu0 %v4013
          %4031 = vmatprep.subr.bf16.mxu0 0
          %4032 = vmatpush1.bf16.msra.mxu0 %v4014
          %4033 = vmatprep.subr.bf16.mxu0 0
          %4034 = vmatpush1.bf16.msra.mxu0 %v4015
          %4035 = vmatprep.subr.bf16.mxu0 0
          %4036 = vmatpush1.bf16.msra.mxu0 %v4016
          %4037 = vmatprep.subr.bf16.mxu0 0
          %4038 = vmatpush1.bf16.msra.mxu0 %v4017
          %4039 = vmatprep.subr.bf16.mxu0 0
          %4040 = vmatpush1.bf16.msra.mxu0 %v4018
          %4041 = vmatprep.subr.bf16.mxu0 0
          %4042 = vmatpush1.bf16.msra.mxu0 %v4019
          %4043 = vmatprep.subr.bf16.mxu0 0
          %4044 = vmatpush1.bf16.msra.mxu0 %v4020
          %4045 = vmatprep.subr.bf16.mxu0 0
          %4046 = vmatpush1.bf16.msra.mxu0 0
          %4047 = vmatprep.subr.bf16.mxu0 0
          %4048 = vmatpush1.bf16.msra.mxu0 0
          %4049 = vmatprep.subr.bf16.mxu0 0
          %4050 = vmatpush1.bf16.msra.mxu0 0
          %4051 = vmatprep.subr.bf16.mxu0 0
          %4052 = vmatpush1.bf16.msra.mxu0 0
          %4053 = vmatprep.subr.bf16.mxu0 0
          %4054 = vmatpush1.bf16.msra.mxu0 0
          %4055 = vmatprep.subr.bf16.mxu0 0
          %4056 = vmatpush1.bf16.msra.mxu0 0
          %4057 = vmatprep.subr.bf16.mxu0 0
          %4058 = vmatpush1.bf16.msra.mxu0 0
          %4059 = vmatprep.subr.bf16.mxu0 0
          %4060 = vmatpush1.bf16.msra.mxu0 0
          %4061 = vmatprep.mubr.bf16.mxu0 0
          %4062 = vmatmul.mubr.bf16.gmra.mrb[0].mxu0 %v3960
          %v4063 = vpop.f32.mrb[0].mxu0
          %v4064 = vadd.f32 0.0, %v4063
          %v4065 = vpop.f32.mrb[0].mxu0
          %v4066 = vpop.f32.mrb[0].mxu0
          %v4067 = vpop.f32.mrb[0].mxu0
          %4068 = vdwg.mxu0
          %v4069 = vadd.f32 %v3958, %v4064
          %v4070 = vld [vmem:[%s3514 + $0x5] sm:$0x1]
          %v4071 = vpack.c.bf16 %v4070, %v4070
          %s4072 = sadd.s32 %s3517, 5
          %s4073 = smul.u32 %s4072, 16
          %s4074 = smul.addr %s4073, 4
          %s4075 = scalar_lea.vmem [#allocation13], %s4074
          %v4076 = vld [vmem:[%s4075] sm:$0xf]
          %v4077 = vld [vmem:[%s4075 + $0x4] sm:$0xf]
          %v4078 = vld [vmem:[%s4075 + $0x8] sm:$0xf]
          %v4079 = vld [vmem:[%s4075 + $0xc] sm:$0xf]
          %v4080 = vld [vmem:[%s4075 + $0x10] sm:$0xf]
          %v4081 = vld [vmem:[%s4075 + $0x14] sm:$0xf]
          %v4082 = vld [vmem:[%s4075 + $0x18] sm:$0xf]
          %v4083 = vld [vmem:[%s4075 + $0x1c] sm:$0xf]
          %v4084 = vld [vmem:[%s4075 + $0x20] sm:$0xf]
          %v4085 = vld [vmem:[%s4075 + $0x24] sm:$0xf]
          %v4086 = vld [vmem:[%s4075 + $0x28] sm:$0xf]
          %v4087 = vld [vmem:[%s4075 + $0x2c] sm:$0xf]
          %v4088 = vld [vmem:[%s4075 + $0x30] sm:$0xf]
          %v4089 = vld [vmem:[%s4075 + $0x34] sm:$0xf]
          %v4090 = vld [vmem:[%s4075 + $0x38] sm:$0xf]
          %v4091 = vld [vmem:[%s4075 + $0x3c] sm:$0xf]
          %v4108 = vunpack.c.l.b16 %v4076
          %v4109 = vunpack.c.l.b16 %v4077
          %v4110 = vunpack.c.l.b16 %v4078
          %v4111 = vunpack.c.l.b16 %v4079
          %v4112 = vunpack.c.l.b16 %v4080
          %v4113 = vunpack.c.l.b16 %v4081
          %v4114 = vunpack.c.l.b16 %v4082
          %v4115 = vunpack.c.l.b16 %v4083
          %v4116 = vunpack.c.l.b16 %v4084
          %v4117 = vunpack.c.l.b16 %v4085
          %v4118 = vunpack.c.l.b16 %v4086
          %v4119 = vunpack.c.l.b16 %v4087
          %v4120 = vunpack.c.l.b16 %v4088
          %v4121 = vunpack.c.l.b16 %v4089
          %v4122 = vunpack.c.l.b16 %v4090
          %v4123 = vunpack.c.l.b16 %v4091
          %v4124 = vpack.c.b16 %v4109, %v4108
          %v4125 = vpack.c.b16 %v4111, %v4110
          %v4126 = vpack.c.b16 %v4113, %v4112
          %v4127 = vpack.c.b16 %v4115, %v4114
          %v4128 = vpack.c.b16 %v4117, %v4116
          %v4129 = vpack.c.b16 %v4119, %v4118
          %v4130 = vpack.c.b16 %v4121, %v4120
          %v4131 = vpack.c.b16 %v4123, %v4122
          %4140 = vmatprep.subr.bf16.mxu0 0
          %4141 = vmatpush1.bf16.msra.mxu0 %v4124
          %4142 = vmatprep.subr.bf16.mxu0 0
          %4143 = vmatpush1.bf16.msra.mxu0 %v4125
          %4144 = vmatprep.subr.bf16.mxu0 0
          %4145 = vmatpush1.bf16.msra.mxu0 %v4126
          %4146 = vmatprep.subr.bf16.mxu0 0
          %4147 = vmatpush1.bf16.msra.mxu0 %v4127
          %4148 = vmatprep.subr.bf16.mxu0 0
          %4149 = vmatpush1.bf16.msra.mxu0 %v4128
          %4150 = vmatprep.subr.bf16.mxu0 0
          %4151 = vmatpush1.bf16.msra.mxu0 %v4129
          %4152 = vmatprep.subr.bf16.mxu0 0
          %4153 = vmatpush1.bf16.msra.mxu0 %v4130
          %4154 = vmatprep.subr.bf16.mxu0 0
          %4155 = vmatpush1.bf16.msra.mxu0 %v4131
          %4156 = vmatprep.subr.bf16.mxu0 0
          %4157 = vmatpush1.bf16.msra.mxu0 0
          %4158 = vmatprep.subr.bf16.mxu0 0
          %4159 = vmatpush1.bf16.msra.mxu0 0
          %4160 = vmatprep.subr.bf16.mxu0 0
          %4161 = vmatpush1.bf16.msra.mxu0 0
          %4162 = vmatprep.subr.bf16.mxu0 0
          %4163 = vmatpush1.bf16.msra.mxu0 0
          %4164 = vmatprep.subr.bf16.mxu0 0
          %4165 = vmatpush1.bf16.msra.mxu0 0
          %4166 = vmatprep.subr.bf16.mxu0 0
          %4167 = vmatpush1.bf16.msra.mxu0 0
          %4168 = vmatprep.subr.bf16.mxu0 0
          %4169 = vmatpush1.bf16.msra.mxu0 0
          %4170 = vmatprep.subr.bf16.mxu0 0
          %4171 = vmatpush1.bf16.msra.mxu0 0
          %4172 = vmatprep.mubr.bf16.mxu0 0
          %4173 = vmatmul.mubr.bf16.gmra.mrb[0].mxu0 %v4071
          %v4174 = vpop.f32.mrb[0].mxu0
          %v4175 = vadd.f32 0.0, %v4174
          %v4176 = vpop.f32.mrb[0].mxu0
          %v4177 = vpop.f32.mrb[0].mxu0
          %v4178 = vpop.f32.mrb[0].mxu0
          %4179 = vdwg.mxu0
          %v4180 = vadd.f32 %v4069, %v4175
          %v4181 = vld [vmem:[%s3514 + $0x6] sm:$0x1]
          %v4182 = vpack.c.bf16 %v4181, %v4181
          %s4183 = sadd.s32 %s3517, 6
          %s4184 = smul.u32 %s4183, 16
          %s4185 = smul.addr %s4184, 4
          %s4186 = scalar_lea.vmem [#allocation13], %s4185
          %v4187 = vld [vmem:[%s4186] sm:$0xf]
          %v4188 = vld [vmem:[%s4186 + $0x4] sm:$0xf]
          %v4189 = vld [vmem:[%s4186 + $0x8] sm:$0xf]
          %v4190 = vld [vmem:[%s4186 + $0xc] sm:$0xf]
          %v4191 = vld [vmem:[%s4186 + $0x10] sm:$0xf]
          %v4192 = vld [vmem:[%s4186 + $0x14] sm:$0xf]
          %v4193 = vld [vmem:[%s4186 + $0x18] sm:$0xf]
          %v4194 = vld [vmem:[%s4186 + $0x1c] sm:$0xf]
          %v4195 = vld [vmem:[%s4186 + $0x20] sm:$0xf]
          %v4196 = vld [vmem:[%s4186 + $0x24] sm:$0xf]
          %v4197 = vld [vmem:[%s4186 + $0x28] sm:$0xf]
          %v4198 = vld [vmem:[%s4186 + $0x2c] sm:$0xf]
          %v4199 = vld [vmem:[%s4186 + $0x30] sm:$0xf]
          %v4200 = vld [vmem:[%s4186 + $0x34] sm:$0xf]
          %v4201 = vld [vmem:[%s4186 + $0x38] sm:$0xf]
          %v4202 = vld [vmem:[%s4186 + $0x3c] sm:$0xf]
          %v4219 = vunpack.c.l.b16 %v4187
          %v4220 = vunpack.c.l.b16 %v4188
          %v4221 = vunpack.c.l.b16 %v4189
          %v4222 = vunpack.c.l.b16 %v4190
          %v4223 = vunpack.c.l.b16 %v4191
          %v4224 = vunpack.c.l.b16 %v4192
          %v4225 = vunpack.c.l.b16 %v4193
          %v4226 = vunpack.c.l.b16 %v4194
          %v4227 = vunpack.c.l.b16 %v4195
          %v4228 = vunpack.c.l.b16 %v4196
          %v4229 = vunpack.c.l.b16 %v4197
          %v4230 = vunpack.c.l.b16 %v4198
          %v4231 = vunpack.c.l.b16 %v4199
          %v4232 = vunpack.c.l.b16 %v4200
          %v4233 = vunpack.c.l.b16 %v4201
          %v4234 = vunpack.c.l.b16 %v4202
          %v4235 = vpack.c.b16 %v4220, %v4219
          %v4236 = vpack.c.b16 %v4222, %v4221
          %v4237 = vpack.c.b16 %v4224, %v4223
          %v4238 = vpack.c.b16 %v4226, %v4225
          %v4239 = vpack.c.b16 %v4228, %v4227
          %v4240 = vpack.c.b16 %v4230, %v4229
          %v4241 = vpack.c.b16 %v4232, %v4231
          %v4242 = vpack.c.b16 %v4234, %v4233
          %4251 = vmatprep.subr.bf16.mxu0 0
          %4252 = vmatpush1.bf16.msra.mxu0 %v4235
          %4253 = vmatprep.subr.bf16.mxu0 0
          %4254 = vmatpush1.bf16.msra.mxu0 %v4236
          %4255 = vmatprep.subr.bf16.mxu0 0
          %4256 = vmatpush1.bf16.msra.mxu0 %v4237
          %4257 = vmatprep.subr.bf16.mxu0 0
          %4258 = vmatpush1.bf16.msra.mxu0 %v4238
          %4259 = vmatprep.subr.bf16.mxu0 0
          %4260 = vmatpush1.bf16.msra.mxu0 %v4239
          %4261 = vmatprep.subr.bf16.mxu0 0
          %4262 = vmatpush1.bf16.msra.mxu0 %v4240
          %4263 = vmatprep.subr.bf16.mxu0 0
          %4264 = vmatpush1.bf16.msra.mxu0 %v4241
          %4265 = vmatprep.subr.bf16.mxu0 0
          %4266 = vmatpush1.bf16.msra.mxu0 %v4242
          %4267 = vmatprep.subr.bf16.mxu0 0
          %4268 = vmatpush1.bf16.msra.mxu0 0
          %4269 = vmatprep.subr.bf16.mxu0 0
          %4270 = vmatpush1.bf16.msra.mxu0 0
          %4271 = vmatprep.subr.bf16.mxu0 0
          %4272 = vmatpush1.bf16.msra.mxu0 0
          %4273 = vmatprep.subr.bf16.mxu0 0
          %4274 = vmatpush1.bf16.msra.mxu0 0
          %4275 = vmatprep.subr.bf16.mxu0 0
          %4276 = vmatpush1.bf16.msra.mxu0 0
          %4277 = vmatprep.subr.bf16.mxu0 0
          %4278 = vmatpush1.bf16.msra.mxu0 0
          %4279 = vmatprep.subr.bf16.mxu0 0
          %4280 = vmatpush1.bf16.msra.mxu0 0
          %4281 = vmatprep.subr.bf16.mxu0 0
          %4282 = vmatpush1.bf16.msra.mxu0 0
          %4283 = vmatprep.mubr.bf16.mxu0 0
          %4284 = vmatmul.mubr.bf16.gmra.mrb[0].mxu0 %v4182
          %v4285 = vpop.f32.mrb[0].mxu0
          %v4286 = vadd.f32 0.0, %v4285
          %v4287 = vpop.f32.mrb[0].mxu0
          %v4288 = vpop.f32.mrb[0].mxu0
          %v4289 = vpop.f32.mrb[0].mxu0
          %4290 = vdwg.mxu0
          %v4291 = vadd.f32 %v4180, %v4286
          %v4292 = vld [vmem:[%s3514 + $0x7] sm:$0x1]
          %v4293 = vpack.c.bf16 %v4292, %v4292
          %s4294 = sadd.s32 %s3517, 7
          %s4295 = smul.u32 %s4294, 16
          %s4296 = smul.addr %s4295, 4
          %s4297 = scalar_lea.vmem [#allocation13], %s4296
          %v4298 = vld [vmem:[%s4297] sm:$0xf]
          %v4299 = vld [vmem:[%s4297 + $0x4] sm:$0xf]
          %v4300 = vld [vmem:[%s4297 + $0x8] sm:$0xf]
          %v4301 = vld [vmem:[%s4297 + $0xc] sm:$0xf]
          %v4302 = vld [vmem:[%s4297 + $0x10] sm:$0xf]
          %v4303 = vld [vmem:[%s4297 + $0x14] sm:$0xf]
          %v4304 = vld [vmem:[%s4297 + $0x18] sm:$0xf]
          %v4305 = vld [vmem:[%s4297 + $0x1c] sm:$0xf]
          %v4306 = vld [vmem:[%s4297 + $0x20] sm:$0xf]
          %v4307 = vld [vmem:[%s4297 + $0x24] sm:$0xf]
          %v4308 = vld [vmem:[%s4297 + $0x28] sm:$0xf]
          %v4309 = vld [vmem:[%s4297 + $0x2c] sm:$0xf]
          %v4310 = vld [vmem:[%s4297 + $0x30] sm:$0xf]
          %v4311 = vld [vmem:[%s4297 + $0x34] sm:$0xf]
          %v4312 = vld [vmem:[%s4297 + $0x38] sm:$0xf]
          %v4313 = vld [vmem:[%s4297 + $0x3c] sm:$0xf]
          %v4330 = vunpack.c.l.b16 %v4298
          %v4331 = vunpack.c.l.b16 %v4299
          %v4332 = vunpack.c.l.b16 %v4300
          %v4333 = vunpack.c.l.b16 %v4301
          %v4334 = vunpack.c.l.b16 %v4302
          %v4335 = vunpack.c.l.b16 %v4303
          %v4336 = vunpack.c.l.b16 %v4304
          %v4337 = vunpack.c.l.b16 %v4305
          %v4338 = vunpack.c.l.b16 %v4306
          %v4339 = vunpack.c.l.b16 %v4307
          %v4340 = vunpack.c.l.b16 %v4308
          %v4341 = vunpack.c.l.b16 %v4309
          %v4342 = vunpack.c.l.b16 %v4310
          %v4343 = vunpack.c.l.b16 %v4311
          %v4344 = vunpack.c.l.b16 %v4312
          %v4345 = vunpack.c.l.b16 %v4313
          %v4346 = vpack.c.b16 %v4331, %v4330
          %v4347 = vpack.c.b16 %v4333, %v4332
          %v4348 = vpack.c.b16 %v4335, %v4334
          %v4349 = vpack.c.b16 %v4337, %v4336
          %v4350 = vpack.c.b16 %v4339, %v4338
          %v4351 = vpack.c.b16 %v4341, %v4340
          %v4352 = vpack.c.b16 %v4343, %v4342
          %v4353 = vpack.c.b16 %v4345, %v4344
          %4362 = vmatprep.subr.bf16.mxu0 0
          %4363 = vmatpush1.bf16.msra.mxu0 %v4346
          %4364 = vmatprep.subr.bf16.mxu0 0
          %4365 = vmatpush1.bf16.msra.mxu0 %v4347
          %4366 = vmatprep.subr.bf16.mxu0 0
          %4367 = vmatpush1.bf16.msra.mxu0 %v4348
          %4368 = vmatprep.subr.bf16.mxu0 0
          %4369 = vmatpush1.bf16.msra.mxu0 %v4349
          %4370 = vmatprep.subr.bf16.mxu0 0
          %4371 = vmatpush1.bf16.msra.mxu0 %v4350
          %4372 = vmatprep.subr.bf16.mxu0 0
          %4373 = vmatpush1.bf16.msra.mxu0 %v4351
          %4374 = vmatprep.subr.bf16.mxu0 0
          %4375 = vmatpush1.bf16.msra.mxu0 %v4352
          %4376 = vmatprep.subr.bf16.mxu0 0
          %4377 = vmatpush1.bf16.msra.mxu0 %v4353
          %4378 = vmatprep.subr.bf16.mxu0 0
          %4379 = vmatpush1.bf16.msra.mxu0 0
          %4380 = vmatprep.subr.bf16.mxu0 0
          %4381 = vmatpush1.bf16.msra.mxu0 0
          %4382 = vmatprep.subr.bf16.mxu0 0
          %4383 = vmatpush1.bf16.msra.mxu0 0
          %4384 = vmatprep.subr.bf16.mxu0 0
          %4385 = vmatpush1.bf16.msra.mxu0 0
          %4386 = vmatprep.subr.bf16.mxu0 0
          %4387 = vmatpush1.bf16.msra.mxu0 0
          %4388 = vmatprep.subr.bf16.mxu0 0
          %4389 = vmatpush1.bf16.msra.mxu0 0
          %4390 = vmatprep.subr.bf16.mxu0 0
          %4391 = vmatpush1.bf16.msra.mxu0 0
          %4392 = vmatprep.subr.bf16.mxu0 0
          %4393 = vmatpush1.bf16.msra.mxu0 0
          %4394 = vmatprep.mubr.bf16.mxu0 0
          %4395 = vmatmul.mubr.bf16.gmra.mrb[0].mxu0 %v4293
          %v4396 = vpop.f32.mrb[0].mxu0
          %v4397 = vadd.f32 0.0, %v4396
          %v4398 = vpop.f32.mrb[0].mxu0
          %v4399 = vpop.f32.mrb[0].mxu0
          %v4400 = vpop.f32.mrb[0].mxu0
          %4401 = vdwg.mxu0
          %v4402 = vadd.f32 %v4291, %v4397
          %v4403 = vld [vmem:[%s3514 + $0x8] sm:$0x1]
          %v4404 = vpack.c.bf16 %v4403, %v4403
          %s4405 = sadd.s32 %s3517, 8
          %s4406 = smul.u32 %s4405, 16
          %s4407 = smul.addr %s4406, 4
          %s4408 = scalar_lea.vmem [#allocation13], %s4407
          %v4409 = vld [vmem:[%s4408] sm:$0xf]
          %v4410 = vld [vmem:[%s4408 + $0x4] sm:$0xf]
          %v4411 = vld [vmem:[%s4408 + $0x8] sm:$0xf]
          %v4412 = vld [vmem:[%s4408 + $0xc] sm:$0xf]
          %v4413 = vld [vmem:[%s4408 + $0x10] sm:$0xf]
          %v4414 = vld [vmem:[%s4408 + $0x14] sm:$0xf]
          %v4415 = vld [vmem:[%s4408 + $0x18] sm:$0xf]
          %v4416 = vld [vmem:[%s4408 + $0x1c] sm:$0xf]
          %v4417 = vld [vmem:[%s4408 + $0x20] sm:$0xf]
          %v4418 = vld [vmem:[%s4408 + $0x24] sm:$0xf]
          %v4419 = vld [vmem:[%s4408 + $0x28] sm:$0xf]
          %v4420 = vld [vmem:[%s4408 + $0x2c] sm:$0xf]
          %v4421 = vld [vmem:[%s4408 + $0x30] sm:$0xf]
          %v4422 = vld [vmem:[%s4408 + $0x34] sm:$0xf]
          %v4423 = vld [vmem:[%s4408 + $0x38] sm:$0xf]
          %v4424 = vld [vmem:[%s4408 + $0x3c] sm:$0xf]
          %v4441 = vunpack.c.l.b16 %v4409
          %v4442 = vunpack.c.l.b16 %v4410
          %v4443 = vunpack.c.l.b16 %v4411
          %v4444 = vunpack.c.l.b16 %v4412
          %v4445 = vunpack.c.l.b16 %v4413
          %v4446 = vunpack.c.l.b16 %v4414
          %v4447 = vunpack.c.l.b16 %v4415
          %v4448 = vunpack.c.l.b16 %v4416
          %v4449 = vunpack.c.l.b16 %v4417
          %v4450 = vunpack.c.l.b16 %v4418
          %v4451 = vunpack.c.l.b16 %v4419
          %v4452 = vunpack.c.l.b16 %v4420
          %v4453 = vunpack.c.l.b16 %v4421
          %v4454 = vunpack.c.l.b16 %v4422
          %v4455 = vunpack.c.l.b16 %v4423
          %v4456 = vunpack.c.l.b16 %v4424
          %v4457 = vpack.c.b16 %v4442, %v4441
          %v4458 = vpack.c.b16 %v4444, %v4443
          %v4459 = vpack.c.b16 %v4446, %v4445
          %v4460 = vpack.c.b16 %v4448, %v4447
          %v4461 = vpack.c.b16 %v4450, %v4449
          %v4462 = vpack.c.b16 %v4452, %v4451
          %v4463 = vpack.c.b16 %v4454, %v4453
          %v4464 = vpack.c.b16 %v4456, %v4455
          %4473 = vmatprep.subr.bf16.mxu0 0
          %4474 = vmatpush1.bf16.msra.mxu0 %v4457
          %4475 = vmatprep.subr.bf16.mxu0 0
          %4476 = vmatpush1.bf16.msra.mxu0 %v4458
          %4477 = vmatprep.subr.bf16.mxu0 0
          %4478 = vmatpush1.bf16.msra.mxu0 %v4459
          %4479 = vmatprep.subr.bf16.mxu0 0
          %4480 = vmatpush1.bf16.msra.mxu0 %v4460
          %4481 = vmatprep.subr.bf16.mxu0 0
          %4482 = vmatpush1.bf16.msra.mxu0 %v4461
          %4483 = vmatprep.subr.bf16.mxu0 0
          %4484 = vmatpush1.bf16.msra.mxu0 %v4462
          %4485 = vmatprep.subr.bf16.mxu0 0
          %4486 = vmatpush1.bf16.msra.mxu0 %v4463
          %4487 = vmatprep.subr.bf16.mxu0 0
          %4488 = vmatpush1.bf16.msra.mxu0 %v4464
          %4489 = vmatprep.subr.bf16.mxu0 0
          %4490 = vmatpush1.bf16.msra.mxu0 0
          %4491 = vmatprep.subr.bf16.mxu0 0
          %4492 = vmatpush1.bf16.msra.mxu0 0
          %4493 = vmatprep.subr.bf16.mxu0 0
          %4494 = vmatpush1.bf16.msra.mxu0 0
          %4495 = vmatprep.subr.bf16.mxu0 0
          %4496 = vmatpush1.bf16.msra.mxu0 0
          %4497 = vmatprep.subr.bf16.mxu0 0
          %4498 = vmatpush1.bf16.msra.mxu0 0
          %4499 = vmatprep.subr.bf16.mxu0 0
          %4500 = vmatpush1.bf16.msra.mxu0 0
          %4501 = vmatprep.subr.bf16.mxu0 0
          %4502 = vmatpush1.bf16.msra.mxu0 0
          %4503 = vmatprep.subr.bf16.mxu0 0
          %4504 = vmatpush1.bf16.msra.mxu0 0
          %4505 = vmatprep.mubr.bf16.mxu0 0
          %4506 = vmatmul.mubr.bf16.gmra.mrb[0].mxu0 %v4404
          %v4507 = vpop.f32.mrb[0].mxu0
          %v4508 = vadd.f32 0.0, %v4507
          %v4509 = vpop.f32.mrb[0].mxu0
          %v4510 = vpop.f32.mrb[0].mxu0
          %v4511 = vpop.f32.mrb[0].mxu0
          %4512 = vdwg.mxu0
          %v4513 = vadd.f32 %v4402, %v4508
          %v4514 = vld [vmem:[%s3514 + $0x9] sm:$0x1]
          %v4515 = vpack.c.bf16 %v4514, %v4514
          %s4516 = sadd.s32 %s3517, 9
          %s4517 = smul.u32 %s4516, 16
          %s4518 = smul.addr %s4517, 4
          %s4519 = scalar_lea.vmem [#allocation13], %s4518
          %v4520 = vld [vmem:[%s4519] sm:$0xf]
          %v4521 = vld [vmem:[%s4519 + $0x4] sm:$0xf]
          %v4522 = vld [vmem:[%s4519 + $0x8] sm:$0xf]
          %v4523 = vld [vmem:[%s4519 + $0xc] sm:$0xf]
          %v4524 = vld [vmem:[%s4519 + $0x10] sm:$0xf]
          %v4525 = vld [vmem:[%s4519 + $0x14] sm:$0xf]
          %v4526 = vld [vmem:[%s4519 + $0x18] sm:$0xf]
          %v4527 = vld [vmem:[%s4519 + $0x1c] sm:$0xf]
          %v4528 = vld [vmem:[%s4519 + $0x20] sm:$0xf]
          %v4529 = vld [vmem:[%s4519 + $0x24] sm:$0xf]
          %v4530 = vld [vmem:[%s4519 + $0x28] sm:$0xf]
          %v4531 = vld [vmem:[%s4519 + $0x2c] sm:$0xf]
          %v4532 = vld [vmem:[%s4519 + $0x30] sm:$0xf]
          %v4533 = vld [vmem:[%s4519 + $0x34] sm:$0xf]
          %v4534 = vld [vmem:[%s4519 + $0x38] sm:$0xf]
          %v4535 = vld [vmem:[%s4519 + $0x3c] sm:$0xf]
          %v4552 = vunpack.c.l.b16 %v4520
          %v4553 = vunpack.c.l.b16 %v4521
          %v4554 = vunpack.c.l.b16 %v4522
          %v4555 = vunpack.c.l.b16 %v4523
          %v4556 = vunpack.c.l.b16 %v4524
          %v4557 = vunpack.c.l.b16 %v4525
          %v4558 = vunpack.c.l.b16 %v4526
          %v4559 = vunpack.c.l.b16 %v4527
          %v4560 = vunpack.c.l.b16 %v4528
          %v4561 = vunpack.c.l.b16 %v4529
          %v4562 = vunpack.c.l.b16 %v4530
          %v4563 = vunpack.c.l.b16 %v4531
          %v4564 = vunpack.c.l.b16 %v4532
          %v4565 = vunpack.c.l.b16 %v4533
          %v4566 = vunpack.c.l.b16 %v4534
          %v4567 = vunpack.c.l.b16 %v4535
          %v4568 = vpack.c.b16 %v4553, %v4552
          %v4569 = vpack.c.b16 %v4555, %v4554
          %v4570 = vpack.c.b16 %v4557, %v4556
          %v4571 = vpack.c.b16 %v4559, %v4558
          %v4572 = vpack.c.b16 %v4561, %v4560
          %v4573 = vpack.c.b16 %v4563, %v4562
          %v4574 = vpack.c.b16 %v4565, %v4564
          %v4575 = vpack.c.b16 %v4567, %v4566
          %4584 = vmatprep.subr.bf16.mxu0 0
          %4585 = vmatpush1.bf16.msra.mxu0 %v4568
          %4586 = vmatprep.subr.bf16.mxu0 0
          %4587 = vmatpush1.bf16.msra.mxu0 %v4569
          %4588 = vmatprep.subr.bf16.mxu0 0
          %4589 = vmatpush1.bf16.msra.mxu0 %v4570
          %4590 = vmatprep.subr.bf16.mxu0 0
          %4591 = vmatpush1.bf16.msra.mxu0 %v4571
          %4592 = vmatprep.subr.bf16.mxu0 0
          %4593 = vmatpush1.bf16.msra.mxu0 %v4572
          %4594 = vmatprep.subr.bf16.mxu0 0
          %4595 = vmatpush1.bf16.msra.mxu0 %v4573
          %4596 = vmatprep.subr.bf16.mxu0 0
          %4597 = vmatpush1.bf16.msra.mxu0 %v4574
          %4598 = vmatprep.subr.bf16.mxu0 0
          %4599 = vmatpush1.bf16.msra.mxu0 %v4575
          %4600 = vmatprep.subr.bf16.mxu0 0
          %4601 = vmatpush1.bf16.msra.mxu0 0
          %4602 = vmatprep.subr.bf16.mxu0 0
          %4603 = vmatpush1.bf16.msra.mxu0 0
          %4604 = vmatprep.subr.bf16.mxu0 0
          %4605 = vmatpush1.bf16.msra.mxu0 0
          %4606 = vmatprep.subr.bf16.mxu0 0
          %4607 = vmatpush1.bf16.msra.mxu0 0
          %4608 = vmatprep.subr.bf16.mxu0 0
          %4609 = vmatpush1.bf16.msra.mxu0 0
          %4610 = vmatprep.subr.bf16.mxu0 0
          %4611 = vmatpush1.bf16.msra.mxu0 0
          %4612 = vmatprep.subr.bf16.mxu0 0
          %4613 = vmatpush1.bf16.msra.mxu0 0
          %4614 = vmatprep.subr.bf16.mxu0 0
          %4615 = vmatpush1.bf16.msra.mxu0 0
          %4616 = vmatprep.mubr.bf16.mxu0 0
          %4617 = vmatmul.mubr.bf16.gmra.mrb[0].mxu0 %v4515
          %v4618 = vpop.f32.mrb[0].mxu0
          %v4619 = vadd.f32 0.0, %v4618
          %v4620 = vpop.f32.mrb[0].mxu0
          %v4621 = vpop.f32.mrb[0].mxu0
          %v4622 = vpop.f32.mrb[0].mxu0
          %4623 = vdwg.mxu0
          %v4624 = vadd.f32 %v4513, %v4619
        $region114: #{forward.1} parent=55 // loop_footer
          %s3511 = sadd.s32 1, %s3507
        $region115: #{forward.1} parent=55 // loop_footer_branch
          %3506 = sbr.rel target = $region111
        $region116: #{forward.1} parent=55 // loop_exit
          _
        %v4625 = vld [vmem:[#allocation14] sm:$0x1]
        %v4626 = vadd.f32 %v3512, %v4625
        %v4627 = vmax.f32 %v4626, 0.0
        %v4628 = vpack.c.bf16 %v4627, %v4627
        %v4629 = vld [vmem:[#allocation16] sm:$0xf]
        %v4630 = vld [vmem:[#allocation16 + $0x4] sm:$0xf]
        %v4631 = vld [vmem:[#allocation16 + $0x8] sm:$0xf]
        %v4632 = vld [vmem:[#allocation16 + $0xc] sm:$0xf]
        %v4633 = vld [vmem:[#allocation16 + $0x10] sm:$0xf]
        %v4634 = vld [vmem:[#allocation16 + $0x14] sm:$0xf]
        %v4635 = vld [vmem:[#allocation16 + $0x18] sm:$0xf]
        %v4636 = vld [vmem:[#allocation16 + $0x1c] sm:$0xf]
        %v4637 = vld [vmem:[#allocation16 + $0x20] sm:$0xf]
        %v4638 = vld [vmem:[#allocation16 + $0x24] sm:$0xf]
        %v4639 = vld [vmem:[#allocation16 + $0x28] sm:$0xf]
        %v4640 = vld [vmem:[#allocation16 + $0x2c] sm:$0xf]
        %v4641 = vld [vmem:[#allocation16 + $0x30] sm:$0xf]
        %v4642 = vld [vmem:[#allocation16 + $0x34] sm:$0xf]
        %v4643 = vld [vmem:[#allocation16 + $0x38] sm:$0xf]
        %v4644 = vld [vmem:[#allocation16 + $0x3c] sm:$0xf]
        %v4645 = vld [vmem:[#allocation17] sm:$0x1]
        %v4662 = vunpack.c.l.b16 %v4629
        %v4663 = vunpack.c.l.b16 %v4630
        %v4664 = vunpack.c.l.b16 %v4631
        %v4665 = vunpack.c.l.b16 %v4632
        %v4666 = vunpack.c.l.b16 %v4633
        %v4667 = vunpack.c.l.b16 %v4634
        %v4668 = vunpack.c.l.b16 %v4635
        %v4669 = vunpack.c.l.b16 %v4636
        %v4670 = vunpack.c.l.b16 %v4637
        %v4671 = vunpack.c.l.b16 %v4638
        %v4672 = vunpack.c.l.b16 %v4639
        %v4673 = vunpack.c.l.b16 %v4640
        %v4674 = vunpack.c.l.b16 %v4641
        %v4675 = vunpack.c.l.b16 %v4642
        %v4676 = vunpack.c.l.b16 %v4643
        %v4677 = vunpack.c.l.b16 %v4644
        %v4678 = vpack.c.b16 %v4663, %v4662
        %v4679 = vpack.c.b16 %v4665, %v4664
        %v4680 = vpack.c.b16 %v4667, %v4666
        %v4681 = vpack.c.b16 %v4669, %v4668
        %v4682 = vpack.c.b16 %v4671, %v4670
        %v4683 = vpack.c.b16 %v4673, %v4672
        %v4684 = vpack.c.b16 %v4675, %v4674
        %v4685 = vpack.c.b16 %v4677, %v4676
        %4694 = vmatprep.subr.bf16.mxu0 0
        %4695 = vmatpush1.bf16.msra.mxu0 %v4678
        %4696 = vmatprep.subr.bf16.mxu0 0
        %4697 = vmatpush1.bf16.msra.mxu0 %v4679
        %4698 = vmatprep.subr.bf16.mxu0 0
        %4699 = vmatpush1.bf16.msra.mxu0 %v4680
        %4700 = vmatprep.subr.bf16.mxu0 0
        %4701 = vmatpush1.bf16.msra.mxu0 %v4681
        %4702 = vmatprep.subr.bf16.mxu0 0
        %4703 = vmatpush1.bf16.msra.mxu0 %v4682
        %4704 = vmatprep.subr.bf16.mxu0 0
        %4705 = vmatpush1.bf16.msra.mxu0 %v4683
        %4706 = vmatprep.subr.bf16.mxu0 0
        %4707 = vmatpush1.bf16.msra.mxu0 %v4684
        %4708 = vmatprep.subr.bf16.mxu0 0
        %4709 = vmatpush1.bf16.msra.mxu0 %v4685
        %4710 = vmatprep.subr.bf16.mxu0 0
        %4711 = vmatpush1.bf16.msra.mxu0 0
        %4712 = vmatprep.subr.bf16.mxu0 0
        %4713 = vmatpush1.bf16.msra.mxu0 0
        %4714 = vmatprep.subr.bf16.mxu0 0
        %4715 = vmatpush1.bf16.msra.mxu0 0
        %4716 = vmatprep.subr.bf16.mxu0 0
        %4717 = vmatpush1.bf16.msra.mxu0 0
        %4718 = vmatprep.subr.bf16.mxu0 0
        %4719 = vmatpush1.bf16.msra.mxu0 0
        %4720 = vmatprep.subr.bf16.mxu0 0
        %4721 = vmatpush1.bf16.msra.mxu0 0
        %4722 = vmatprep.subr.bf16.mxu0 0
        %4723 = vmatpush1.bf16.msra.mxu0 0
        %4724 = vmatprep.subr.bf16.mxu0 0
        %4725 = vmatpush1.bf16.msra.mxu0 0
        %4726 = vmatprep.mubr.bf16.mxu0 0
        %4727 = vmatmul.mubr.bf16.gmra.mrb[0].mxu0 %v4628
        %v4728 = vpop.f32.mrb[0].mxu0
        %v4729 = vadd.f32 %v4645, %v4728
        %v4730 = vpop.f32.mrb[0].mxu0
        %v4731 = vpop.f32.mrb[0].mxu0
        %v4732 = vpop.f32.mrb[0].mxu0
        %4733 = vdwg.mxu0
        %4734 = vst [vmem:[%s433] sm:$0x1] %v4729
        %s4735 = sand.u32 %s230, 1
        %s4736 = scalar_lea.sflag [#allocation7], %s4735
        %s4737 = sand.u32 %s230, 1
        %s4738 = scalar_lea.vmem [#allocation19], %s4737
        // Predicated region
        $region117: #{forward.1} parent=55 // pred_check
          %p4739 = pneg %p240
        $region118: #{forward.1} parent=55 // pred_check_branch
          %4741 = sbr.rel (%p4739) target = $region120
        $region119: #{forward.1} parent=55 // pred_region
          %s4743 = ssub.s32 16, 16
          %4744 = vsyncadd %s4736, %s4743
          %s4745 = smul.addr %s28, 16
          %s4746 = scalar_lea.hbm %s9, %s4745
          %s4748 = sshll.u32 %s4738, 4
          %s4749 = int_to_ptr.vmem [resolvable:$true] %s4748
          %4751 = dma.vmem_to_hbm [thread:$0]  %s4749, 16, %s4746, %s4736
        $region120: #{forward.1} parent=55 // pred_fallthru
          _
      $region56: #{forward.1} parent=5 // pred_fallthru
        _
      %p4752 = scmp.le.s32.totalorder 2, %s23
      // Predicated region
      $region121: #{forward.1} parent=5 // pred_check
        %p4753 = pneg %p4752
      $region122: #{forward.1} parent=5 // pred_check_branch
        %4755 = sbr.rel (%p4753) target = $region124
      $region123: #{forward.1} parent=5 // pred_region
        %s4756 = ssub.s32 %s23, 2
        // Predicated region
        $region125: #{forward.1} parent=123 // pred_check
          %p4757 = pneg %p246
        $region126: #{forward.1} parent=123 // pred_check_branch
          %4759 = sbr.rel (%p4757) target = $region128
        $region127: #{forward.1} parent=123 // pred_region
          %s4760 = sand.u32 %s231, 1
          %s4761 = scalar_lea.sflag [#allocation7], %s4760
          %s4762 = sand.u32 %s231, 1
          %s4763 = scalar_lea.vmem [#allocation19], %s4762
          %4764 = dma.done %s4761, 16
        $region128: #{forward.1} parent=123 // pred_fallthru
          _
      $region124: #{forward.1} parent=5 // pred_fallthru
        _
    $region6: #{forward.1} parent=1 // loop_footer
      %s27 = sadd.s32 1, %s23
    $region7: #{forward.1} parent=1 // loop_footer_branch
      %22 = sbr.rel target = $region3
    $region8: #{forward.1} parent=1 // loop_exit
      _
    %4765 = vsyncpa [#allocation6], 1
    %s4766 = scalar_lea.sflag [#allocation6], 1
    %4767 = vsyncpa %s4766, 1
    %4768 = vsyncpa [#allocation9], 1
    %4769 = vsyncpa [#allocation12], 1
    %4770 = vsyncpa [#allocation15], 1
    %4771 = vsyncpa [#allocation18], 1
    %4772 = vsyncpa [#allocation7], 1
    %s4773 = scalar_lea.sflag [#allocation7], 1
    %4774 = vsyncpa %s4773, 1

</llo_original>
